<compile_context>
chip_gen: v6e
topology: v6e:2x2x1
jax: 0.10.0
libtpu: 0.0.40
codegen_flags: <defaults>
</compile_context>

<pallas_src>
import jax
import jax.numpy as jnp
from jax.experimental import pallas as pl
from jax.experimental.pallas import tpu as pltpu

# ----------------------------- problem sizes -----------------------------
INPUT_DIM = 256          # per-sample feature dim (torch ctor arg `input_dim`)
SAMPLES = 8              # torch ctor arg `samples`
D_IN = INPUT_DIM * SAMPLES          # 2048  -> chunks_num = 4
OUTPUT_DIM = 512
BATCH = 8                # 8 rows fill the f32 sublane tile; extra rows are free


def _auto_adjust_chunks(d_in):
    if d_in >= 20480:
        return 40
    if d_in >= 16384:
        return 32
    elif d_in >= 8192:
        return 16
    elif d_in >= 4096:
        return 8
    elif d_in >= 2048:
        return 4
    elif d_in >= 1024:
        return 2
    else:
        return 1


CHUNKS = _auto_adjust_chunks(D_IN)          # 4
assert D_IN % CHUNKS == 0 and OUTPUT_DIM % CHUNKS == 0
CIN = D_IN // CHUNKS                        # 512
CSO = OUTPUT_DIM // CHUNKS                  # 128
HID = CSO * 4                               # 512
LN_EPS = 1e-5

# chunks processed per grid step: 2 -> grid=(2,), good for v7x megacore and
# only one extra ~0.35us step on single-TC v5e/v6e.
CPS = 2 if CHUNKS % 2 == 0 else 1
NSTEPS = CHUNKS // CPS


# ------------------------------ Pallas kernel ------------------------------
def _chunk_kernel(x_ref, w1_ref, w2_ref, b1_ref, g_ref, be_ref, b2_ref,
                  pr_ref, comp_ref, wgf_ref, gc_ref, out_ref):
    s = pl.program_id(0)
    wgf = wgf_ref[...]                                  # (1, CSO) f32

    for i in range(CPS):                                # static unroll
        # Linear 1 + ReLU (bf16 inputs, f32 accumulate on MXU)
        x = x_ref[:, i * CIN:(i + 1) * CIN]             # (B, CIN) bf16
        h = jnp.dot(x, w1_ref[i], preferred_element_type=jnp.float32)
        h = h + b1_ref[i:i + 1, :]                      # (B, HID)
        h = jnp.maximum(h, 0.0)

        # LayerNorm over HID (f32)
        mean = jnp.mean(h, axis=-1, keepdims=True)
        diff = h - mean
        var = jnp.mean(diff * diff, axis=-1, keepdims=True)
        h = diff * jax.lax.rsqrt(var + LN_EPS)
        h = h * g_ref[i:i + 1, :] + be_ref[i:i + 1, :]

        # Linear 2 (dropout = identity in eval mode)
        feat = jnp.dot(h.astype(jnp.bfloat16), w2_ref[i],
                       preferred_element_type=jnp.float32)
        feat = feat + b2_ref[i:i + 1, :]                # (B, CSO)

        # Prompt gate: sigmoid(W_f . feat + [W_p . prompt + b]), the bracketed
        # chunk-constant part arrives precomputed via SMEM.
        prompt = pr_ref[i:i + 1, :]                     # (1, CSO)
        logit = (jnp.sum(feat * wgf, axis=-1, keepdims=True)
                 + gc_ref[s * CPS + i])                 # (B, 1)
        gate = jax.nn.sigmoid(logit)
        feat = gate * feat + (1.0 - gate) * prompt

        out_ref[:, i * CSO:(i + 1) * CSO] = feat + comp_ref[i:i + 1, :]


def hybrid_chunk_projector(x, params):
    """x: (B, 1, D_IN) float32 -> (B, OUTPUT_DIM) float32."""
    x2d = x[:, 0, :].astype(jnp.bfloat16)               # squeeze(1), bf16 DMA
    b = x2d.shape[0]

    # bf16 weights (f32 accumulation in-kernel preserves accuracy)
    w1 = params["w1"].astype(jnp.bfloat16)              # (CHUNKS, CIN, HID)
    w2 = params["w2"].astype(jnp.bfloat16)              # (CHUNKS, HID, CSO)

    # reshape per-chunk tables so each grid step gets its own (CPS, .) slab
    b1 = params["b1"].reshape(NSTEPS, CPS, HID)
    gamma = params["gamma"].reshape(NSTEPS, CPS, HID)
    beta = params["beta"].reshape(NSTEPS, CPS, HID)
    b2 = params["b2"].reshape(NSTEPS, CPS, CSO)
    prompt = params["prompt"].reshape(NSTEPS, CPS, CSO)
    comp = params["comp"].reshape(NSTEPS, CPS, CSO)

    # chunk-constant part of the gate logit: W_p . prompt[c] + b_gate
    gconst = (jnp.sum(params["prompt"] * params["wgp"], axis=-1)
              + params["bg"][0, 0]).astype(jnp.float32)  # (CHUNKS,)

    per_step_hid = pl.BlockSpec((pl.Squeezed(), CPS, HID), lambda s: (s, 0, 0))
    per_step_cso = pl.BlockSpec((pl.Squeezed(), CPS, CSO), lambda s: (s, 0, 0))

    flops = 2 * b * CHUNKS * (CIN * HID + HID * CSO)
    bytes_accessed = int(
        w1.size * 2 + w2.size * 2 + x2d.size * 2 + b * OUTPUT_DIM * 4
        + (b1.size + gamma.size + beta.size + b2.size + prompt.size
           + comp.size + params["wgf"].size + gconst.size) * 4)

    out = pl.pallas_call(
        _chunk_kernel,
        out_shape=jax.ShapeDtypeStruct((b, OUTPUT_DIM), jnp.float32),
        grid=(NSTEPS,),
        in_specs=[
            pl.BlockSpec((b, CPS * CIN), lambda s: (0, s)),       # x (bf16)
            pl.BlockSpec((CPS, CIN, HID), lambda s: (s, 0, 0)),   # W1 (bf16)
            pl.BlockSpec((CPS, HID, CSO), lambda s: (s, 0, 0)),   # W2 (bf16)
            per_step_hid,                                         # b1
            per_step_hid,                                         # ln gamma
            per_step_hid,                                         # ln beta
            per_step_cso,                                         # b2
            per_step_cso,                                         # prompt tokens
            per_step_cso,                                         # global_compensate
            pl.BlockSpec((1, CSO), lambda s: (0, 0)),             # gate W (feat part)
            pl.BlockSpec(memory_space=pltpu.MemorySpace.SMEM),    # gate const (CHUNKS,)
        ],
        out_specs=pl.BlockSpec((b, CPS * CSO), lambda s: (0, s)),
        compiler_params=pltpu.CompilerParams(
            dimension_semantics=("parallel",)),
        cost_estimate=pl.CostEstimate(
            flops=flops,
            transcendentals=2 * b * CHUNKS,
            bytes_accessed=bytes_accessed),
    )(x2d, w1, w2, b1, gamma, beta, b2, prompt, comp,
      params["wgf"], gconst)
    return out


# --------------------------- reference (pure JAX) ---------------------------
# Mirrors the kernel's bf16-weight / f32-accumulate matmul math so the
# correctness check can use a tight tolerance.
def ref_forward(x, p):
    x2d = x[:, 0, :]
    chunks = jnp.split(x2d, CHUNKS, axis=1)
    outs = []
    for c in range(CHUNKS):
        xb = chunks[c].astype(jnp.bfloat16)
        h = jnp.dot(xb, p["w1"][c].astype(jnp.bfloat16),
                    preferred_element_type=jnp.float32) + p["b1"][c]
        h = jnp.maximum(h, 0.0)
        mean = h.mean(-1, keepdims=True)
        var = ((h - mean) ** 2).mean(-1, keepdims=True)
        h = (h - mean) / jnp.sqrt(var + LN_EPS) * p["gamma"][c] + p["beta"][c]
        feat = jnp.dot(h.astype(jnp.bfloat16), p["w2"][c].astype(jnp.bfloat16),
                       preferred_element_type=jnp.float32) + p["b2"][c]
        prompt = jnp.broadcast_to(p["prompt"][c][None, :], feat.shape)
        logit = ((feat * p["wgf"][0]).sum(-1, keepdims=True)
                 + (p["prompt"][c] * p["wgp"][0]).sum()
                 + p["bg"][0, 0])
        gate = jax.nn.sigmoid(logit)
        outs.append(gate * feat + (1.0 - gate) * prompt)
    return jnp.concatenate(outs, axis=1) + p["comp"].reshape(-1)


# --------------------------- deterministic params ---------------------------
def make_params(key):
    ks = jax.random.split(key, 8)
    p = {
        # kaiming-ish fan-in scaling for W1, xavier-ish for W2 (shapes matter,
        # exact init distribution does not — synthetic weights).
        "w1": jax.random.normal(ks[0], (CHUNKS, CIN, HID), jnp.float32)
              * (2.0 / CIN) ** 0.5,
        "b1": jnp.zeros((CHUNKS, HID), jnp.float32),
        "gamma": jnp.ones((CHUNKS, HID), jnp.float32),
        "beta": jnp.zeros((CHUNKS, HID), jnp.float32),
        "w2": jax.random.normal(ks[1], (CHUNKS, HID, CSO), jnp.float32)
              * 0.5 * (2.0 / (HID + CSO)) ** 0.5,
        "b2": jax.random.normal(ks[2], (CHUNKS, CSO), jnp.float32) * 0.01,
        "prompt": jax.random.normal(ks[3], (CHUNKS, CSO), jnp.float32) * 0.02,
        "wgf": jax.random.normal(ks[4], (1, CSO), jnp.float32)
               * (1.0 / (2 * CSO)) ** 0.5,
        "wgp": jax.random.normal(ks[5], (1, CSO), jnp.float32)
               * (1.0 / (2 * CSO)) ** 0.5,
        "bg": jnp.full((1, 1), 0.5, jnp.float32),
        "comp": jnp.full((CHUNKS, CSO), 0.1, jnp.float32),  # global_compensate
    }
    return p


if __name__ == "__main__":
    key = jax.random.PRNGKey(0)
    kx, kp = jax.random.split(key)
    x = jax.random.normal(kx, (BATCH, 1, D_IN), jnp.float32)
    params = make_params(kp)

    out = hybrid_chunk_projector(x, params)
    out = jax.block_until_ready(out)

    ref = ref_forward(x, params)
    assert out.shape == (BATCH, OUTPUT_DIM)
    assert jnp.allclose(out, ref, rtol=1e-2, atol=1e-2), (
        float(jnp.max(jnp.abs(out - ref))))

    print("KERNEL_OK")
</pallas_src>

<mosaic_0001>
module attributes {stable_mosaic.version = 11 : i64} {
  func.func @_chunk_kernel(%arg0: i32, %arg1: memref<8x1024xbf16, #tpu.memory_space<vmem>>, %arg2: memref<2x512x512xbf16, #tpu.memory_space<vmem>>, %arg3: memref<2x512x128xbf16, #tpu.memory_space<vmem>>, %arg4: memref<1x2x512xf32, #tpu.memory_space<vmem>>, %arg5: memref<1x2x512xf32, #tpu.memory_space<vmem>>, %arg6: memref<1x2x512xf32, #tpu.memory_space<vmem>>, %arg7: memref<1x2x128xf32, #tpu.memory_space<vmem>>, %arg8: memref<1x2x128xf32, #tpu.memory_space<vmem>>, %arg9: memref<1x2x128xf32, #tpu.memory_space<vmem>>, %arg10: memref<1x128xf32, #tpu.memory_space<vmem>>, %arg11: memref<4xf32, #tpu.memory_space<smem>>, %arg12: memref<8x256xf32, #tpu.memory_space<vmem>>) attributes {dimension_semantics = [#tpu.dimension_semantics<parallel>], iteration_bounds = array<i64: 2>, scalar_prefetch = 0 : i64, scratch_operands = 0 : i64, tpu.core_type = #tpu.core_type<tc>, window_params = [{transform_indices = @transform_0, window_bounds = array<i64: 8, 1024>}, {transform_indices = @transform_1, window_bounds = array<i64: 2, 512, 512>}, {transform_indices = @transform_2, window_bounds = array<i64: 2, 512, 128>}, {transform_indices = @transform_3, window_bounds = array<i64: 1, 2, 512>}, {transform_indices = @transform_4, window_bounds = array<i64: 1, 2, 512>}, {transform_indices = @transform_5, window_bounds = array<i64: 1, 2, 512>}, {transform_indices = @transform_6, window_bounds = array<i64: 1, 2, 128>}, {transform_indices = @transform_7, window_bounds = array<i64: 1, 2, 128>}, {transform_indices = @transform_8, window_bounds = array<i64: 1, 2, 128>}, {pipeline_mode = #tpu.pipeline_mode<synchronous>, transform_indices = @transform_9, window_bounds = array<i64: 1, 128>}, {transform_indices = @transform_10, window_bounds = array<i64: 4>}, {transform_indices = @transform_11, window_bounds = array<i64: 8, 256>}]} {
    %c0 = arith.constant 0 : index
    %c0_0 = arith.constant 0 : index
    %0 = vector.load %arg10[%c0, %c0_0] : memref<1x128xf32, #tpu.memory_space<vmem>>, vector<1x128xf32>
    %c0_1 = arith.constant 0 : index
    %c0_2 = arith.constant 0 : index
    %1 = vector.load %arg1[%c0_1, %c0_2] : memref<8x1024xbf16, #tpu.memory_space<vmem>>, vector<8x512xbf16>
    %c0_3 = arith.constant 0 : index
    %c0_4 = arith.constant 0 : index
    %c0_5 = arith.constant 0 : index
    %2 = vector.load %arg2[%c0_3, %c0_4, %c0_5] : memref<2x512x512xbf16, #tpu.memory_space<vmem>>, vector<1x512x512xbf16>
    %3 = vector.shape_cast %2 : vector<1x512x512xbf16> to vector<512x512xbf16>
    %cst = arith.constant dense<0.000000e+00> : vector<8x512xf32>
    %4 = tpu.matmul %1, %3, %cst {dimension_numbers = #tpu.dot_dimension_numbers<[1], [0], [0], [1], [0, 0, 1, 1], [], []>} : vector<8x512xbf16>, vector<512x512xbf16>, vector<8x512xf32> -> vector<8x512xf32>
    %c0_6 = arith.constant 0 : index
    %c0_7 = arith.constant 0 : index
    %c0_8 = arith.constant 0 : index
    %5 = vector.load %arg4[%c0_6, %c0_7, %c0_8] : memref<1x2x512xf32, #tpu.memory_space<vmem>>, vector<1x1x512xf32>
    %6 = vector.shape_cast %5 : vector<1x1x512xf32> to vector<1x512xf32>
    %7 = vector.broadcast %6 : vector<1x512xf32> to vector<8x512xf32>
    %8 = arith.addf %4, %7 : vector<8x512xf32>
    %cst_9 = arith.constant 0.000000e+00 : f32
    %9 = vector.broadcast %cst_9 : f32 to vector<8x512xf32>
    %10 = arith.maximumf %8, %9 : vector<8x512xf32>
    %cst_10 = arith.constant dense<0.000000e+00> : vector<8xf32>
    %11 = vector.multi_reduction <add>, %10, %cst_10 [1] : vector<8x512xf32> to vector<8xf32>
    %12 = vector.shape_cast %11 : vector<8xf32> to vector<8x1xf32>
    %cst_11 = arith.constant 5.120000e+02 : f32
    %13 = vector.broadcast %cst_11 : f32 to vector<8x1xf32>
    %14 = arith.divf %12, %13 : vector<8x1xf32>
    %15 = vector.broadcast %14 : vector<8x1xf32> to vector<8x512xf32>
    %16 = arith.subf %10, %15 : vector<8x512xf32>
    %17 = arith.mulf %16, %16 : vector<8x512xf32>
    %cst_12 = arith.constant dense<0.000000e+00> : vector<8xf32>
    %18 = vector.multi_reduction <add>, %17, %cst_12 [1] : vector<8x512xf32> to vector<8xf32>
    %19 = vector.shape_cast %18 : vector<8xf32> to vector<8x1xf32>
    %cst_13 = arith.constant 5.120000e+02 : f32
    %20 = vector.broadcast %cst_13 : f32 to vector<8x1xf32>
    %21 = arith.divf %19, %20 : vector<8x1xf32>
    %cst_14 = arith.constant 9.99999974E-6 : f32
    %22 = vector.broadcast %cst_14 : f32 to vector<8x1xf32>
    %23 = arith.addf %21, %22 : vector<8x1xf32>
    %24 = math.rsqrt %23 : vector<8x1xf32>
    %25 = vector.broadcast %24 : vector<8x1xf32> to vector<8x512xf32>
    %26 = arith.mulf %16, %25 : vector<8x512xf32>
    %c0_15 = arith.constant 0 : index
    %c0_16 = arith.constant 0 : index
    %c0_17 = arith.constant 0 : index
    %27 = vector.load %arg5[%c0_15, %c0_16, %c0_17] : memref<1x2x512xf32, #tpu.memory_space<vmem>>, vector<1x1x512xf32>
    %28 = vector.shape_cast %27 : vector<1x1x512xf32> to vector<1x512xf32>
    %29 = vector.broadcast %28 : vector<1x512xf32> to vector<8x512xf32>
    %30 = arith.mulf %26, %29 : vector<8x512xf32>
    %c0_18 = arith.constant 0 : index
    %c0_19 = arith.constant 0 : index
    %c0_20 = arith.constant 0 : index
    %31 = vector.load %arg6[%c0_18, %c0_19, %c0_20] : memref<1x2x512xf32, #tpu.memory_space<vmem>>, vector<1x1x512xf32>
    %32 = vector.shape_cast %31 : vector<1x1x512xf32> to vector<1x512xf32>
    %33 = vector.broadcast %32 : vector<1x512xf32> to vector<8x512xf32>
    %34 = arith.addf %30, %33 : vector<8x512xf32>
    %35 = arith.truncf %34 : vector<8x512xf32> to vector<8x512xbf16>
    %c0_21 = arith.constant 0 : index
    %c0_22 = arith.constant 0 : index
    %c0_23 = arith.constant 0 : index
    %36 = vector.load %arg3[%c0_21, %c0_22, %c0_23] : memref<2x512x128xbf16, #tpu.memory_space<vmem>>, vector<1x512x128xbf16>
    %37 = vector.shape_cast %36 : vector<1x512x128xbf16> to vector<512x128xbf16>
    %cst_24 = arith.constant dense<0.000000e+00> : vector<8x128xf32>
    %38 = tpu.matmul %35, %37, %cst_24 {dimension_numbers = #tpu.dot_dimension_numbers<[1], [0], [0], [1], [0, 0, 1, 1], [], []>} : vector<8x512xbf16>, vector<512x128xbf16>, vector<8x128xf32> -> vector<8x128xf32>
    %c0_25 = arith.constant 0 : index
    %c0_26 = arith.constant 0 : index
    %c0_27 = arith.constant 0 : index
    %39 = vector.load %arg7[%c0_25, %c0_26, %c0_27] : memref<1x2x128xf32, #tpu.memory_space<vmem>>, vector<1x1x128xf32>
    %40 = vector.shape_cast %39 : vector<1x1x128xf32> to vector<1x128xf32>
    %41 = vector.broadcast %40 : vector<1x128xf32> to vector<8x128xf32>
    %42 = arith.addf %38, %41 : vector<8x128xf32>
    %c0_28 = arith.constant 0 : index
    %c0_29 = arith.constant 0 : index
    %c0_30 = arith.constant 0 : index
    %43 = vector.load %arg8[%c0_28, %c0_29, %c0_30] : memref<1x2x128xf32, #tpu.memory_space<vmem>>, vector<1x1x128xf32>
    %44 = vector.shape_cast %43 : vector<1x1x128xf32> to vector<1x128xf32>
    %45 = vector.broadcast %0 : vector<1x128xf32> to vector<8x128xf32>
    %46 = arith.mulf %42, %45 : vector<8x128xf32>
    %cst_31 = arith.constant dense<0.000000e+00> : vector<8xf32>
    %47 = vector.multi_reduction <add>, %46, %cst_31 [1] : vector<8x128xf32> to vector<8xf32>
    %48 = vector.shape_cast %47 : vector<8xf32> to vector<8x1xf32>
    %c2_i32 = arith.constant 2 : i32
    %49 = arith.muli %arg0, %c2_i32 : i32
    %c0_i32 = arith.constant 0 : i32
    %50 = arith.addi %49, %c0_i32 : i32
    %51 = arith.index_cast %50 : i32 to index
    %52 = memref.load %arg11[%51] : memref<4xf32, #tpu.memory_space<smem>>
    %53 = vector.broadcast %52 : f32 to vector<8x1xf32>
    %54 = arith.addf %48, %53 : vector<8x1xf32>
    %55 = arith.negf %54 : vector<8x1xf32>
    %56 = math.exp %55 : vector<8x1xf32>
    %cst_32 = arith.constant 1.000000e+00 : f32
    %57 = vector.broadcast %cst_32 : f32 to vector<8x1xf32>
    %58 = arith.addf %57, %56 : vector<8x1xf32>
    %59 = arith.divf %57, %58 : vector<8x1xf32>
    %60 = vector.broadcast %59 : vector<8x1xf32> to vector<8x128xf32>
    %61 = arith.mulf %60, %42 : vector<8x128xf32>
    %cst_33 = arith.constant 1.000000e+00 : f32
    %62 = vector.broadcast %cst_33 : f32 to vector<8x1xf32>
    %63 = arith.subf %62, %59 : vector<8x1xf32>
    %64 = vector.broadcast %63 : vector<8x1xf32> to vector<8x128xf32>
    %65 = vector.broadcast %44 : vector<1x128xf32> to vector<8x128xf32>
    %66 = arith.mulf %64, %65 : vector<8x128xf32>
    %67 = arith.addf %61, %66 : vector<8x128xf32>
    %c0_34 = arith.constant 0 : index
    %c0_35 = arith.constant 0 : index
    %c0_36 = arith.constant 0 : index
    %68 = vector.load %arg9[%c0_34, %c0_35, %c0_36] : memref<1x2x128xf32, #tpu.memory_space<vmem>>, vector<1x1x128xf32>
    %69 = vector.shape_cast %68 : vector<1x1x128xf32> to vector<1x128xf32>
    %70 = vector.broadcast %69 : vector<1x128xf32> to vector<8x128xf32>
    %71 = arith.addf %67, %70 : vector<8x128xf32>
    %c0_37 = arith.constant 0 : index
    %c0_38 = arith.constant 0 : index
    %72 = vector.load %arg12[%c0_37, %c0_38] : memref<8x256xf32, #tpu.memory_space<vmem>>, vector<8x128xf32>
    tpu.vector_store %arg12[%c0_37, %c0_38], %71 {strides = array<i32>} : memref<8x256xf32, #tpu.memory_space<vmem>>, vector<8x128xf32>,
    %c0_39 = arith.constant 0 : index
    %c512 = arith.constant 512 : index
    %73 = vector.load %arg1[%c0_39, %c512] : memref<8x1024xbf16, #tpu.memory_space<vmem>>, vector<8x512xbf16>
    %c1 = arith.constant 1 : index
    %c0_40 = arith.constant 0 : index
    %c0_41 = arith.constant 0 : index
    %74 = vector.load %arg2[%c1, %c0_40, %c0_41] : memref<2x512x512xbf16, #tpu.memory_space<vmem>>, vector<1x512x512xbf16>
    %75 = vector.shape_cast %74 : vector<1x512x512xbf16> to vector<512x512xbf16>
    %cst_42 = arith.constant dense<0.000000e+00> : vector<8x512xf32>
    %76 = tpu.matmul %73, %75, %cst_42 {dimension_numbers = #tpu.dot_dimension_numbers<[1], [0], [0], [1], [0, 0, 1, 1], [], []>} : vector<8x512xbf16>, vector<512x512xbf16>, vector<8x512xf32> -> vector<8x512xf32>
    %c0_43 = arith.constant 0 : index
    %c1_44 = arith.constant 1 : index
    %c0_45 = arith.constant 0 : index
    %77 = vector.load %arg4[%c0_43, %c1_44, %c0_45] : memref<1x2x512xf32, #tpu.memory_space<vmem>>, vector<1x1x512xf32>
    %78 = vector.shape_cast %77 : vector<1x1x512xf32> to vector<1x512xf32>
    %79 = vector.broadcast %78 : vector<1x512xf32> to vector<8x512xf32>
    %80 = arith.addf %76, %79 : vector<8x512xf32>
    %cst_46 = arith.constant 0.000000e+00 : f32
    %81 = vector.broadcast %cst_46 : f32 to vector<8x512xf32>
    %82 = arith.maximumf %80, %81 : vector<8x512xf32>
    %cst_47 = arith.constant dense<0.000000e+00> : vector<8xf32>
    %83 = vector.multi_reduction <add>, %82, %cst_47 [1] : vector<8x512xf32> to vector<8xf32>
    %84 = vector.shape_cast %83 : vector<8xf32> to vector<8x1xf32>
    %cst_48 = arith.constant 5.120000e+02 : f32
    %85 = vector.broadcast %cst_48 : f32 to vector<8x1xf32>
    %86 = arith.divf %84, %85 : vector<8x1xf32>
    %87 = vector.broadcast %86 : vector<8x1xf32> to vector<8x512xf32>
    %88 = arith.subf %82, %87 : vector<8x512xf32>
    %89 = arith.mulf %88, %88 : vector<8x512xf32>
    %cst_49 = arith.constant dense<0.000000e+00> : vector<8xf32>
    %90 = vector.multi_reduction <add>, %89, %cst_49 [1] : vector<8x512xf32> to vector<8xf32>
    %91 = vector.shape_cast %90 : vector<8xf32> to vector<8x1xf32>
    %cst_50 = arith.constant 5.120000e+02 : f32
    %92 = vector.broadcast %cst_50 : f32 to vector<8x1xf32>
    %93 = arith.divf %91, %92 : vector<8x1xf32>
    %cst_51 = arith.constant 9.99999974E-6 : f32
    %94 = vector.broadcast %cst_51 : f32 to vector<8x1xf32>
    %95 = arith.addf %93, %94 : vector<8x1xf32>
    %96 = math.rsqrt %95 : vector<8x1xf32>
    %97 = vector.broadcast %96 : vector<8x1xf32> to vector<8x512xf32>
    %98 = arith.mulf %88, %97 : vector<8x512xf32>
    %c0_52 = arith.constant 0 : index
    %c1_53 = arith.constant 1 : index
    %c0_54 = arith.constant 0 : index
    %99 = vector.load %arg5[%c0_52, %c1_53, %c0_54] : memref<1x2x512xf32, #tpu.memory_space<vmem>>, vector<1x1x512xf32>
    %100 = vector.shape_cast %99 : vector<1x1x512xf32> to vector<1x512xf32>
    %101 = vector.broadcast %100 : vector<1x512xf32> to vector<8x512xf32>
    %102 = arith.mulf %98, %101 : vector<8x512xf32>
    %c0_55 = arith.constant 0 : index
    %c1_56 = arith.constant 1 : index
    %c0_57 = arith.constant 0 : index
    %103 = vector.load %arg6[%c0_55, %c1_56, %c0_57] : memref<1x2x512xf32, #tpu.memory_space<vmem>>, vector<1x1x512xf32>
    %104 = vector.shape_cast %103 : vector<1x1x512xf32> to vector<1x512xf32>
    %105 = vector.broadcast %104 : vector<1x512xf32> to vector<8x512xf32>
    %106 = arith.addf %102, %105 : vector<8x512xf32>
    %107 = arith.truncf %106 : vector<8x512xf32> to vector<8x512xbf16>
    %c1_58 = arith.constant 1 : index
    %c0_59 = arith.constant 0 : index
    %c0_60 = arith.constant 0 : index
    %108 = vector.load %arg3[%c1_58, %c0_59, %c0_60] : memref<2x512x128xbf16, #tpu.memory_space<vmem>>, vector<1x512x128xbf16>
    %109 = vector.shape_cast %108 : vector<1x512x128xbf16> to vector<512x128xbf16>
    %cst_61 = arith.constant dense<0.000000e+00> : vector<8x128xf32>
    %110 = tpu.matmul %107, %109, %cst_61 {dimension_numbers = #tpu.dot_dimension_numbers<[1], [0], [0], [1], [0, 0, 1, 1], [], []>} : vector<8x512xbf16>, vector<512x128xbf16>, vector<8x128xf32> -> vector<8x128xf32>
    %c0_62 = arith.constant 0 : index
    %c1_63 = arith.constant 1 : index
    %c0_64 = arith.constant 0 : index
    %111 = vector.load %arg7[%c0_62, %c1_63, %c0_64] : memref<1x2x128xf32, #tpu.memory_space<vmem>>, vector<1x1x128xf32>
    %112 = vector.shape_cast %111 : vector<1x1x128xf32> to vector<1x128xf32>
    %113 = vector.broadcast %112 : vector<1x128xf32> to vector<8x128xf32>
    %114 = arith.addf %110, %113 : vector<8x128xf32>
    %c0_65 = arith.constant 0 : index
    %c1_66 = arith.constant 1 : index
    %c0_67 = arith.constant 0 : index
    %115 = vector.load %arg8[%c0_65, %c1_66, %c0_67] : memref<1x2x128xf32, #tpu.memory_space<vmem>>, vector<1x1x128xf32>
    %116 = vector.shape_cast %115 : vector<1x1x128xf32> to vector<1x128xf32>
    %117 = vector.broadcast %0 : vector<1x128xf32> to vector<8x128xf32>
    %118 = arith.mulf %114, %117 : vector<8x128xf32>
    %cst_68 = arith.constant dense<0.000000e+00> : vector<8xf32>
    %119 = vector.multi_reduction <add>, %118, %cst_68 [1] : vector<8x128xf32> to vector<8xf32>
    %120 = vector.shape_cast %119 : vector<8xf32> to vector<8x1xf32>
    %c2_i32_69 = arith.constant 2 : i32
    %121 = arith.muli %arg0, %c2_i32_69 : i32
    %c1_i32 = arith.constant 1 : i32
    %122 = arith.addi %121, %c1_i32 : i32
    %123 = arith.index_cast %122 : i32 to index
    %124 = memref.load %arg11[%123] : memref<4xf32, #tpu.memory_space<smem>>
    %125 = vector.broadcast %124 : f32 to vector<8x1xf32>
    %126 = arith.addf %120, %125 : vector<8x1xf32>
    %127 = arith.negf %126 : vector<8x1xf32>
    %128 = math.exp %127 : vector<8x1xf32>
    %cst_70 = arith.constant 1.000000e+00 : f32
    %129 = vector.broadcast %cst_70 : f32 to vector<8x1xf32>
    %130 = arith.addf %129, %128 : vector<8x1xf32>
    %131 = arith.divf %129, %130 : vector<8x1xf32>
    %132 = vector.broadcast %131 : vector<8x1xf32> to vector<8x128xf32>
    %133 = arith.mulf %132, %114 : vector<8x128xf32>
    %cst_71 = arith.constant 1.000000e+00 : f32
    %134 = vector.broadcast %cst_71 : f32 to vector<8x1xf32>
    %135 = arith.subf %134, %131 : vector<8x1xf32>
    %136 = vector.broadcast %135 : vector<8x1xf32> to vector<8x128xf32>
    %137 = vector.broadcast %116 : vector<1x128xf32> to vector<8x128xf32>
    %138 = arith.mulf %136, %137 : vector<8x128xf32>
    %139 = arith.addf %133, %138 : vector<8x128xf32>
    %c0_72 = arith.constant 0 : index
    %c1_73 = arith.constant 1 : index
    %c0_74 = arith.constant 0 : index
    %140 = vector.load %arg9[%c0_72, %c1_73, %c0_74] : memref<1x2x128xf32, #tpu.memory_space<vmem>>, vector<1x1x128xf32>
    %141 = vector.shape_cast %140 : vector<1x1x128xf32> to vector<1x128xf32>
    %142 = vector.broadcast %141 : vector<1x128xf32> to vector<8x128xf32>
    %143 = arith.addf %139, %142 : vector<8x128xf32>
    %c0_75 = arith.constant 0 : index
    %c128 = arith.constant 128 : index
    %144 = vector.load %arg12[%c0_75, %c128] : memref<8x256xf32, #tpu.memory_space<vmem>>, vector<8x128xf32>
    tpu.vector_store %arg12[%c0_75, %c128], %143 {strides = array<i32>} : memref<8x256xf32, #tpu.memory_space<vmem>>, vector<8x128xf32>,
    return
  }
  func.func @transform_0(%arg0: i32) -> (i32, i32) {
    %c0_i32 = arith.constant 0 : i32
    %c0_i32_0 = arith.constant 0 : i32
    return %c0_i32, %arg0 : i32, i32
  }
  func.func @transform_1(%arg0: i32) -> (i32, i32, i32) {
    %c0_i32 = arith.constant 0 : i32
    %c0_i32_0 = arith.constant 0 : i32
    %c0_i32_1 = arith.constant 0 : i32
    return %arg0, %c0_i32, %c0_i32_0 : i32, i32, i32
  }
  func.func @transform_2(%arg0: i32) -> (i32, i32, i32) {
    %c0_i32 = arith.constant 0 : i32
    %c0_i32_0 = arith.constant 0 : i32
    %c0_i32_1 = arith.constant 0 : i32
    return %arg0, %c0_i32, %c0_i32_0 : i32, i32, i32
  }
  func.func @transform_3(%arg0: i32) -> (i32, i32, i32) {
    %c0_i32 = arith.constant 0 : i32
    %c0_i32_0 = arith.constant 0 : i32
    %c0_i32_1 = arith.constant 0 : i32
    return %arg0, %c0_i32, %c0_i32_0 : i32, i32, i32
  }
  func.func @transform_4(%arg0: i32) -> (i32, i32, i32) {
    %c0_i32 = arith.constant 0 : i32
    %c0_i32_0 = arith.constant 0 : i32
    %c0_i32_1 = arith.constant 0 : i32
    return %arg0, %c0_i32, %c0_i32_0 : i32, i32, i32
  }
  func.func @transform_5(%arg0: i32) -> (i32, i32, i32) {
    %c0_i32 = arith.constant 0 : i32
    %c0_i32_0 = arith.constant 0 : i32
    %c0_i32_1 = arith.constant 0 : i32
    return %arg0, %c0_i32, %c0_i32_0 : i32, i32, i32
  }
  func.func @transform_6(%arg0: i32) -> (i32, i32, i32) {
    %c0_i32 = arith.constant 0 : i32
    %c0_i32_0 = arith.constant 0 : i32
    %c0_i32_1 = arith.constant 0 : i32
    return %arg0, %c0_i32, %c0_i32_0 : i32, i32, i32
  }
  func.func @transform_7(%arg0: i32) -> (i32, i32, i32) {
    %c0_i32 = arith.constant 0 : i32
    %c0_i32_0 = arith.constant 0 : i32
    %c0_i32_1 = arith.constant 0 : i32
    return %arg0, %c0_i32, %c0_i32_0 : i32, i32, i32
  }
  func.func @transform_8(%arg0: i32) -> (i32, i32, i32) {
    %c0_i32 = arith.constant 0 : i32
    %c0_i32_0 = arith.constant 0 : i32
    %c0_i32_1 = arith.constant 0 : i32
    return %arg0, %c0_i32, %c0_i32_0 : i32, i32, i32
  }
  func.func @transform_9(%arg0: i32) -> (i32, i32) {
    %c0_i32 = arith.constant 0 : i32
    %c0_i32_0 = arith.constant 0 : i32
    %c0_i32_1 = arith.constant 0 : i32
    return %c0_i32, %c0_i32_0 : i32, i32
  }
  func.func @transform_10(%arg0: i32) -> i32 {
    %c0_i32 = arith.constant 0 : i32
    %c0_i32_0 = arith.constant 0 : i32
    return %c0_i32 : i32
  }
  func.func @transform_11(%arg0: i32) -> (i32, i32) {
    %c0_i32 = arith.constant 0 : i32
    %c0_i32_0 = arith.constant 0 : i32
    return %c0_i32, %arg0 : i32, i32
  }
}

</mosaic_0001>

<llo_original>
// kernel: tpu_custom_call.1
$region0: #{tpu_custom_call.1}
  #allocation0 [shape = 'u32[]', space=smem, size = 0x4, offset = 0x4, fixed_abs, tag = 'smem constant byte address 0x4 - core index']
  #allocation1 [shape = 'u32[144,128]{1,0:T(1,128)}', space=vmem, size = 0x12000, scoped, tag = 'internal scratch']
  %s0 = inlined_call_operand.hbm [shape: bf16[8,2048], index: 0, kind: input, shape index: {}]
  %s1 = inlined_call_operand.hbm [shape: bf16[4,512,512], index: 1, kind: input, shape index: {}]
  %s2 = inlined_call_operand.hbm [shape: bf16[4,512,128], index: 2, kind: input, shape index: {}]
  %s3 = inlined_call_operand.hbm [shape: f32[2,2,512], index: 3, kind: input, shape index: {}]
  %s4 = inlined_call_operand.hbm [shape: f32[2,2,512], index: 4, kind: input, shape index: {}]
  %s5 = inlined_call_operand.hbm [shape: f32[2,2,512], index: 5, kind: input, shape index: {}]
  %s6 = inlined_call_operand.hbm [shape: f32[2,2,128], index: 6, kind: input, shape index: {}]
  %s7 = inlined_call_operand.hbm [shape: f32[2,2,128], index: 7, kind: input, shape index: {}]
  %s8 = inlined_call_operand.hbm [shape: f32[2,2,128], index: 8, kind: input, shape index: {}]
  %s9 = inlined_call_operand.hbm [shape: f32[1,128], index: 9, kind: input, shape index: {}]
  %s10 = inlined_call_operand.hbm [shape: f32[4], index: 10, kind: input, shape index: {}]
  %s11 = inlined_call_operand.hbm [shape: f32[8,512], index: 11, kind: output, shape index: {}]
  %s12 = sld [smem:[#allocation0]]
  $region121: #{tpu_custom_call.1} parent=0
    _
  %s14 = ssub.s32 1, %s12
  %s15 = scalar_select 0, %s14, %s12
  $region1: #{tpu_custom_call.1} parent=0
    #allocation2 [shape = 'u8[32768]{0}', space=vmem, size = 0x8000, scoped, tag = 'input window, operand 0']
    #allocation3 [shape = 's32[2]{0}', space=sflag, size = 0x8, scoped, tag = 'scoped memory for tpu_custom_call.1']
    #allocation4 [shape = 's32[2]{0}', space=sflag, size = 0x8, scoped, tag = 'scoped memory for tpu_custom_call.1']
    #allocation5 [shape = 's32[2]{0}', space=sflag, size = 0x8, scoped, tag = 'scoped memory for tpu_custom_call.1']
    #allocation6 [shape = 'u8[2097152]{0}', space=vmem, size = 0x200000, scoped, tag = 'input window, operand 1']
    #allocation7 [shape = 's32[2]{0}', space=sflag, size = 0x8, scoped, tag = 'scoped memory for tpu_custom_call.1']
    #allocation8 [shape = 'u8[524288]{0}', space=vmem, size = 0x80000, scoped, tag = 'input window, operand 2']
    #allocation9 [shape = 'u8[8192]{0}', space=vmem, size = 0x2000, scoped, tag = 'input window, operand 3']
    #allocation10 [shape = 's32[2]{0}', space=sflag, size = 0x8, scoped, tag = 'scoped memory for tpu_custom_call.1']
    #allocation11 [shape = 'u8[8192]{0}', space=vmem, size = 0x2000, scoped, tag = 'input window, operand 4']
    #allocation12 [shape = 'u8[8192]{0}', space=vmem, size = 0x2000, scoped, tag = 'input window, operand 5']
    #allocation13 [shape = 's32[2]{0}', space=sflag, size = 0x8, scoped, tag = 'scoped memory for tpu_custom_call.1']
    #allocation14 [shape = 'u8[2048]{0}', space=vmem, size = 0x800, scoped, tag = 'input window, operand 6']
    #allocation15 [shape = 'u8[2048]{0}', space=vmem, size = 0x800, scoped, tag = 'input window, operand 7']
    #allocation16 [shape = 's32[2]{0}', space=sflag, size = 0x8, scoped, tag = 'scoped memory for tpu_custom_call.1']
    #allocation17 [shape = 'u8[2048]{0}', space=vmem, size = 0x800, scoped, tag = 'input window, operand 8']
    #allocation18 [shape = 'u8[512]{0}', space=vmem, size = 0x400, scoped, tag = 'input window, operand 9, single buffered']
    #allocation19 [shape = 's32[1]{0}', space=sflag, size = 0x4, scoped, tag = 'scoped memory for tpu_custom_call.1']
    #allocation20 [shape = 'u8[512]{0}', space=smem, size = 0x200, scoped, tag = 'input window, operand 10, single buffered']
    #allocation21 [shape = 'u8[16384]{0}', space=vmem, size = 0x4000, scoped, tag = 'output window, operand 0']
    %16 = vsyncpa [#allocation3], 0
    %s17 = scalar_lea.sflag [#allocation3], 1
    %18 = vsyncpa %s17, 0
    %19 = vsyncpa [#allocation7], 0
    %s20 = scalar_lea.sflag [#allocation7], 1
    %21 = vsyncpa %s20, 0
    %22 = vsyncpa [#allocation10], 0
    %s23 = scalar_lea.sflag [#allocation10], 1
    %24 = vsyncpa %s23, 0
    %25 = vsyncpa [#allocation13], 0
    %s26 = scalar_lea.sflag [#allocation13], 1
    %27 = vsyncpa %s26, 0
    %28 = vsyncpa [#allocation16], 0
    %s29 = scalar_lea.sflag [#allocation16], 1
    %30 = vsyncpa %s29, 0
    %31 = vsyncpa [#allocation19], 0
    %32 = vsyncpa [#allocation5], 0
    %33 = vsyncpa [#allocation4], 0
    %s34 = scalar_lea.sflag [#allocation4], 1
    %35 = vsyncpa %s34, 0
    loop: start=0, step=1, limit=4
    $region2: #{tpu_custom_call.1} parent=1 // loop_pre_header
      _
    $region3: #{tpu_custom_call.1} parent=1 // loop_header
      %s37 = sphi 0, %s41
      %p38 = scmp.ge.s32.totalorder %s37, 4
      %s47 = sphi 0, %s49
      %s50 = sphi 0, %s47
      %s51 = sphi 0, %s50
      %s67 = sphi 0, %s51
      %s73 = sphi 0, %s75
      %s76 = sphi 0, %s73
      %s77 = sphi 0, %s76
      %s93 = sphi 0, %s77
      %s99 = sphi 0, %s101
      %s102 = sphi 0, %s99
      %s103 = sphi 0, %s102
      %s119 = sphi 0, %s103
      %s125 = sphi 0, %s127
      %s128 = sphi 0, %s125
      %s129 = sphi 0, %s128
      %s145 = sphi 0, %s129
      %s151 = sphi 0, %s153
      %s154 = sphi 0, %s151
      %s155 = sphi 0, %s154
      %s171 = sphi 0, %s155
      %s177 = sphi 0, %s179
      %s180 = sphi 0, %s177
      %s181 = sphi 0, %s180
      %s197 = sphi 0, %s181
      %s203 = sphi 0, %s205
      %s206 = sphi 0, %s203
      %s207 = sphi 0, %s206
      %s223 = sphi 0, %s207
      %s229 = sphi 0, %s231
      %s232 = sphi 0, %s229
      %s233 = sphi 0, %s232
      %s249 = sphi 0, %s233
      %s255 = sphi 0, %s257
      %s258 = sphi 0, %s255
      %s259 = sphi 0, %s258
      %s275 = sphi 0, %s259
      %s279 = sphi 0, %s279
      %s281 = sphi 0, %s279
      %s282 = sphi 0, %s281
      %s296 = sphi 0, %s282
      %s300 = sphi 0, %s300
      %s302 = sphi 0, %s300
      %s303 = sphi 0, %s302
      %s317 = sphi 0, %s303
      %s323 = sphi 0, %s325
      %s326 = sphi 0, %s323
      %s327 = sphi 0, %s326
      %s343 = sphi 0, %s327
    $region4: #{tpu_custom_call.1} parent=1 // loop_header_branch
      %40 = sbr.rel (%p38) target = $region8
    $region5: #{tpu_custom_call.1} parent=1 // loop_body
      %s42 = ssub.s32 %s37, 1
      %s43 = ssub.s32 %s37, 2
      %s44 = sadd.s32 %s37, 1
      %s45 = ssub.s32 %s37, %s44
      %p46 = scmp.eq.s32.totalorder %s45, 0
      %s48 = sadd.s32 %s47, 1
      %s49 = scalar_select %p46, %s47, %s48
      %p52 = pneg %p46
      %p53 = scmp.eq.s32.totalorder %s37, 1
      %p54 = por %p52, %p53
      %p55 = scmp.ne.s32.totalorder %s47, %s50
      %p56 = scmp.eq.s32.totalorder %s37, 0
      %p57 = por %p55, %p56
      %p58 = scmp.ne.s32.totalorder %s47, %s50
      %p59 = scmp.eq.s32.totalorder %s42, 1
      %p60 = por %p58, %p59
      %p61 = scmp.ne.s32.totalorder %s50, %s51
      %p62 = scmp.eq.s32.totalorder %s42, 0
      %p63 = por %p61, %p62
      %p64 = scmp.ne.s32.totalorder %s50, %s51
      %p65 = scmp.eq.s32.totalorder %s43, 1
      %p66 = por %p64, %p65
      %p68 = scmp.ne.s32.totalorder %s51, %s67
      %p69 = scmp.eq.s32.totalorder %s43, 0
      %p70 = por %p68, %p69
      %s71 = ssub.s32 %s37, %s44
      %p72 = scmp.eq.s32.totalorder %s71, 0
      %s74 = sadd.s32 %s73, 1
      %s75 = scalar_select %p72, %s73, %s74
      %p78 = pneg %p72
      %p79 = scmp.eq.s32.totalorder %s37, 1
      %p80 = por %p78, %p79
      %p81 = scmp.ne.s32.totalorder %s73, %s76
      %p82 = scmp.eq.s32.totalorder %s37, 0
      %p83 = por %p81, %p82
      %p84 = scmp.ne.s32.totalorder %s73, %s76
      %p85 = scmp.eq.s32.totalorder %s42, 1
      %p86 = por %p84, %p85
      %p87 = scmp.ne.s32.totalorder %s76, %s77
      %p88 = scmp.eq.s32.totalorder %s42, 0
      %p89 = por %p87, %p88
      %p90 = scmp.ne.s32.totalorder %s76, %s77
      %p91 = scmp.eq.s32.totalorder %s43, 1
      %p92 = por %p90, %p91
      %p94 = scmp.ne.s32.totalorder %s77, %s93
      %p95 = scmp.eq.s32.totalorder %s43, 0
      %p96 = por %p94, %p95
      %s97 = ssub.s32 %s37, %s44
      %p98 = scmp.eq.s32.totalorder %s97, 0
      %s100 = sadd.s32 %s99, 1
      %s101 = scalar_select %p98, %s99, %s100
      %p104 = pneg %p98
      %p105 = scmp.eq.s32.totalorder %s37, 1
      %p106 = por %p104, %p105
      %p107 = scmp.ne.s32.totalorder %s99, %s102
      %p108 = scmp.eq.s32.totalorder %s37, 0
      %p109 = por %p107, %p108
      %p110 = scmp.ne.s32.totalorder %s99, %s102
      %p111 = scmp.eq.s32.totalorder %s42, 1
      %p112 = por %p110, %p111
      %p113 = scmp.ne.s32.totalorder %s102, %s103
      %p114 = scmp.eq.s32.totalorder %s42, 0
      %p115 = por %p113, %p114
      %p116 = scmp.ne.s32.totalorder %s102, %s103
      %p117 = scmp.eq.s32.totalorder %s43, 1
      %p118 = por %p116, %p117
      %p120 = scmp.ne.s32.totalorder %s103, %s119
      %p121 = scmp.eq.s32.totalorder %s43, 0
      %p122 = por %p120, %p121
      %s123 = ssub.s32 %s37, %s44
      %p124 = scmp.eq.s32.totalorder %s123, 0
      %s126 = sadd.s32 %s125, 1
      %s127 = scalar_select %p124, %s125, %s126
      %p130 = pneg %p124
      %p131 = scmp.eq.s32.totalorder %s37, 1
      %p132 = por %p130, %p131
      %p133 = scmp.ne.s32.totalorder %s125, %s128
      %p134 = scmp.eq.s32.totalorder %s37, 0
      %p135 = por %p133, %p134
      %p136 = scmp.ne.s32.totalorder %s125, %s128
      %p137 = scmp.eq.s32.totalorder %s42, 1
      %p138 = por %p136, %p137
      %p139 = scmp.ne.s32.totalorder %s128, %s129
      %p140 = scmp.eq.s32.totalorder %s42, 0
      %p141 = por %p139, %p140
      %p142 = scmp.ne.s32.totalorder %s128, %s129
      %p143 = scmp.eq.s32.totalorder %s43, 1
      %p144 = por %p142, %p143
      %p146 = scmp.ne.s32.totalorder %s129, %s145
      %p147 = scmp.eq.s32.totalorder %s43, 0
      %p148 = por %p146, %p147
      %s149 = ssub.s32 %s37, %s44
      %p150 = scmp.eq.s32.totalorder %s149, 0
      %s152 = sadd.s32 %s151, 1
      %s153 = scalar_select %p150, %s151, %s152
      %p156 = pneg %p150
      %p157 = scmp.eq.s32.totalorder %s37, 1
      %p158 = por %p156, %p157
      %p159 = scmp.ne.s32.totalorder %s151, %s154
      %p160 = scmp.eq.s32.totalorder %s37, 0
      %p161 = por %p159, %p160
      %p162 = scmp.ne.s32.totalorder %s151, %s154
      %p163 = scmp.eq.s32.totalorder %s42, 1
      %p164 = por %p162, %p163
      %p165 = scmp.ne.s32.totalorder %s154, %s155
      %p166 = scmp.eq.s32.totalorder %s42, 0
      %p167 = por %p165, %p166
      %p168 = scmp.ne.s32.totalorder %s154, %s155
      %p169 = scmp.eq.s32.totalorder %s43, 1
      %p170 = por %p168, %p169
      %p172 = scmp.ne.s32.totalorder %s155, %s171
      %p173 = scmp.eq.s32.totalorder %s43, 0
      %p174 = por %p172, %p173
      %s175 = ssub.s32 %s37, %s44
      %p176 = scmp.eq.s32.totalorder %s175, 0
      %s178 = sadd.s32 %s177, 1
      %s179 = scalar_select %p176, %s177, %s178
      %p182 = pneg %p176
      %p183 = scmp.eq.s32.totalorder %s37, 1
      %p184 = por %p182, %p183
      %p185 = scmp.ne.s32.totalorder %s177, %s180
      %p186 = scmp.eq.s32.totalorder %s37, 0
      %p187 = por %p185, %p186
      %p188 = scmp.ne.s32.totalorder %s177, %s180
      %p189 = scmp.eq.s32.totalorder %s42, 1
      %p190 = por %p188, %p189
      %p191 = scmp.ne.s32.totalorder %s180, %s181
      %p192 = scmp.eq.s32.totalorder %s42, 0
      %p193 = por %p191, %p192
      %p194 = scmp.ne.s32.totalorder %s180, %s181
      %p195 = scmp.eq.s32.totalorder %s43, 1
      %p196 = por %p194, %p195
      %p198 = scmp.ne.s32.totalorder %s181, %s197
      %p199 = scmp.eq.s32.totalorder %s43, 0
      %p200 = por %p198, %p199
      %s201 = ssub.s32 %s37, %s44
      %p202 = scmp.eq.s32.totalorder %s201, 0
      %s204 = sadd.s32 %s203, 1
      %s205 = scalar_select %p202, %s203, %s204
      %p208 = pneg %p202
      %p209 = scmp.eq.s32.totalorder %s37, 1
      %p210 = por %p208, %p209
      %p211 = scmp.ne.s32.totalorder %s203, %s206
      %p212 = scmp.eq.s32.totalorder %s37, 0
      %p213 = por %p211, %p212
      %p214 = scmp.ne.s32.totalorder %s203, %s206
      %p215 = scmp.eq.s32.totalorder %s42, 1
      %p216 = por %p214, %p215
      %p217 = scmp.ne.s32.totalorder %s206, %s207
      %p218 = scmp.eq.s32.totalorder %s42, 0
      %p219 = por %p217, %p218
      %p220 = scmp.ne.s32.totalorder %s206, %s207
      %p221 = scmp.eq.s32.totalorder %s43, 1
      %p222 = por %p220, %p221
      %p224 = scmp.ne.s32.totalorder %s207, %s223
      %p225 = scmp.eq.s32.totalorder %s43, 0
      %p226 = por %p224, %p225
      %s227 = ssub.s32 %s37, %s44
      %p228 = scmp.eq.s32.totalorder %s227, 0
      %s230 = sadd.s32 %s229, 1
      %s231 = scalar_select %p228, %s229, %s230
      %p234 = pneg %p228
      %p235 = scmp.eq.s32.totalorder %s37, 1
      %p236 = por %p234, %p235
      %p237 = scmp.ne.s32.totalorder %s229, %s232
      %p238 = scmp.eq.s32.totalorder %s37, 0
      %p239 = por %p237, %p238
      %p240 = scmp.ne.s32.totalorder %s229, %s232
      %p241 = scmp.eq.s32.totalorder %s42, 1
      %p242 = por %p240, %p241
      %p243 = scmp.ne.s32.totalorder %s232, %s233
      %p244 = scmp.eq.s32.totalorder %s42, 0
      %p245 = por %p243, %p244
      %p246 = scmp.ne.s32.totalorder %s232, %s233
      %p247 = scmp.eq.s32.totalorder %s43, 1
      %p248 = por %p246, %p247
      %p250 = scmp.ne.s32.totalorder %s233, %s249
      %p251 = scmp.eq.s32.totalorder %s43, 0
      %p252 = por %p250, %p251
      %s253 = ssub.s32 %s37, %s44
      %p254 = scmp.eq.s32.totalorder %s253, 0
      %s256 = sadd.s32 %s255, 1
      %s257 = scalar_select %p254, %s255, %s256
      %p260 = pneg %p254
      %p261 = scmp.eq.s32.totalorder %s37, 1
      %p262 = por %p260, %p261
      %p263 = scmp.ne.s32.totalorder %s255, %s258
      %p264 = scmp.eq.s32.totalorder %s37, 0
      %p265 = por %p263, %p264
      %p266 = scmp.ne.s32.totalorder %s255, %s258
      %p267 = scmp.eq.s32.totalorder %s42, 1
      %p268 = por %p266, %p267
      %p269 = scmp.ne.s32.totalorder %s258, %s259
      %p270 = scmp.eq.s32.totalorder %s42, 0
      %p271 = por %p269, %p270
      %p272 = scmp.ne.s32.totalorder %s258, %s259
      %p273 = scmp.eq.s32.totalorder %s43, 1
      %p274 = por %p272, %p273
      %p276 = scmp.ne.s32.totalorder %s259, %s275
      %p277 = scmp.eq.s32.totalorder %s43, 0
      %p278 = por %p276, %p277
      %s280 = sadd.s32 %s279, 1
      %p283 = scmp.eq.s32.totalorder %s37, 1
      %p284 = scmp.ne.s32.totalorder %s279, %s281
      %p285 = scmp.eq.s32.totalorder %s37, 0
      %p286 = por %p284, %p285
      %p287 = scmp.ne.s32.totalorder %s279, %s281
      %p288 = scmp.eq.s32.totalorder %s42, 1
      %p289 = por %p287, %p288
      %p290 = scmp.ne.s32.totalorder %s281, %s282
      %p291 = scmp.eq.s32.totalorder %s42, 0
      %p292 = por %p290, %p291
      %p293 = scmp.ne.s32.totalorder %s281, %s282
      %p294 = scmp.eq.s32.totalorder %s43, 1
      %p295 = por %p293, %p294
      %p297 = scmp.ne.s32.totalorder %s282, %s296
      %p298 = scmp.eq.s32.totalorder %s43, 0
      %p299 = por %p297, %p298
      %s301 = sadd.s32 %s300, 1
      %p304 = scmp.eq.s32.totalorder %s37, 1
      %p305 = scmp.ne.s32.totalorder %s300, %s302
      %p306 = scmp.eq.s32.totalorder %s37, 0
      %p307 = por %p305, %p306
      %p308 = scmp.ne.s32.totalorder %s300, %s302
      %p309 = scmp.eq.s32.totalorder %s42, 1
      %p310 = por %p308, %p309
      %p311 = scmp.ne.s32.totalorder %s302, %s303
      %p312 = scmp.eq.s32.totalorder %s42, 0
      %p313 = por %p311, %p312
      %p314 = scmp.ne.s32.totalorder %s302, %s303
      %p315 = scmp.eq.s32.totalorder %s43, 1
      %p316 = por %p314, %p315
      %p318 = scmp.ne.s32.totalorder %s303, %s317
      %p319 = scmp.eq.s32.totalorder %s43, 0
      %p320 = por %p318, %p319
      %s321 = ssub.s32 %s37, %s44
      %p322 = scmp.eq.s32.totalorder %s321, 0
      %s324 = sadd.s32 %s323, 1
      %s325 = scalar_select %p322, %s323, %s324
      %p328 = pneg %p322
      %p329 = scmp.eq.s32.totalorder %s37, 1
      %p330 = por %p328, %p329
      %p331 = scmp.ne.s32.totalorder %s323, %s326
      %p332 = scmp.eq.s32.totalorder %s37, 0
      %p333 = por %p331, %p332
      %p334 = scmp.ne.s32.totalorder %s323, %s326
      %p335 = scmp.eq.s32.totalorder %s42, 1
      %p336 = por %p334, %p335
      %p337 = scmp.ne.s32.totalorder %s326, %s327
      %p338 = scmp.eq.s32.totalorder %s42, 0
      %p339 = por %p337, %p338
      %p340 = scmp.ne.s32.totalorder %s326, %s327
      %p341 = scmp.eq.s32.totalorder %s43, 1
      %p342 = por %p340, %p341
      %p344 = scmp.ne.s32.totalorder %s327, %s343
      %p345 = scmp.eq.s32.totalorder %s43, 0
      %p346 = por %p344, %p345
      %p347 = scmp.le.s32.totalorder 1, %s37
      %p348 = scmp.lt.s32.totalorder %s37, 3
      %p349 = pnand %p347, %p348
      %p350 = pneg %p349
      // Predicated region
      $region9: #{tpu_custom_call.1} parent=5 // pred_check
        _
      $region10: #{tpu_custom_call.1} parent=5 // pred_check_branch
        %352 = sbr.rel (%p349) target = $region12
      $region11: #{tpu_custom_call.1} parent=5 // pred_region
        %s353 = ssub.s32 %s37, 1
        // Predicated region
        $region13: #{tpu_custom_call.1} parent=11 // pred_check
          %p354 = pneg %p292
        $region14: #{tpu_custom_call.1} parent=11 // pred_check_branch
          %356 = sbr.rel (%p354) target = $region16
        $region15: #{tpu_custom_call.1} parent=11 // pred_region
          %s358 = ssub.s32 16, 16
          %359 = vsyncadd [#allocation19], %s358
          %s361 = sshll.u32 [#allocation18], 4
          %s362 = int_to_ptr.vmem [resolvable:$true] %s361
          %364 = dma.hbm_to_vmem [thread:$0]  %s9, 16, %s362, [#allocation19]
        $region16: #{tpu_custom_call.1} parent=11 // pred_fallthru
          _
        // Predicated region
        $region17: #{tpu_custom_call.1} parent=11 // pred_check
          %p365 = pneg %p313
        $region18: #{tpu_custom_call.1} parent=11 // pred_check_branch
          %367 = sbr.rel (%p365) target = $region20
        $region19: #{tpu_custom_call.1} parent=11 // pred_region
          %s369 = ssub.s32 16, 16
          %370 = vsyncadd [#allocation5], %s369
          %373 = dma.hbm_to_smem %s10, 16, [#allocation20], [#allocation5]
        $region20: #{tpu_custom_call.1} parent=11 // pred_fallthru
          _
      $region12: #{tpu_custom_call.1} parent=5 // pred_fallthru
        _
      %p374 = scmp.lt.s32.totalorder %s37, 2
      // Predicated region
      $region21: #{tpu_custom_call.1} parent=5 // pred_check
        %p375 = pneg %p374
      $region22: #{tpu_custom_call.1} parent=5 // pred_check_branch
        %377 = sbr.rel (%p375) target = $region24
      $region23: #{tpu_custom_call.1} parent=5 // pred_region
        // Predicated region
        $region25: #{tpu_custom_call.1} parent=23 // pred_check
          %p378 = pneg %p57
        $region26: #{tpu_custom_call.1} parent=23 // pred_check_branch
          %380 = sbr.rel (%p378) target = $region28
        $region27: #{tpu_custom_call.1} parent=23 // pred_region
          %s381 = sand.u32 %s47, 1
          %s382 = scalar_lea.sflag [#allocation3], %s381
          %s383 = sand.u32 %s47, 1
          %s384 = smul.addr %s383, 32
          %s385 = scalar_lea.vmem [#allocation2], %s384
          %s386 = smul.u32 8, %s37
          %s388 = ssub.s32 512, 512
          %389 = vsyncadd %s382, %s388
          %s390 = smul.addr %s386, 64
          %s391 = scalar_lea.hbm %s0, %s390
          %s393 = sshll.u32 %s385, 4
          %s394 = int_to_ptr.vmem [resolvable:$true] %s393
          %396 = dma.hbm_to_vmem [thread:$0]  %s391, 512, %s394, %s382
        $region28: #{tpu_custom_call.1} parent=23 // pred_fallthru
          _
        // Predicated region
        $region29: #{tpu_custom_call.1} parent=23 // pred_check
          %p397 = pneg %p83
        $region30: #{tpu_custom_call.1} parent=23 // pred_check_branch
          %399 = sbr.rel (%p397) target = $region32
        $region31: #{tpu_custom_call.1} parent=23 // pred_region
          %s400 = sand.u32 %s37, 1
          %s401 = scalar_lea.sflag [#allocation7], %s400
          %s402 = sand.u32 %s73, 1
          %s403 = smul.addr %s402, 2048
          %s404 = scalar_lea.vmem [#allocation6], %s403
          %s405 = smul.u32 2, %s37
          %s407 = ssub.s32 32768, 32768
          %408 = vsyncadd %s401, %s407
          %s409 = smul.addr %s405, 256
          %s410 = smul.addr %s409, 64
          %s411 = scalar_lea.hbm %s1, %s410
          %s412 = sshll.u32 %s404, 4
          %s413 = int_to_ptr.vmem [resolvable:$true] %s412
          %418 = dma.hbm_to_vmem [thread:$0]  %s411, 32768, %s413, %s401, 256, 256, 16
        $region32: #{tpu_custom_call.1} parent=23 // pred_fallthru
          _
        // Predicated region
        $region33: #{tpu_custom_call.1} parent=23 // pred_check
          %p419 = pneg %p109
        $region34: #{tpu_custom_call.1} parent=23 // pred_check_branch
          %421 = sbr.rel (%p419) target = $region36
        $region35: #{tpu_custom_call.1} parent=23 // pred_region
          %s422 = sand.u32 %s37, 1
          %s423 = scalar_lea.sflag [#allocation7], %s422
          %s424 = sand.u32 %s99, 1
          %s425 = smul.addr %s424, 512
          %s426 = scalar_lea.vmem [#allocation8], %s425
          %s427 = smul.u32 2, %s37
          %s429 = ssub.s32 8192, 8192
          %430 = vsyncadd %s423, %s429
          %s431 = smul.addr %s427, 64
          %s432 = smul.addr %s431, 64
          %s433 = scalar_lea.hbm %s2, %s432
          %s434 = sshll.u32 %s426, 4
          %s435 = int_to_ptr.vmem [resolvable:$true] %s434
          %440 = dma.hbm_to_vmem [thread:$0]  %s433, 8192, %s435, %s423, 64, 64, 4
        $region36: #{tpu_custom_call.1} parent=23 // pred_fallthru
          _
        // Predicated region
        $region37: #{tpu_custom_call.1} parent=23 // pred_check
          %p441 = pneg %p135
        $region38: #{tpu_custom_call.1} parent=23 // pred_check_branch
          %443 = sbr.rel (%p441) target = $region40
        $region39: #{tpu_custom_call.1} parent=23 // pred_region
          %s444 = sand.u32 %s37, 1
          %s445 = scalar_lea.sflag [#allocation10], %s444
          %s446 = sand.u32 %s125, 1
          %s447 = smul.addr %s446, 8
          %s448 = scalar_lea.vmem [#allocation9], %s447
          %s450 = ssub.s32 128, 128
          %451 = vsyncadd %s445, %s450
          %s452 = smul.addr %s37, 4
          %s453 = smul.addr %s452, 32
          %s454 = scalar_lea.hbm %s3, %s453
          %s456 = sshll.u32 %s448, 4
          %s457 = int_to_ptr.vmem [resolvable:$true] %s456
          %459 = dma.hbm_to_vmem [thread:$0]  %s454, 128, %s457, %s445
        $region40: #{tpu_custom_call.1} parent=23 // pred_fallthru
          _
        // Predicated region
        $region41: #{tpu_custom_call.1} parent=23 // pred_check
          %p460 = pneg %p161
        $region42: #{tpu_custom_call.1} parent=23 // pred_check_branch
          %462 = sbr.rel (%p460) target = $region44
        $region43: #{tpu_custom_call.1} parent=23 // pred_region
          %s463 = sand.u32 %s37, 1
          %s464 = scalar_lea.sflag [#allocation10], %s463
          %s465 = sand.u32 %s151, 1
          %s466 = smul.addr %s465, 8
          %s467 = scalar_lea.vmem [#allocation11], %s466
          %s469 = ssub.s32 128, 128
          %470 = vsyncadd %s464, %s469
          %s471 = smul.addr %s37, 4
          %s472 = smul.addr %s471, 32
          %s473 = scalar_lea.hbm %s4, %s472
          %s475 = sshll.u32 %s467, 4
          %s476 = int_to_ptr.vmem [resolvable:$true] %s475
          %478 = dma.hbm_to_vmem [thread:$0]  %s473, 128, %s476, %s464
        $region44: #{tpu_custom_call.1} parent=23 // pred_fallthru
          _
        // Predicated region
        $region45: #{tpu_custom_call.1} parent=23 // pred_check
          %p479 = pneg %p187
        $region46: #{tpu_custom_call.1} parent=23 // pred_check_branch
          %481 = sbr.rel (%p479) target = $region48
        $region47: #{tpu_custom_call.1} parent=23 // pred_region
          %s482 = sand.u32 %s37, 1
          %s483 = scalar_lea.sflag [#allocation13], %s482
          %s484 = sand.u32 %s177, 1
          %s485 = smul.addr %s484, 8
          %s486 = scalar_lea.vmem [#allocation12], %s485
          %s488 = ssub.s32 128, 128
          %489 = vsyncadd %s483, %s488
          %s490 = smul.addr %s37, 4
          %s491 = smul.addr %s490, 32
          %s492 = scalar_lea.hbm %s5, %s491
          %s494 = sshll.u32 %s486, 4
          %s495 = int_to_ptr.vmem [resolvable:$true] %s494
          %497 = dma.hbm_to_vmem [thread:$0]  %s492, 128, %s495, %s483
        $region48: #{tpu_custom_call.1} parent=23 // pred_fallthru
          _
        // Predicated region
        $region49: #{tpu_custom_call.1} parent=23 // pred_check
          %p498 = pneg %p213
        $region50: #{tpu_custom_call.1} parent=23 // pred_check_branch
          %500 = sbr.rel (%p498) target = $region52
        $region51: #{tpu_custom_call.1} parent=23 // pred_region
          %s501 = sand.u32 %s37, 1
          %s502 = scalar_lea.sflag [#allocation13], %s501
          %s503 = sand.u32 %s203, 1
          %s504 = smul.addr %s503, 2
          %s505 = scalar_lea.vmem [#allocation14], %s504
          %s507 = ssub.s32 32, 32
          %508 = vsyncadd %s502, %s507
          %s509 = smul.addr %s37, 32
          %s510 = scalar_lea.hbm %s6, %s509
          %s512 = sshll.u32 %s505, 4
          %s513 = int_to_ptr.vmem [resolvable:$true] %s512
          %515 = dma.hbm_to_vmem [thread:$0]  %s510, 32, %s513, %s502
        $region52: #{tpu_custom_call.1} parent=23 // pred_fallthru
          _
        // Predicated region
        $region53: #{tpu_custom_call.1} parent=23 // pred_check
          %p516 = pneg %p239
        $region54: #{tpu_custom_call.1} parent=23 // pred_check_branch
          %518 = sbr.rel (%p516) target = $region56
        $region55: #{tpu_custom_call.1} parent=23 // pred_region
          %s519 = sand.u32 %s37, 1
          %s520 = scalar_lea.sflag [#allocation16], %s519
          %s521 = sand.u32 %s229, 1
          %s522 = smul.addr %s521, 2
          %s523 = scalar_lea.vmem [#allocation15], %s522
          %s525 = ssub.s32 32, 32
          %526 = vsyncadd %s520, %s525
          %s527 = smul.addr %s37, 32
          %s528 = scalar_lea.hbm %s7, %s527
          %s530 = sshll.u32 %s523, 4
          %s531 = int_to_ptr.vmem [resolvable:$true] %s530
          %533 = dma.hbm_to_vmem [thread:$0]  %s528, 32, %s531, %s520
        $region56: #{tpu_custom_call.1} parent=23 // pred_fallthru
          _
        // Predicated region
        $region57: #{tpu_custom_call.1} parent=23 // pred_check
          %p534 = pneg %p265
        $region58: #{tpu_custom_call.1} parent=23 // pred_check_branch
          %536 = sbr.rel (%p534) target = $region60
        $region59: #{tpu_custom_call.1} parent=23 // pred_region
          %s537 = sand.u32 %s37, 1
          %s538 = scalar_lea.sflag [#allocation16], %s537
          %s539 = sand.u32 %s255, 1
          %s540 = smul.addr %s539, 2
          %s541 = scalar_lea.vmem [#allocation17], %s540
          %s543 = ssub.s32 32, 32
          %544 = vsyncadd %s538, %s543
          %s545 = smul.addr %s37, 32
          %s546 = scalar_lea.hbm %s8, %s545
          %s548 = sshll.u32 %s541, 4
          %s549 = int_to_ptr.vmem [resolvable:$true] %s548
          %551 = dma.hbm_to_vmem [thread:$0]  %s546, 32, %s549, %s538
        $region60: #{tpu_custom_call.1} parent=23 // pred_fallthru
          _
      $region24: #{tpu_custom_call.1} parent=5 // pred_fallthru
        _
      %p552 = scmp.le.s32.totalorder 1, %s37
      %p553 = scmp.lt.s32.totalorder %s37, 3
      %p554 = pnand %p552, %p553
      %p555 = pneg %p554
      // Predicated region
      $region61: #{tpu_custom_call.1} parent=5 // pred_check
        _
      $region62: #{tpu_custom_call.1} parent=5 // pred_check_branch
        %557 = sbr.rel (%p554) target = $region64
      $region63: #{tpu_custom_call.1} parent=5 // pred_region
        %s558 = ssub.s32 %s37, 1
        %s559 = sand.u32 %s50, 1
        %s560 = scalar_lea.sflag [#allocation3], %s559
        %s561 = sand.u32 %s50, 1
        %s562 = smul.addr %s561, 32
        %s563 = scalar_lea.vmem [#allocation2], %s562
        // Predicated region
        $region65: #{tpu_custom_call.1} parent=63 // pred_check
          %p564 = pneg %p63
        $region66: #{tpu_custom_call.1} parent=63 // pred_check_branch
          %566 = sbr.rel (%p564) target = $region68
        $region67: #{tpu_custom_call.1} parent=63 // pred_region
          %567 = dma.done %s560, 512
        $region68: #{tpu_custom_call.1} parent=63 // pred_fallthru
          _
        %s568 = sand.u32 %s42, 1
        %s569 = scalar_lea.sflag [#allocation7], %s568
        %s570 = sand.u32 %s76, 1
        %s571 = smul.addr %s570, 2048
        %s572 = scalar_lea.vmem [#allocation6], %s571
        // Predicated region
        $region69: #{tpu_custom_call.1} parent=63 // pred_check
          %p573 = pneg %p89
        $region70: #{tpu_custom_call.1} parent=63 // pred_check_branch
          %575 = sbr.rel (%p573) target = $region72
        $region71: #{tpu_custom_call.1} parent=63 // pred_region
          %576 = dma.done %s569, 32768
        $region72: #{tpu_custom_call.1} parent=63 // pred_fallthru
          _
        %s577 = sand.u32 %s42, 1
        %s578 = scalar_lea.sflag [#allocation7], %s577
        %s579 = sand.u32 %s102, 1
        %s580 = smul.addr %s579, 512
        %s581 = scalar_lea.vmem [#allocation8], %s580
        // Predicated region
        $region73: #{tpu_custom_call.1} parent=63 // pred_check
          %p582 = pneg %p115
        $region74: #{tpu_custom_call.1} parent=63 // pred_check_branch
          %584 = sbr.rel (%p582) target = $region76
        $region75: #{tpu_custom_call.1} parent=63 // pred_region
          %585 = dma.done %s578, 8192
        $region76: #{tpu_custom_call.1} parent=63 // pred_fallthru
          _
        %s586 = sand.u32 %s42, 1
        %s587 = scalar_lea.sflag [#allocation10], %s586
        %s588 = sand.u32 %s128, 1
        %s589 = smul.addr %s588, 8
        %s590 = scalar_lea.vmem [#allocation9], %s589
        // Predicated region
        $region77: #{tpu_custom_call.1} parent=63 // pred_check
          %p591 = pneg %p141
        $region78: #{tpu_custom_call.1} parent=63 // pred_check_branch
          %593 = sbr.rel (%p591) target = $region80
        $region79: #{tpu_custom_call.1} parent=63 // pred_region
          %594 = dma.done %s587, 128
        $region80: #{tpu_custom_call.1} parent=63 // pred_fallthru
          _
        %s595 = sand.u32 %s42, 1
        %s596 = scalar_lea.sflag [#allocation10], %s595
        %s597 = sand.u32 %s154, 1
        %s598 = smul.addr %s597, 8
        %s599 = scalar_lea.vmem [#allocation11], %s598
        // Predicated region
        $region81: #{tpu_custom_call.1} parent=63 // pred_check
          %p600 = pneg %p167
        $region82: #{tpu_custom_call.1} parent=63 // pred_check_branch
          %602 = sbr.rel (%p600) target = $region84
        $region83: #{tpu_custom_call.1} parent=63 // pred_region
          %603 = dma.done %s596, 128
        $region84: #{tpu_custom_call.1} parent=63 // pred_fallthru
          _
        %s604 = sand.u32 %s42, 1
        %s605 = scalar_lea.sflag [#allocation13], %s604
        %s606 = sand.u32 %s180, 1
        %s607 = smul.addr %s606, 8
        %s608 = scalar_lea.vmem [#allocation12], %s607
        // Predicated region
        $region85: #{tpu_custom_call.1} parent=63 // pred_check
          %p609 = pneg %p193
        $region86: #{tpu_custom_call.1} parent=63 // pred_check_branch
          %611 = sbr.rel (%p609) target = $region88
        $region87: #{tpu_custom_call.1} parent=63 // pred_region
          %612 = dma.done %s605, 128
        $region88: #{tpu_custom_call.1} parent=63 // pred_fallthru
          _
        %s613 = sand.u32 %s42, 1
        %s614 = scalar_lea.sflag [#allocation13], %s613
        %s615 = sand.u32 %s206, 1
        %s616 = smul.addr %s615, 2
        %s617 = scalar_lea.vmem [#allocation14], %s616
        // Predicated region
        $region89: #{tpu_custom_call.1} parent=63 // pred_check
          %p618 = pneg %p219
        $region90: #{tpu_custom_call.1} parent=63 // pred_check_branch
          %620 = sbr.rel (%p618) target = $region92
        $region91: #{tpu_custom_call.1} parent=63 // pred_region
          %621 = dma.done %s614, 32
        $region92: #{tpu_custom_call.1} parent=63 // pred_fallthru
          _
        %s622 = sand.u32 %s42, 1
        %s623 = scalar_lea.sflag [#allocation16], %s622
        %s624 = sand.u32 %s232, 1
        %s625 = smul.addr %s624, 2
        %s626 = scalar_lea.vmem [#allocation15], %s625
        // Predicated region
        $region93: #{tpu_custom_call.1} parent=63 // pred_check
          %p627 = pneg %p245
        $region94: #{tpu_custom_call.1} parent=63 // pred_check_branch
          %629 = sbr.rel (%p627) target = $region96
        $region95: #{tpu_custom_call.1} parent=63 // pred_region
          %630 = dma.done %s623, 32
        $region96: #{tpu_custom_call.1} parent=63 // pred_fallthru
          _
        %s631 = sand.u32 %s42, 1
        %s632 = scalar_lea.sflag [#allocation16], %s631
        %s633 = sand.u32 %s258, 1
        %s634 = smul.addr %s633, 2
        %s635 = scalar_lea.vmem [#allocation17], %s634
        // Predicated region
        $region97: #{tpu_custom_call.1} parent=63 // pred_check
          %p636 = pneg %p271
        $region98: #{tpu_custom_call.1} parent=63 // pred_check_branch
          %638 = sbr.rel (%p636) target = $region100
        $region99: #{tpu_custom_call.1} parent=63 // pred_region
          %639 = dma.done %s632, 32
        $region100: #{tpu_custom_call.1} parent=63 // pred_fallthru
          _
        // Predicated region
        $region101: #{tpu_custom_call.1} parent=63 // pred_check
          %p640 = pneg %p292
        $region102: #{tpu_custom_call.1} parent=63 // pred_check_branch
          %642 = sbr.rel (%p640) target = $region104
        $region103: #{tpu_custom_call.1} parent=63 // pred_region
          %643 = dma.done [#allocation19], 16
        $region104: #{tpu_custom_call.1} parent=63 // pred_fallthru
          _
        // Predicated region
        $region105: #{tpu_custom_call.1} parent=63 // pred_check
          %p644 = pneg %p313
        $region106: #{tpu_custom_call.1} parent=63 // pred_check_branch
          %646 = sbr.rel (%p644) target = $region108
        $region107: #{tpu_custom_call.1} parent=63 // pred_region
          %647 = dma.done [#allocation5], 16
        $region108: #{tpu_custom_call.1} parent=63 // pred_fallthru
          _
        %648 = sfence
        %s649 = sand.u32 %s50, 1
        %s650 = scalar_lea.sflag [#allocation3], %s649
        %s651 = sand.u32 %s50, 1
        %s652 = smul.addr %s651, 32
        %s653 = scalar_lea.vmem [#allocation2], %s652
        %p654 = pneg %p63
        %p655 = pneg %p60
        %s656 = sand.u32 %s42, 1
        %s657 = scalar_lea.sflag [#allocation7], %s656
        %s658 = sand.u32 %s76, 1
        %s659 = smul.addr %s658, 2048
        %s660 = scalar_lea.vmem [#allocation6], %s659
        %p661 = pneg %p89
        %p662 = pneg %p86
        %s663 = sand.u32 %s42, 1
        %s664 = scalar_lea.sflag [#allocation7], %s663
        %s665 = sand.u32 %s102, 1
        %s666 = smul.addr %s665, 512
        %s667 = scalar_lea.vmem [#allocation8], %s666
        %p668 = pneg %p115
        %p669 = pneg %p112
        %s670 = sand.u32 %s42, 1
        %s671 = scalar_lea.sflag [#allocation10], %s670
        %s672 = sand.u32 %s128, 1
        %s673 = smul.addr %s672, 8
        %s674 = scalar_lea.vmem [#allocation9], %s673
        %p675 = pneg %p141
        %p676 = pneg %p138
        %s677 = sand.u32 %s42, 1
        %s678 = scalar_lea.sflag [#allocation10], %s677
        %s679 = sand.u32 %s154, 1
        %s680 = smul.addr %s679, 8
        %s681 = scalar_lea.vmem [#allocation11], %s680
        %p682 = pneg %p167
        %p683 = pneg %p164
        %s684 = sand.u32 %s42, 1
        %s685 = scalar_lea.sflag [#allocation13], %s684
        %s686 = sand.u32 %s180, 1
        %s687 = smul.addr %s686, 8
        %s688 = scalar_lea.vmem [#allocation12], %s687
        %p689 = pneg %p193
        %p690 = pneg %p190
        %s691 = sand.u32 %s42, 1
        %s692 = scalar_lea.sflag [#allocation13], %s691
        %s693 = sand.u32 %s206, 1
        %s694 = smul.addr %s693, 2
        %s695 = scalar_lea.vmem [#allocation14], %s694
        %p696 = pneg %p219
        %p697 = pneg %p216
        %s698 = sand.u32 %s42, 1
        %s699 = scalar_lea.sflag [#allocation16], %s698
        %s700 = sand.u32 %s232, 1
        %s701 = smul.addr %s700, 2
        %s702 = scalar_lea.vmem [#allocation15], %s701
        %p703 = pneg %p245
        %p704 = pneg %p242
        %s705 = sand.u32 %s42, 1
        %s706 = scalar_lea.sflag [#allocation16], %s705
        %s707 = sand.u32 %s258, 1
        %s708 = smul.addr %s707, 2
        %s709 = scalar_lea.vmem [#allocation17], %s708
        %p710 = pneg %p271
        %p711 = pneg %p268
        %p712 = pneg %p292
        %p713 = pneg %p289
        %p714 = pneg %p313
        %p715 = pneg %p310
        %p716 = pneg %p339
        %p717 = pneg %p336
        %s718 = sand.u32 %s326, 1
        %s719 = scalar_lea.sflag [#allocation4], %s718
        %s720 = sand.u32 %s326, 1
        %s721 = smul.addr %s720, 16
        %s722 = scalar_lea.vmem [#allocation21], %s721
        %s723 = smul.u32 8, %s42
        %s724 = smul.u32 2, %s42
        %s725 = smul.u32 2, %s42
        %s726 = smul.u32 2, %s42
        %v728 = vld [vmem:[#allocation18] sm:$0x1]
        %v729 = vld [vmem:[%s563] sm:$0xff]
        %v730 = vld [vmem:[%s563 + $0x8] sm:$0xff]
        %v731 = vld [vmem:[%s572] sm:$0xff]
        %v732 = vld [vmem:[%s572 + $0x8] sm:$0xff]
        %v733 = vld [vmem:[%s572 + $0x10] sm:$0xff]
        %v734 = vld [vmem:[%s572 + $0x18] sm:$0xff]
        %v735 = vld [vmem:[%s572 + $0x20] sm:$0xff]
        %v736 = vld [vmem:[%s572 + $0x28] sm:$0xff]
        %v737 = vld [vmem:[%s572 + $0x30] sm:$0xff]
        %v738 = vld [vmem:[%s572 + $0x38] sm:$0xff]
        %v739 = vld [vmem:[%s572 + $0x40] sm:$0xff]
        %v740 = vld [vmem:[%s572 + $0x48] sm:$0xff]
        %v741 = vld [vmem:[%s572 + $0x50] sm:$0xff]
        %v742 = vld [vmem:[%s572 + $0x58] sm:$0xff]
        %v743 = vld [vmem:[%s572 + $0x60] sm:$0xff]
        %v744 = vld [vmem:[%s572 + $0x68] sm:$0xff]
        %v745 = vld [vmem:[%s572 + $0x70] sm:$0xff]
        %v746 = vld [vmem:[%s572 + $0x78] sm:$0xff]
        %v747 = vld [vmem:[%s572 + $0x80] sm:$0xff]
        %v748 = vld [vmem:[%s572 + $0x88] sm:$0xff]
        %v749 = vld [vmem:[%s572 + $0x90] sm:$0xff]
        %v750 = vld [vmem:[%s572 + $0x98] sm:$0xff]
        %v751 = vld [vmem:[%s572 + $0xa0] sm:$0xff]
        %v752 = vld [vmem:[%s572 + $0xa8] sm:$0xff]
        %v753 = vld [vmem:[%s572 + $0xb0] sm:$0xff]
        %v754 = vld [vmem:[%s572 + $0xb8] sm:$0xff]
        %v755 = vld [vmem:[%s572 + $0xc0] sm:$0xff]
        %v756 = vld [vmem:[%s572 + $0xc8] sm:$0xff]
        %v757 = vld [vmem:[%s572 + $0xd0] sm:$0xff]
        %v758 = vld [vmem:[%s572 + $0xd8] sm:$0xff]
        %v759 = vld [vmem:[%s572 + $0xe0] sm:$0xff]
        %v760 = vld [vmem:[%s572 + $0xe8] sm:$0xff]
        %v761 = vld [vmem:[%s572 + $0xf0] sm:$0xff]
        %v762 = vld [vmem:[%s572 + $0xf8] sm:$0xff]
        %v763 = vld [vmem:[%s572 + $0x100] sm:$0xff]
        %v764 = vld [vmem:[%s572 + $0x108] sm:$0xff]
        %v765 = vld [vmem:[%s572 + $0x110] sm:$0xff]
        %v766 = vld [vmem:[%s572 + $0x118] sm:$0xff]
        %v767 = vld [vmem:[%s572 + $0x120] sm:$0xff]
        %v768 = vld [vmem:[%s572 + $0x128] sm:$0xff]
        %v769 = vld [vmem:[%s572 + $0x130] sm:$0xff]
        %v770 = vld [vmem:[%s572 + $0x138] sm:$0xff]
        %v771 = vld [vmem:[%s572 + $0x140] sm:$0xff]
        %v772 = vld [vmem:[%s572 + $0x148] sm:$0xff]
        %v773 = vld [vmem:[%s572 + $0x150] sm:$0xff]
        %v774 = vld [vmem:[%s572 + $0x158] sm:$0xff]
        %v775 = vld [vmem:[%s572 + $0x160] sm:$0xff]
        %v776 = vld [vmem:[%s572 + $0x168] sm:$0xff]
        %v777 = vld [vmem:[%s572 + $0x170] sm:$0xff]
        %v778 = vld [vmem:[%s572 + $0x178] sm:$0xff]
        %v779 = vld [vmem:[%s572 + $0x180] sm:$0xff]
        %v780 = vld [vmem:[%s572 + $0x188] sm:$0xff]
        %v781 = vld [vmem:[%s572 + $0x190] sm:$0xff]
        %v782 = vld [vmem:[%s572 + $0x198] sm:$0xff]
        %v783 = vld [vmem:[%s572 + $0x1a0] sm:$0xff]
        %v784 = vld [vmem:[%s572 + $0x1a8] sm:$0xff]
        %v785 = vld [vmem:[%s572 + $0x1b0] sm:$0xff]
        %v786 = vld [vmem:[%s572 + $0x1b8] sm:$0xff]
        %v787 = vld [vmem:[%s572 + $0x1c0] sm:$0xff]
        %v788 = vld [vmem:[%s572 + $0x1c8] sm:$0xff]
        %v789 = vld [vmem:[%s572 + $0x1d0] sm:$0xff]
        %v790 = vld [vmem:[%s572 + $0x1d8] sm:$0xff]
        %v791 = vld [vmem:[%s572 + $0x1e0] sm:$0xff]
        %v792 = vld [vmem:[%s572 + $0x1e8] sm:$0xff]
        %v793 = vld [vmem:[%s572 + $0x1f0] sm:$0xff]
        %v794 = vld [vmem:[%s572 + $0x1f8] sm:$0xff]
        %v795 = vld [vmem:[%s572 + $0x200] sm:$0xff]
        %v796 = vld [vmem:[%s572 + $0x208] sm:$0xff]
        %v797 = vld [vmem:[%s572 + $0x210] sm:$0xff]
        %v798 = vld [vmem:[%s572 + $0x218] sm:$0xff]
        %v799 = vld [vmem:[%s572 + $0x220] sm:$0xff]
        %v800 = vld [vmem:[%s572 + $0x228] sm:$0xff]
        %v801 = vld [vmem:[%s572 + $0x230] sm:$0xff]
        %v802 = vld [vmem:[%s572 + $0x238] sm:$0xff]
        %v803 = vld [vmem:[%s572 + $0x240] sm:$0xff]
        %v804 = vld [vmem:[%s572 + $0x248] sm:$0xff]
        %v805 = vld [vmem:[%s572 + $0x250] sm:$0xff]
        %v806 = vld [vmem:[%s572 + $0x258] sm:$0xff]
        %v807 = vld [vmem:[%s572 + $0x260] sm:$0xff]
        %v808 = vld [vmem:[%s572 + $0x268] sm:$0xff]
        %v809 = vld [vmem:[%s572 + $0x270] sm:$0xff]
        %v810 = vld [vmem:[%s572 + $0x278] sm:$0xff]
        %v811 = vld [vmem:[%s572 + $0x280] sm:$0xff]
        %v812 = vld [vmem:[%s572 + $0x288] sm:$0xff]
        %v813 = vld [vmem:[%s572 + $0x290] sm:$0xff]
        %v814 = vld [vmem:[%s572 + $0x298] sm:$0xff]
        %v815 = vld [vmem:[%s572 + $0x2a0] sm:$0xff]
        %v816 = vld [vmem:[%s572 + $0x2a8] sm:$0xff]
        %v817 = vld [vmem:[%s572 + $0x2b0] sm:$0xff]
        %v818 = vld [vmem:[%s572 + $0x2b8] sm:$0xff]
        %v819 = vld [vmem:[%s572 + $0x2c0] sm:$0xff]
        %v820 = vld [vmem:[%s572 + $0x2c8] sm:$0xff]
        %v821 = vld [vmem:[%s572 + $0x2d0] sm:$0xff]
        %v822 = vld [vmem:[%s572 + $0x2d8] sm:$0xff]
        %v823 = vld [vmem:[%s572 + $0x2e0] sm:$0xff]
        %v824 = vld [vmem:[%s572 + $0x2e8] sm:$0xff]
        %v825 = vld [vmem:[%s572 + $0x2f0] sm:$0xff]
        %v826 = vld [vmem:[%s572 + $0x2f8] sm:$0xff]
        %v827 = vld [vmem:[%s572 + $0x300] sm:$0xff]
        %v828 = vld [vmem:[%s572 + $0x308] sm:$0xff]
        %v829 = vld [vmem:[%s572 + $0x310] sm:$0xff]
        %v830 = vld [vmem:[%s572 + $0x318] sm:$0xff]
        %v831 = vld [vmem:[%s572 + $0x320] sm:$0xff]
        %v832 = vld [vmem:[%s572 + $0x328] sm:$0xff]
        %v833 = vld [vmem:[%s572 + $0x330] sm:$0xff]
        %v834 = vld [vmem:[%s572 + $0x338] sm:$0xff]
        %v835 = vld [vmem:[%s572 + $0x340] sm:$0xff]
        %v836 = vld [vmem:[%s572 + $0x348] sm:$0xff]
        %v837 = vld [vmem:[%s572 + $0x350] sm:$0xff]
        %v838 = vld [vmem:[%s572 + $0x358] sm:$0xff]
        %v839 = vld [vmem:[%s572 + $0x360] sm:$0xff]
        %v840 = vld [vmem:[%s572 + $0x368] sm:$0xff]
        %v841 = vld [vmem:[%s572 + $0x370] sm:$0xff]
        %v842 = vld [vmem:[%s572 + $0x378] sm:$0xff]
        %v843 = vld [vmem:[%s572 + $0x380] sm:$0xff]
        %v844 = vld [vmem:[%s572 + $0x388] sm:$0xff]
        %v845 = vld [vmem:[%s572 + $0x390] sm:$0xff]
        %v846 = vld [vmem:[%s572 + $0x398] sm:$0xff]
        %v847 = vld [vmem:[%s572 + $0x3a0] sm:$0xff]
        %v848 = vld [vmem:[%s572 + $0x3a8] sm:$0xff]
        %v849 = vld [vmem:[%s572 + $0x3b0] sm:$0xff]
        %v850 = vld [vmem:[%s572 + $0x3b8] sm:$0xff]
        %v851 = vld [vmem:[%s572 + $0x3c0] sm:$0xff]
        %v852 = vld [vmem:[%s572 + $0x3c8] sm:$0xff]
        %v853 = vld [vmem:[%s572 + $0x3d0] sm:$0xff]
        %v854 = vld [vmem:[%s572 + $0x3d8] sm:$0xff]
        %v855 = vld [vmem:[%s572 + $0x3e0] sm:$0xff]
        %v856 = vld [vmem:[%s572 + $0x3e8] sm:$0xff]
        %v857 = vld [vmem:[%s572 + $0x3f0] sm:$0xff]
        %v858 = vld [vmem:[%s572 + $0x3f8] sm:$0xff]
        %v859 = vld [vmem:[%s590] ss:$2 sm:$0xf]
        %v861 = vlaneseq
        %v862 = vshrl.u32 %v861, 7
        %v863 = vsub.s32 0, %v862
        %v864 = vrot.slane %v859, %v863
        %v865 = vlaneseq
        %v866 = vshrl.u32 %v865, 7
        %v867 = vsub.s32 1, %v866
        %v868 = vrot.slane %v859, %v867
        %v869 = vlaneseq
        %v870 = vshrl.u32 %v869, 7
        %v871 = vsub.s32 2, %v870
        %v872 = vrot.slane %v859, %v871
        %v873 = vlaneseq
        %v874 = vshrl.u32 %v873, 7
        %v875 = vsub.s32 3, %v874
        %v876 = vrot.slane %v859, %v875
        %v883 = vunpack.c.l.b16 %v729
        %v884 = vunpack.c.h.b16 %v729
        %v885 = vunpack.c.l.b16 %v730
        %v886 = vunpack.c.h.b16 %v730
        %v887 = vpack.c.b16 %v883, %v883
        %v888 = vpack.c.b16 %v884, %v884
        %v889 = vpack.c.b16 %v885, %v885
        %v890 = vpack.c.b16 %v886, %v886
        %v1023 = vunpack.c.l.b16 %v731
        %v1024 = vunpack.c.h.b16 %v731
        %v1025 = vunpack.c.l.b16 %v732
        %v1026 = vunpack.c.h.b16 %v732
        %v1027 = vunpack.c.l.b16 %v733
        %v1028 = vunpack.c.h.b16 %v733
        %v1029 = vunpack.c.l.b16 %v734
        %v1030 = vunpack.c.h.b16 %v734
        %v1031 = vunpack.c.l.b16 %v735
        %v1032 = vunpack.c.h.b16 %v735
        %v1033 = vunpack.c.l.b16 %v736
        %v1034 = vunpack.c.h.b16 %v736
        %v1035 = vunpack.c.l.b16 %v737
        %v1036 = vunpack.c.h.b16 %v737
        %v1037 = vunpack.c.l.b16 %v738
        %v1038 = vunpack.c.h.b16 %v738
        %v1039 = vunpack.c.l.b16 %v739
        %v1040 = vunpack.c.h.b16 %v739
        %v1041 = vunpack.c.l.b16 %v740
        %v1042 = vunpack.c.h.b16 %v740
        %v1043 = vunpack.c.l.b16 %v741
        %v1044 = vunpack.c.h.b16 %v741
        %v1045 = vunpack.c.l.b16 %v742
        %v1046 = vunpack.c.h.b16 %v742
        %v1047 = vunpack.c.l.b16 %v743
        %v1048 = vunpack.c.h.b16 %v743
        %v1049 = vunpack.c.l.b16 %v744
        %v1050 = vunpack.c.h.b16 %v744
        %v1051 = vunpack.c.l.b16 %v745
        %v1052 = vunpack.c.h.b16 %v745
        %v1053 = vunpack.c.l.b16 %v746
        %v1054 = vunpack.c.h.b16 %v746
        %v1055 = vunpack.c.l.b16 %v747
        %v1056 = vunpack.c.h.b16 %v747
        %v1057 = vunpack.c.l.b16 %v748
        %v1058 = vunpack.c.h.b16 %v748
        %v1059 = vunpack.c.l.b16 %v749
        %v1060 = vunpack.c.h.b16 %v749
        %v1061 = vunpack.c.l.b16 %v750
        %v1062 = vunpack.c.h.b16 %v750
        %v1063 = vunpack.c.l.b16 %v751
        %v1064 = vunpack.c.h.b16 %v751
        %v1065 = vunpack.c.l.b16 %v752
        %v1066 = vunpack.c.h.b16 %v752
        %v1067 = vunpack.c.l.b16 %v753
        %v1068 = vunpack.c.h.b16 %v753
        %v1069 = vunpack.c.l.b16 %v754
        %v1070 = vunpack.c.h.b16 %v754
        %v1071 = vunpack.c.l.b16 %v755
        %v1072 = vunpack.c.h.b16 %v755
        %v1073 = vunpack.c.l.b16 %v756
        %v1074 = vunpack.c.h.b16 %v756
        %v1075 = vunpack.c.l.b16 %v757
        %v1076 = vunpack.c.h.b16 %v757
        %v1077 = vunpack.c.l.b16 %v758
        %v1078 = vunpack.c.h.b16 %v758
        %v1079 = vunpack.c.l.b16 %v759
        %v1080 = vunpack.c.h.b16 %v759
        %v1081 = vunpack.c.l.b16 %v760
        %v1082 = vunpack.c.h.b16 %v760
        %v1083 = vunpack.c.l.b16 %v761
        %v1084 = vunpack.c.h.b16 %v761
        %v1085 = vunpack.c.l.b16 %v762
        %v1086 = vunpack.c.h.b16 %v762
        %v1087 = vunpack.c.l.b16 %v763
        %v1088 = vunpack.c.h.b16 %v763
        %v1089 = vunpack.c.l.b16 %v764
        %v1090 = vunpack.c.h.b16 %v764
        %v1091 = vunpack.c.l.b16 %v765
        %v1092 = vunpack.c.h.b16 %v765
        %v1093 = vunpack.c.l.b16 %v766
        %v1094 = vunpack.c.h.b16 %v766
        %v1095 = vunpack.c.l.b16 %v767
        %v1096 = vunpack.c.h.b16 %v767
        %v1097 = vunpack.c.l.b16 %v768
        %v1098 = vunpack.c.h.b16 %v768
        %v1099 = vunpack.c.l.b16 %v769
        %v1100 = vunpack.c.h.b16 %v769
        %v1101 = vunpack.c.l.b16 %v770
        %v1102 = vunpack.c.h.b16 %v770
        %v1103 = vunpack.c.l.b16 %v771
        %v1104 = vunpack.c.h.b16 %v771
        %v1105 = vunpack.c.l.b16 %v772
        %v1106 = vunpack.c.h.b16 %v772
        %v1107 = vunpack.c.l.b16 %v773
        %v1108 = vunpack.c.h.b16 %v773
        %v1109 = vunpack.c.l.b16 %v774
        %v1110 = vunpack.c.h.b16 %v774
        %v1111 = vunpack.c.l.b16 %v775
        %v1112 = vunpack.c.h.b16 %v775
        %v1113 = vunpack.c.l.b16 %v776
        %v1114 = vunpack.c.h.b16 %v776
        %v1115 = vunpack.c.l.b16 %v777
        %v1116 = vunpack.c.h.b16 %v777
        %v1117 = vunpack.c.l.b16 %v778
        %v1118 = vunpack.c.h.b16 %v778
        %v1119 = vunpack.c.l.b16 %v779
        %v1120 = vunpack.c.h.b16 %v779
        %v1121 = vunpack.c.l.b16 %v780
        %v1122 = vunpack.c.h.b16 %v780
        %v1123 = vunpack.c.l.b16 %v781
        %v1124 = vunpack.c.h.b16 %v781
        %v1125 = vunpack.c.l.b16 %v782
        %v1126 = vunpack.c.h.b16 %v782
        %v1127 = vunpack.c.l.b16 %v783
        %v1128 = vunpack.c.h.b16 %v783
        %v1129 = vunpack.c.l.b16 %v784
        %v1130 = vunpack.c.h.b16 %v784
        %v1131 = vunpack.c.l.b16 %v785
        %v1132 = vunpack.c.h.b16 %v785
        %v1133 = vunpack.c.l.b16 %v786
        %v1134 = vunpack.c.h.b16 %v786
        %v1135 = vunpack.c.l.b16 %v787
        %v1136 = vunpack.c.h.b16 %v787
        %v1137 = vunpack.c.l.b16 %v788
        %v1138 = vunpack.c.h.b16 %v788
        %v1139 = vunpack.c.l.b16 %v789
        %v1140 = vunpack.c.h.b16 %v789
        %v1141 = vunpack.c.l.b16 %v790
        %v1142 = vunpack.c.h.b16 %v790
        %v1143 = vunpack.c.l.b16 %v791
        %v1144 = vunpack.c.h.b16 %v791
        %v1145 = vunpack.c.l.b16 %v792
        %v1146 = vunpack.c.h.b16 %v792
        %v1147 = vunpack.c.l.b16 %v793
        %v1148 = vunpack.c.h.b16 %v793
        %v1149 = vunpack.c.l.b16 %v794
        %v1150 = vunpack.c.h.b16 %v794
        %v1151 = vunpack.c.l.b16 %v795
        %v1152 = vunpack.c.h.b16 %v795
        %v1153 = vunpack.c.l.b16 %v796
        %v1154 = vunpack.c.h.b16 %v796
        %v1155 = vunpack.c.l.b16 %v797
        %v1156 = vunpack.c.h.b16 %v797
        %v1157 = vunpack.c.l.b16 %v798
        %v1158 = vunpack.c.h.b16 %v798
        %v1159 = vunpack.c.l.b16 %v799
        %v1160 = vunpack.c.h.b16 %v799
        %v1161 = vunpack.c.l.b16 %v800
        %v1162 = vunpack.c.h.b16 %v800
        %v1163 = vunpack.c.l.b16 %v801
        %v1164 = vunpack.c.h.b16 %v801
        %v1165 = vunpack.c.l.b16 %v802
        %v1166 = vunpack.c.h.b16 %v802
        %v1167 = vunpack.c.l.b16 %v803
        %v1168 = vunpack.c.h.b16 %v803
        %v1169 = vunpack.c.l.b16 %v804
        %v1170 = vunpack.c.h.b16 %v804
        %v1171 = vunpack.c.l.b16 %v805
        %v1172 = vunpack.c.h.b16 %v805
        %v1173 = vunpack.c.l.b16 %v806
        %v1174 = vunpack.c.h.b16 %v806
        %v1175 = vunpack.c.l.b16 %v807
        %v1176 = vunpack.c.h.b16 %v807
        %v1177 = vunpack.c.l.b16 %v808
        %v1178 = vunpack.c.h.b16 %v808
        %v1179 = vunpack.c.l.b16 %v809
        %v1180 = vunpack.c.h.b16 %v809
        %v1181 = vunpack.c.l.b16 %v810
        %v1182 = vunpack.c.h.b16 %v810
        %v1183 = vunpack.c.l.b16 %v811
        %v1184 = vunpack.c.h.b16 %v811
        %v1185 = vunpack.c.l.b16 %v812
        %v1186 = vunpack.c.h.b16 %v812
        %v1187 = vunpack.c.l.b16 %v813
        %v1188 = vunpack.c.h.b16 %v813
        %v1189 = vunpack.c.l.b16 %v814
        %v1190 = vunpack.c.h.b16 %v814
        %v1191 = vunpack.c.l.b16 %v815
        %v1192 = vunpack.c.h.b16 %v815
        %v1193 = vunpack.c.l.b16 %v816
        %v1194 = vunpack.c.h.b16 %v816
        %v1195 = vunpack.c.l.b16 %v817
        %v1196 = vunpack.c.h.b16 %v817
        %v1197 = vunpack.c.l.b16 %v818
        %v1198 = vunpack.c.h.b16 %v818
        %v1199 = vunpack.c.l.b16 %v819
        %v1200 = vunpack.c.h.b16 %v819
        %v1201 = vunpack.c.l.b16 %v820
        %v1202 = vunpack.c.h.b16 %v820
        %v1203 = vunpack.c.l.b16 %v821
        %v1204 = vunpack.c.h.b16 %v821
        %v1205 = vunpack.c.l.b16 %v822
        %v1206 = vunpack.c.h.b16 %v822
        %v1207 = vunpack.c.l.b16 %v823
        %v1208 = vunpack.c.h.b16 %v823
        %v1209 = vunpack.c.l.b16 %v824
        %v1210 = vunpack.c.h.b16 %v824
        %v1211 = vunpack.c.l.b16 %v825
        %v1212 = vunpack.c.h.b16 %v825
        %v1213 = vunpack.c.l.b16 %v826
        %v1214 = vunpack.c.h.b16 %v826
        %v1215 = vunpack.c.l.b16 %v827
        %v1216 = vunpack.c.h.b16 %v827
        %v1217 = vunpack.c.l.b16 %v828
        %v1218 = vunpack.c.h.b16 %v828
        %v1219 = vunpack.c.l.b16 %v829
        %v1220 = vunpack.c.h.b16 %v829
        %v1221 = vunpack.c.l.b16 %v830
        %v1222 = vunpack.c.h.b16 %v830
        %v1223 = vunpack.c.l.b16 %v831
        %v1224 = vunpack.c.h.b16 %v831
        %v1225 = vunpack.c.l.b16 %v832
        %v1226 = vunpack.c.h.b16 %v832
        %v1227 = vunpack.c.l.b16 %v833
        %v1228 = vunpack.c.h.b16 %v833
        %v1229 = vunpack.c.l.b16 %v834
        %v1230 = vunpack.c.h.b16 %v834
        %v1231 = vunpack.c.l.b16 %v835
        %v1232 = vunpack.c.h.b16 %v835
        %v1233 = vunpack.c.l.b16 %v836
        %v1234 = vunpack.c.h.b16 %v836
        %v1235 = vunpack.c.l.b16 %v837
        %v1236 = vunpack.c.h.b16 %v837
        %v1237 = vunpack.c.l.b16 %v838
        %v1238 = vunpack.c.h.b16 %v838
        %v1239 = vunpack.c.l.b16 %v839
        %v1240 = vunpack.c.h.b16 %v839
        %v1241 = vunpack.c.l.b16 %v840
        %v1242 = vunpack.c.h.b16 %v840
        %v1243 = vunpack.c.l.b16 %v841
        %v1244 = vunpack.c.h.b16 %v841
        %v1245 = vunpack.c.l.b16 %v842
        %v1246 = vunpack.c.h.b16 %v842
        %v1247 = vunpack.c.l.b16 %v843
        %v1248 = vunpack.c.h.b16 %v843
        %v1249 = vunpack.c.l.b16 %v844
        %v1250 = vunpack.c.h.b16 %v844
        %v1251 = vunpack.c.l.b16 %v845
        %v1252 = vunpack.c.h.b16 %v845
        %v1253 = vunpack.c.l.b16 %v846
        %v1254 = vunpack.c.h.b16 %v846
        %v1255 = vunpack.c.l.b16 %v847
        %v1256 = vunpack.c.h.b16 %v847
        %v1257 = vunpack.c.l.b16 %v848
        %v1258 = vunpack.c.h.b16 %v848
        %v1259 = vunpack.c.l.b16 %v849
        %v1260 = vunpack.c.h.b16 %v849
        %v1261 = vunpack.c.l.b16 %v850
        %v1262 = vunpack.c.h.b16 %v850
        %v1263 = vunpack.c.l.b16 %v851
        %v1264 = vunpack.c.h.b16 %v851
        %v1265 = vunpack.c.l.b16 %v852
        %v1266 = vunpack.c.h.b16 %v852
        %v1267 = vunpack.c.l.b16 %v853
        %v1268 = vunpack.c.h.b16 %v853
        %v1269 = vunpack.c.l.b16 %v854
        %v1270 = vunpack.c.h.b16 %v854
        %v1271 = vunpack.c.l.b16 %v855
        %v1272 = vunpack.c.h.b16 %v855
        %v1273 = vunpack.c.l.b16 %v856
        %v1274 = vunpack.c.h.b16 %v856
        %v1275 = vunpack.c.l.b16 %v857
        %v1276 = vunpack.c.h.b16 %v857
        %v1277 = vunpack.c.l.b16 %v858
        %v1278 = vunpack.c.h.b16 %v858
        %v1279 = vpack.c.b16 %v1027, %v1023
        %v1280 = vpack.c.b16 %v1028, %v1024
        %v1281 = vpack.c.b16 %v1029, %v1025
        %v1282 = vpack.c.b16 %v1030, %v1026
        %v1283 = vpack.c.b16 %v1035, %v1031
        %v1284 = vpack.c.b16 %v1036, %v1032
        %v1285 = vpack.c.b16 %v1037, %v1033
        %v1286 = vpack.c.b16 %v1038, %v1034
        %v1287 = vpack.c.b16 %v1043, %v1039
        %v1288 = vpack.c.b16 %v1044, %v1040
        %v1289 = vpack.c.b16 %v1045, %v1041
        %v1290 = vpack.c.b16 %v1046, %v1042
        %v1291 = vpack.c.b16 %v1051, %v1047
        %v1292 = vpack.c.b16 %v1052, %v1048
        %v1293 = vpack.c.b16 %v1053, %v1049
        %v1294 = vpack.c.b16 %v1054, %v1050
        %v1295 = vpack.c.b16 %v1059, %v1055
        %v1296 = vpack.c.b16 %v1060, %v1056
        %v1297 = vpack.c.b16 %v1061, %v1057
        %v1298 = vpack.c.b16 %v1062, %v1058
        %v1299 = vpack.c.b16 %v1067, %v1063
        %v1300 = vpack.c.b16 %v1068, %v1064
        %v1301 = vpack.c.b16 %v1069, %v1065
        %v1302 = vpack.c.b16 %v1070, %v1066
        %v1303 = vpack.c.b16 %v1075, %v1071
        %v1304 = vpack.c.b16 %v1076, %v1072
        %v1305 = vpack.c.b16 %v1077, %v1073
        %v1306 = vpack.c.b16 %v1078, %v1074
        %v1307 = vpack.c.b16 %v1083, %v1079
        %v1308 = vpack.c.b16 %v1084, %v1080
        %v1309 = vpack.c.b16 %v1085, %v1081
        %v1310 = vpack.c.b16 %v1086, %v1082
        %v1311 = vpack.c.b16 %v1091, %v1087
        %v1312 = vpack.c.b16 %v1092, %v1088
        %v1313 = vpack.c.b16 %v1093, %v1089
        %v1314 = vpack.c.b16 %v1094, %v1090
        %v1315 = vpack.c.b16 %v1099, %v1095
        %v1316 = vpack.c.b16 %v1100, %v1096
        %v1317 = vpack.c.b16 %v1101, %v1097
        %v1318 = vpack.c.b16 %v1102, %v1098
        %v1319 = vpack.c.b16 %v1107, %v1103
        %v1320 = vpack.c.b16 %v1108, %v1104
        %v1321 = vpack.c.b16 %v1109, %v1105
        %v1322 = vpack.c.b16 %v1110, %v1106
        %v1323 = vpack.c.b16 %v1115, %v1111
        %v1324 = vpack.c.b16 %v1116, %v1112
        %v1325 = vpack.c.b16 %v1117, %v1113
        %v1326 = vpack.c.b16 %v1118, %v1114
        %v1327 = vpack.c.b16 %v1123, %v1119
        %v1328 = vpack.c.b16 %v1124, %v1120
        %v1329 = vpack.c.b16 %v1125, %v1121
        %v1330 = vpack.c.b16 %v1126, %v1122
        %v1331 = vpack.c.b16 %v1131, %v1127
        %v1332 = vpack.c.b16 %v1132, %v1128
        %v1333 = vpack.c.b16 %v1133, %v1129
        %v1334 = vpack.c.b16 %v1134, %v1130
        %v1335 = vpack.c.b16 %v1139, %v1135
        %v1336 = vpack.c.b16 %v1140, %v1136
        %v1337 = vpack.c.b16 %v1141, %v1137
        %v1338 = vpack.c.b16 %v1142, %v1138
        %v1339 = vpack.c.b16 %v1147, %v1143
        %v1340 = vpack.c.b16 %v1148, %v1144
        %v1341 = vpack.c.b16 %v1149, %v1145
        %v1342 = vpack.c.b16 %v1150, %v1146
        %v1343 = vpack.c.b16 %v1155, %v1151
        %v1344 = vpack.c.b16 %v1156, %v1152
        %v1345 = vpack.c.b16 %v1157, %v1153
        %v1346 = vpack.c.b16 %v1158, %v1154
        %v1347 = vpack.c.b16 %v1163, %v1159
        %v1348 = vpack.c.b16 %v1164, %v1160
        %v1349 = vpack.c.b16 %v1165, %v1161
        %v1350 = vpack.c.b16 %v1166, %v1162
        %v1351 = vpack.c.b16 %v1171, %v1167
        %v1352 = vpack.c.b16 %v1172, %v1168
        %v1353 = vpack.c.b16 %v1173, %v1169
        %v1354 = vpack.c.b16 %v1174, %v1170
        %v1355 = vpack.c.b16 %v1179, %v1175
        %v1356 = vpack.c.b16 %v1180, %v1176
        %v1357 = vpack.c.b16 %v1181, %v1177
        %v1358 = vpack.c.b16 %v1182, %v1178
        %v1359 = vpack.c.b16 %v1187, %v1183
        %v1360 = vpack.c.b16 %v1188, %v1184
        %v1361 = vpack.c.b16 %v1189, %v1185
        %v1362 = vpack.c.b16 %v1190, %v1186
        %v1363 = vpack.c.b16 %v1195, %v1191
        %v1364 = vpack.c.b16 %v1196, %v1192
        %v1365 = vpack.c.b16 %v1197, %v1193
        %v1366 = vpack.c.b16 %v1198, %v1194
        %v1367 = vpack.c.b16 %v1203, %v1199
        %v1368 = vpack.c.b16 %v1204, %v1200
        %v1369 = vpack.c.b16 %v1205, %v1201
        %v1370 = vpack.c.b16 %v1206, %v1202
        %v1371 = vpack.c.b16 %v1211, %v1207
        %v1372 = vpack.c.b16 %v1212, %v1208
        %v1373 = vpack.c.b16 %v1213, %v1209
        %v1374 = vpack.c.b16 %v1214, %v1210
        %v1375 = vpack.c.b16 %v1219, %v1215
        %v1376 = vpack.c.b16 %v1220, %v1216
        %v1377 = vpack.c.b16 %v1221, %v1217
        %v1378 = vpack.c.b16 %v1222, %v1218
        %v1379 = vpack.c.b16 %v1227, %v1223
        %v1380 = vpack.c.b16 %v1228, %v1224
        %v1381 = vpack.c.b16 %v1229, %v1225
        %v1382 = vpack.c.b16 %v1230, %v1226
        %v1383 = vpack.c.b16 %v1235, %v1231
        %v1384 = vpack.c.b16 %v1236, %v1232
        %v1385 = vpack.c.b16 %v1237, %v1233
        %v1386 = vpack.c.b16 %v1238, %v1234
        %v1387 = vpack.c.b16 %v1243, %v1239
        %v1388 = vpack.c.b16 %v1244, %v1240
        %v1389 = vpack.c.b16 %v1245, %v1241
        %v1390 = vpack.c.b16 %v1246, %v1242
        %v1391 = vpack.c.b16 %v1251, %v1247
        %v1392 = vpack.c.b16 %v1252, %v1248
        %v1393 = vpack.c.b16 %v1253, %v1249
        %v1394 = vpack.c.b16 %v1254, %v1250
        %v1395 = vpack.c.b16 %v1259, %v1255
        %v1396 = vpack.c.b16 %v1260, %v1256
        %v1397 = vpack.c.b16 %v1261, %v1257
        %v1398 = vpack.c.b16 %v1262, %v1258
        %v1399 = vpack.c.b16 %v1267, %v1263
        %v1400 = vpack.c.b16 %v1268, %v1264
        %v1401 = vpack.c.b16 %v1269, %v1265
        %v1402 = vpack.c.b16 %v1270, %v1266
        %v1403 = vpack.c.b16 %v1275, %v1271
        %v1404 = vpack.c.b16 %v1276, %v1272
        %v1405 = vpack.c.b16 %v1277, %v1273
        %v1406 = vpack.c.b16 %v1278, %v1274
        %1535 = vmatprep.subr.bf16.mxu0 %v1308
        %1536 = vmatpush1.bf16.msra.mxu0 %v1307
        %1537 = vmatprep.subr.bf16.mxu0 %v1304
        %1538 = vmatpush1.bf16.msra.mxu0 %v1303
        %1539 = vmatprep.subr.bf16.mxu0 %v1300
        %1540 = vmatpush1.bf16.msra.mxu0 %v1299
        %1541 = vmatprep.subr.bf16.mxu0 %v1296
        %1542 = vmatpush1.bf16.msra.mxu0 %v1295
        %1543 = vmatprep.subr.bf16.mxu0 %v1292
        %1544 = vmatpush1.bf16.msra.mxu0 %v1291
        %1545 = vmatprep.subr.bf16.mxu0 %v1288
        %1546 = vmatpush1.bf16.msra.mxu0 %v1287
        %1547 = vmatprep.subr.bf16.mxu0 %v1284
        %1548 = vmatpush1.bf16.msra.mxu0 %v1283
        %1549 = vmatprep.subr.bf16.mxu0 %v1280
        %1550 = vmatpush1.bf16.msra.mxu0 %v1279
        %1551 = vmatprep.subr.bf16.mxu0 %v1340
        %1552 = vmatpush2.bf16.msra.mxu0 %v1339
        %1553 = vmatprep.subr.bf16.mxu0 %v1336
        %1554 = vmatpush2.bf16.msra.mxu0 %v1335
        %1555 = vmatprep.subr.bf16.mxu0 %v1332
        %1556 = vmatpush2.bf16.msra.mxu0 %v1331
        %1557 = vmatprep.subr.bf16.mxu0 %v1328
        %1558 = vmatpush2.bf16.msra.mxu0 %v1327
        %1559 = vmatprep.subr.bf16.mxu0 %v1324
        %1560 = vmatpush2.bf16.msra.mxu0 %v1323
        %1561 = vmatprep.subr.bf16.mxu0 %v1320
        %1562 = vmatpush2.bf16.msra.mxu0 %v1319
        %1563 = vmatprep.subr.bf16.mxu0 %v1316
        %1564 = vmatpush2.bf16.msra.mxu0 %v1315
        %1565 = vmatprep.subr.bf16.mxu0 %v1312
        %1566 = vmatpush2.bf16.msra.mxu0 %v1311
        %1567 = vmatprep.mubr.bf16.mxu0 %v888
        %1568 = vmatmul.mubr.bf16.gmra.mxu0 %v887
        %v1569 = vpop.f32.mrf.mxu0
        %v1570 = vadd.f32 %v864, %v1569
        %v1571 = vpop.f32.mrf.mxu0
        %v1572 = vadd.f32 %v868, %v1571
        %v1573 = vpop.f32.mrf.mxu0
        %v1574 = vpop.f32.mrf.mxu0
        %1575 = vdwg.mxu0
        %1576 = vmatprep.subr.bf16.mxu0 %v1372
        %1577 = vmatpush1.bf16.msra.mxu0 %v1371
        %1578 = vmatprep.subr.bf16.mxu0 %v1368
        %1579 = vmatpush1.bf16.msra.mxu0 %v1367
        %1580 = vmatprep.subr.bf16.mxu0 %v1364
        %1581 = vmatpush1.bf16.msra.mxu0 %v1363
        %1582 = vmatprep.subr.bf16.mxu0 %v1360
        %1583 = vmatpush1.bf16.msra.mxu0 %v1359
        %1584 = vmatprep.subr.bf16.mxu0 %v1356
        %1585 = vmatpush1.bf16.msra.mxu0 %v1355
        %1586 = vmatprep.subr.bf16.mxu0 %v1352
        %1587 = vmatpush1.bf16.msra.mxu0 %v1351
        %1588 = vmatprep.subr.bf16.mxu0 %v1348
        %1589 = vmatpush1.bf16.msra.mxu0 %v1347
        %1590 = vmatprep.subr.bf16.mxu0 %v1344
        %1591 = vmatpush1.bf16.msra.mxu0 %v1343
        %1592 = vmatprep.subr.bf16.mxu0 %v1404
        %1593 = vmatpush2.bf16.msra.mxu0 %v1403
        %1594 = vmatprep.subr.bf16.mxu0 %v1400
        %1595 = vmatpush2.bf16.msra.mxu0 %v1399
        %1596 = vmatprep.subr.bf16.mxu0 %v1396
        %1597 = vmatpush2.bf16.msra.mxu0 %v1395
        %1598 = vmatprep.subr.bf16.mxu0 %v1392
        %1599 = vmatpush2.bf16.msra.mxu0 %v1391
        %1600 = vmatprep.subr.bf16.mxu0 %v1388
        %1601 = vmatpush2.bf16.msra.mxu0 %v1387
        %1602 = vmatprep.subr.bf16.mxu0 %v1384
        %1603 = vmatpush2.bf16.msra.mxu0 %v1383
        %1604 = vmatprep.subr.bf16.mxu0 %v1380
        %1605 = vmatpush2.bf16.msra.mxu0 %v1379
        %1606 = vmatprep.subr.bf16.mxu0 %v1376
        %1607 = vmatpush2.bf16.msra.mxu0 %v1375
        %1608 = vmatprep.mubr.bf16.mxu0 %v890
        %1609 = vmatmul.mubr.bf16.gmra.mxu0 %v889
        %v1610 = vpop.f32.mrf.mxu0
        %v1611 = vadd.f32 %v1570, %v1610
        %v1612 = vpop.f32.mrf.mxu0
        %v1613 = vadd.f32 %v1572, %v1612
        %v1614 = vpop.f32.mrf.mxu0
        %v1615 = vpop.f32.mrf.mxu0
        %1616 = vdwg.mxu0
        %1617 = vmatprep.subr.bf16.mxu0 %v1310
        %1618 = vmatpush1.bf16.msra.mxu0 %v1309
        %1619 = vmatprep.subr.bf16.mxu0 %v1306
        %1620 = vmatpush1.bf16.msra.mxu0 %v1305
        %1621 = vmatprep.subr.bf16.mxu0 %v1302
        %1622 = vmatpush1.bf16.msra.mxu0 %v1301
        %1623 = vmatprep.subr.bf16.mxu0 %v1298
        %1624 = vmatpush1.bf16.msra.mxu0 %v1297
        %1625 = vmatprep.subr.bf16.mxu0 %v1294
        %1626 = vmatpush1.bf16.msra.mxu0 %v1293
        %1627 = vmatprep.subr.bf16.mxu0 %v1290
        %1628 = vmatpush1.bf16.msra.mxu0 %v1289
        %1629 = vmatprep.subr.bf16.mxu0 %v1286
        %1630 = vmatpush1.bf16.msra.mxu0 %v1285
        %1631 = vmatprep.subr.bf16.mxu0 %v1282
        %1632 = vmatpush1.bf16.msra.mxu0 %v1281
        %1633 = vmatprep.subr.bf16.mxu0 %v1342
        %1634 = vmatpush2.bf16.msra.mxu0 %v1341
        %1635 = vmatprep.subr.bf16.mxu0 %v1338
        %1636 = vmatpush2.bf16.msra.mxu0 %v1337
        %1637 = vmatprep.subr.bf16.mxu0 %v1334
        %1638 = vmatpush2.bf16.msra.mxu0 %v1333
        %1639 = vmatprep.subr.bf16.mxu0 %v1330
        %1640 = vmatpush2.bf16.msra.mxu0 %v1329
        %1641 = vmatprep.subr.bf16.mxu0 %v1326
        %1642 = vmatpush2.bf16.msra.mxu0 %v1325
        %1643 = vmatprep.subr.bf16.mxu0 %v1322
        %1644 = vmatpush2.bf16.msra.mxu0 %v1321
        %1645 = vmatprep.subr.bf16.mxu0 %v1318
        %1646 = vmatpush2.bf16.msra.mxu0 %v1317
        %1647 = vmatprep.subr.bf16.mxu0 %v1314
        %1648 = vmatpush2.bf16.msra.mxu0 %v1313
        %1649 = vmatprep.mubr.bf16.mxu0 %v888
        %1650 = vmatmul.mubr.bf16.gmra.mxu0 %v887
        %v1651 = vpop.f32.mrf.mxu0
        %v1652 = vadd.f32 %v872, %v1651
        %v1653 = vpop.f32.mrf.mxu0
        %v1654 = vadd.f32 %v876, %v1653
        %v1655 = vpop.f32.mrf.mxu0
        %v1656 = vpop.f32.mrf.mxu0
        %1657 = vdwg.mxu0
        %1658 = vmatprep.subr.bf16.mxu0 %v1374
        %1659 = vmatpush1.bf16.msra.mxu0 %v1373
        %1660 = vmatprep.subr.bf16.mxu0 %v1370
        %1661 = vmatpush1.bf16.msra.mxu0 %v1369
        %1662 = vmatprep.subr.bf16.mxu0 %v1366
        %1663 = vmatpush1.bf16.msra.mxu0 %v1365
        %1664 = vmatprep.subr.bf16.mxu0 %v1362
        %1665 = vmatpush1.bf16.msra.mxu0 %v1361
        %1666 = vmatprep.subr.bf16.mxu0 %v1358
        %1667 = vmatpush1.bf16.msra.mxu0 %v1357
        %1668 = vmatprep.subr.bf16.mxu0 %v1354
        %1669 = vmatpush1.bf16.msra.mxu0 %v1353
        %1670 = vmatprep.subr.bf16.mxu0 %v1350
        %1671 = vmatpush1.bf16.msra.mxu0 %v1349
        %1672 = vmatprep.subr.bf16.mxu0 %v1346
        %1673 = vmatpush1.bf16.msra.mxu0 %v1345
        %1674 = vmatprep.subr.bf16.mxu0 %v1406
        %1675 = vmatpush2.bf16.msra.mxu0 %v1405
        %1676 = vmatprep.subr.bf16.mxu0 %v1402
        %1677 = vmatpush2.bf16.msra.mxu0 %v1401
        %1678 = vmatprep.subr.bf16.mxu0 %v1398
        %1679 = vmatpush2.bf16.msra.mxu0 %v1397
        %1680 = vmatprep.subr.bf16.mxu0 %v1394
        %1681 = vmatpush2.bf16.msra.mxu0 %v1393
        %1682 = vmatprep.subr.bf16.mxu0 %v1390
        %1683 = vmatpush2.bf16.msra.mxu0 %v1389
        %1684 = vmatprep.subr.bf16.mxu0 %v1386
        %1685 = vmatpush2.bf16.msra.mxu0 %v1385
        %1686 = vmatprep.subr.bf16.mxu0 %v1382
        %1687 = vmatpush2.bf16.msra.mxu0 %v1381
        %1688 = vmatprep.subr.bf16.mxu0 %v1378
        %1689 = vmatpush2.bf16.msra.mxu0 %v1377
        %1690 = vmatprep.mubr.bf16.mxu0 %v890
        %1691 = vmatmul.mubr.bf16.gmra.mxu0 %v889
        %v1692 = vpop.f32.mrf.mxu0
        %v1693 = vadd.f32 %v1652, %v1692
        %v1694 = vpop.f32.mrf.mxu0
        %v1695 = vadd.f32 %v1654, %v1694
        %v1696 = vpop.f32.mrf.mxu0
        %v1697 = vpop.f32.mrf.mxu0
        %1698 = vdwg.mxu0
        %v1699 = vmax.f32 %v1611, 0.0
        %v1700 = vmax.f32 %v1613, 0.0
        %v1701 = vmax.f32 %v1693, 0.0
        %v1702 = vmax.f32 %v1695, 0.0
        %v1703 = vadd.f32 %v1699, %v1700
        %v1704 = vadd.f32 %v1703, %v1701
        %v1705 = vadd.f32 %v1704, %v1702
        %1706 = vadd.xlane.f32.xlu0 %v1705
        %v1707 = vpop.xlane.xlu0 %1706
        %v1708 = vrcp.pop 512.0
        %v1709 = vmul.f32 %v1707, %v1708
        %v1710 = vsub.f32 %v1699, %v1709
        %v1711 = vsub.f32 %v1700, %v1709
        %v1712 = vsub.f32 %v1701, %v1709
        %v1713 = vsub.f32 %v1702, %v1709
        %v1714 = vmul.f32 %v1710, %v1710
        %v1715 = vmul.f32 %v1711, %v1711
        %v1716 = vmul.f32 %v1712, %v1712
        %v1717 = vmul.f32 %v1713, %v1713
        %v1718 = vadd.f32 %v1714, %v1715
        %v1719 = vadd.f32 %v1718, %v1716
        %v1720 = vadd.f32 %v1719, %v1717
        %1721 = vadd.xlane.f32.xlu0 %v1720
        %v1722 = vpop.xlane.xlu0 %1721
        %v1723 = vmul.f32 %v1722, %v1708
        %v1724 = vadd.f32 %v1723, 1e-05
        %v1725 = vrsqrt.pop %v1724
        %v1726 = vmul.f32 %v1710, %v1725
        %v1727 = vmul.f32 %v1711, %v1725
        %v1728 = vmul.f32 %v1712, %v1725
        %v1729 = vmul.f32 %v1713, %v1725
        %v1730 = vld [vmem:[%s599] ss:$2 sm:$0xf]
        %v1732 = vlaneseq
        %v1733 = vshrl.u32 %v1732, 7
        %v1734 = vsub.s32 0, %v1733
        %v1735 = vrot.slane %v1730, %v1734
        %v1736 = vlaneseq
        %v1737 = vshrl.u32 %v1736, 7
        %v1738 = vsub.s32 1, %v1737
        %v1739 = vrot.slane %v1730, %v1738
        %v1740 = vlaneseq
        %v1741 = vshrl.u32 %v1740, 7
        %v1742 = vsub.s32 2, %v1741
        %v1743 = vrot.slane %v1730, %v1742
        %v1744 = vlaneseq
        %v1745 = vshrl.u32 %v1744, 7
        %v1746 = vsub.s32 3, %v1745
        %v1747 = vrot.slane %v1730, %v1746
        %v1752 = vmul.f32 %v1726, %v1735
        %v1753 = vmul.f32 %v1727, %v1739
        %v1754 = vmul.f32 %v1728, %v1743
        %v1755 = vmul.f32 %v1729, %v1747
        %v1756 = vld [vmem:[%s608] ss:$2 sm:$0xf]
        %v1758 = vlaneseq
        %v1759 = vshrl.u32 %v1758, 7
        %v1760 = vsub.s32 0, %v1759
        %v1761 = vrot.slane %v1756, %v1760
        %v1762 = vlaneseq
        %v1763 = vshrl.u32 %v1762, 7
        %v1764 = vsub.s32 1, %v1763
        %v1765 = vrot.slane %v1756, %v1764
        %v1766 = vlaneseq
        %v1767 = vshrl.u32 %v1766, 7
        %v1768 = vsub.s32 2, %v1767
        %v1769 = vrot.slane %v1756, %v1768
        %v1770 = vlaneseq
        %v1771 = vshrl.u32 %v1770, 7
        %v1772 = vsub.s32 3, %v1771
        %v1773 = vrot.slane %v1756, %v1772
        %v1778 = vadd.f32 %v1752, %v1761
        %v1779 = vadd.f32 %v1753, %v1765
        %v1780 = vadd.f32 %v1754, %v1769
        %v1781 = vadd.f32 %v1755, %v1773
        %v1782 = vpack.c.bf16 %v1778, %v1778
        %v1783 = vpack.c.bf16 %v1779, %v1779
        %v1784 = vpack.c.bf16 %v1780, %v1780
        %v1785 = vpack.c.bf16 %v1781, %v1781
        %v1786 = vld [vmem:[%s581] sm:$0xf]
        %v1787 = vld [vmem:[%s581 + $0x4] sm:$0xf]
        %v1788 = vld [vmem:[%s581 + $0x8] sm:$0xf]
        %v1789 = vld [vmem:[%s581 + $0xc] sm:$0xf]
        %v1790 = vld [vmem:[%s581 + $0x10] sm:$0xf]
        %v1791 = vld [vmem:[%s581 + $0x14] sm:$0xf]
        %v1792 = vld [vmem:[%s581 + $0x18] sm:$0xf]
        %v1793 = vld [vmem:[%s581 + $0x1c] sm:$0xf]
        %v1794 = vld [vmem:[%s581 + $0x20] sm:$0xf]
        %v1795 = vld [vmem:[%s581 + $0x24] sm:$0xf]
        %v1796 = vld [vmem:[%s581 + $0x28] sm:$0xf]
        %v1797 = vld [vmem:[%s581 + $0x2c] sm:$0xf]
        %v1798 = vld [vmem:[%s581 + $0x30] sm:$0xf]
        %v1799 = vld [vmem:[%s581 + $0x34] sm:$0xf]
        %v1800 = vld [vmem:[%s581 + $0x38] sm:$0xf]
        %v1801 = vld [vmem:[%s581 + $0x3c] sm:$0xf]
        %v1802 = vld [vmem:[%s581 + $0x40] sm:$0xf]
        %v1803 = vld [vmem:[%s581 + $0x44] sm:$0xf]
        %v1804 = vld [vmem:[%s581 + $0x48] sm:$0xf]
        %v1805 = vld [vmem:[%s581 + $0x4c] sm:$0xf]
        %v1806 = vld [vmem:[%s581 + $0x50] sm:$0xf]
        %v1807 = vld [vmem:[%s581 + $0x54] sm:$0xf]
        %v1808 = vld [vmem:[%s581 + $0x58] sm:$0xf]
        %v1809 = vld [vmem:[%s581 + $0x5c] sm:$0xf]
        %v1810 = vld [vmem:[%s581 + $0x60] sm:$0xf]
        %v1811 = vld [vmem:[%s581 + $0x64] sm:$0xf]
        %v1812 = vld [vmem:[%s581 + $0x68] sm:$0xf]
        %v1813 = vld [vmem:[%s581 + $0x6c] sm:$0xf]
        %v1814 = vld [vmem:[%s581 + $0x70] sm:$0xf]
        %v1815 = vld [vmem:[%s581 + $0x74] sm:$0xf]
        %v1816 = vld [vmem:[%s581 + $0x78] sm:$0xf]
        %v1817 = vld [vmem:[%s581 + $0x7c] sm:$0xf]
        %v1818 = vld [vmem:[%s581 + $0x80] sm:$0xf]
        %v1819 = vld [vmem:[%s581 + $0x84] sm:$0xf]
        %v1820 = vld [vmem:[%s581 + $0x88] sm:$0xf]
        %v1821 = vld [vmem:[%s581 + $0x8c] sm:$0xf]
        %v1822 = vld [vmem:[%s581 + $0x90] sm:$0xf]
        %v1823 = vld [vmem:[%s581 + $0x94] sm:$0xf]
        %v1824 = vld [vmem:[%s581 + $0x98] sm:$0xf]
        %v1825 = vld [vmem:[%s581 + $0x9c] sm:$0xf]
        %v1826 = vld [vmem:[%s581 + $0xa0] sm:$0xf]
        %v1827 = vld [vmem:[%s581 + $0xa4] sm:$0xf]
        %v1828 = vld [vmem:[%s581 + $0xa8] sm:$0xf]
        %v1829 = vld [vmem:[%s581 + $0xac] sm:$0xf]
        %v1830 = vld [vmem:[%s581 + $0xb0] sm:$0xf]
        %v1831 = vld [vmem:[%s581 + $0xb4] sm:$0xf]
        %v1832 = vld [vmem:[%s581 + $0xb8] sm:$0xf]
        %v1833 = vld [vmem:[%s581 + $0xbc] sm:$0xf]
        %v1834 = vld [vmem:[%s581 + $0xc0] sm:$0xf]
        %v1835 = vld [vmem:[%s581 + $0xc4] sm:$0xf]
        %v1836 = vld [vmem:[%s581 + $0xc8] sm:$0xf]
        %v1837 = vld [vmem:[%s581 + $0xcc] sm:$0xf]
        %v1838 = vld [vmem:[%s581 + $0xd0] sm:$0xf]
        %v1839 = vld [vmem:[%s581 + $0xd4] sm:$0xf]
        %v1840 = vld [vmem:[%s581 + $0xd8] sm:$0xf]
        %v1841 = vld [vmem:[%s581 + $0xdc] sm:$0xf]
        %v1842 = vld [vmem:[%s581 + $0xe0] sm:$0xf]
        %v1843 = vld [vmem:[%s581 + $0xe4] sm:$0xf]
        %v1844 = vld [vmem:[%s581 + $0xe8] sm:$0xf]
        %v1845 = vld [vmem:[%s581 + $0xec] sm:$0xf]
        %v1846 = vld [vmem:[%s581 + $0xf0] sm:$0xf]
        %v1847 = vld [vmem:[%s581 + $0xf4] sm:$0xf]
        %v1848 = vld [vmem:[%s581 + $0xf8] sm:$0xf]
        %v1849 = vld [vmem:[%s581 + $0xfc] sm:$0xf]
        %v1850 = vld [vmem:[%s617] sm:$0x1]
        %v1851 = vlaneseq
        %v1852 = vshrl.u32 %v1851, 7
        %v1853 = vsub.s32 0, %v1852
        %v1854 = vrot.slane %v1850, %v1853
        %v1919 = vunpack.c.l.b16 %v1786
        %v1920 = vunpack.c.l.b16 %v1787
        %v1921 = vunpack.c.l.b16 %v1788
        %v1922 = vunpack.c.l.b16 %v1789
        %v1923 = vunpack.c.l.b16 %v1790
        %v1924 = vunpack.c.l.b16 %v1791
        %v1925 = vunpack.c.l.b16 %v1792
        %v1926 = vunpack.c.l.b16 %v1793
        %v1927 = vunpack.c.l.b16 %v1794
        %v1928 = vunpack.c.l.b16 %v1795
        %v1929 = vunpack.c.l.b16 %v1796
        %v1930 = vunpack.c.l.b16 %v1797
        %v1931 = vunpack.c.l.b16 %v1798
        %v1932 = vunpack.c.l.b16 %v1799
        %v1933 = vunpack.c.l.b16 %v1800
        %v1934 = vunpack.c.l.b16 %v1801
        %v1935 = vunpack.c.l.b16 %v1802
        %v1936 = vunpack.c.l.b16 %v1803
        %v1937 = vunpack.c.l.b16 %v1804
        %v1938 = vunpack.c.l.b16 %v1805
        %v1939 = vunpack.c.l.b16 %v1806
        %v1940 = vunpack.c.l.b16 %v1807
        %v1941 = vunpack.c.l.b16 %v1808
        %v1942 = vunpack.c.l.b16 %v1809
        %v1943 = vunpack.c.l.b16 %v1810
        %v1944 = vunpack.c.l.b16 %v1811
        %v1945 = vunpack.c.l.b16 %v1812
        %v1946 = vunpack.c.l.b16 %v1813
        %v1947 = vunpack.c.l.b16 %v1814
        %v1948 = vunpack.c.l.b16 %v1815
        %v1949 = vunpack.c.l.b16 %v1816
        %v1950 = vunpack.c.l.b16 %v1817
        %v1951 = vunpack.c.l.b16 %v1818
        %v1952 = vunpack.c.l.b16 %v1819
        %v1953 = vunpack.c.l.b16 %v1820
        %v1954 = vunpack.c.l.b16 %v1821
        %v1955 = vunpack.c.l.b16 %v1822
        %v1956 = vunpack.c.l.b16 %v1823
        %v1957 = vunpack.c.l.b16 %v1824
        %v1958 = vunpack.c.l.b16 %v1825
        %v1959 = vunpack.c.l.b16 %v1826
        %v1960 = vunpack.c.l.b16 %v1827
        %v1961 = vunpack.c.l.b16 %v1828
        %v1962 = vunpack.c.l.b16 %v1829
        %v1963 = vunpack.c.l.b16 %v1830
        %v1964 = vunpack.c.l.b16 %v1831
        %v1965 = vunpack.c.l.b16 %v1832
        %v1966 = vunpack.c.l.b16 %v1833
        %v1967 = vunpack.c.l.b16 %v1834
        %v1968 = vunpack.c.l.b16 %v1835
        %v1969 = vunpack.c.l.b16 %v1836
        %v1970 = vunpack.c.l.b16 %v1837
        %v1971 = vunpack.c.l.b16 %v1838
        %v1972 = vunpack.c.l.b16 %v1839
        %v1973 = vunpack.c.l.b16 %v1840
        %v1974 = vunpack.c.l.b16 %v1841
        %v1975 = vunpack.c.l.b16 %v1842
        %v1976 = vunpack.c.l.b16 %v1843
        %v1977 = vunpack.c.l.b16 %v1844
        %v1978 = vunpack.c.l.b16 %v1845
        %v1979 = vunpack.c.l.b16 %v1846
        %v1980 = vunpack.c.l.b16 %v1847
        %v1981 = vunpack.c.l.b16 %v1848
        %v1982 = vunpack.c.l.b16 %v1849
        %v1983 = vpack.c.b16 %v1920, %v1919
        %v1984 = vpack.c.b16 %v1922, %v1921
        %v1985 = vpack.c.b16 %v1924, %v1923
        %v1986 = vpack.c.b16 %v1926, %v1925
        %v1987 = vpack.c.b16 %v1928, %v1927
        %v1988 = vpack.c.b16 %v1930, %v1929
        %v1989 = vpack.c.b16 %v1932, %v1931
        %v1990 = vpack.c.b16 %v1934, %v1933
        %v1991 = vpack.c.b16 %v1936, %v1935
        %v1992 = vpack.c.b16 %v1938, %v1937
        %v1993 = vpack.c.b16 %v1940, %v1939
        %v1994 = vpack.c.b16 %v1942, %v1941
        %v1995 = vpack.c.b16 %v1944, %v1943
        %v1996 = vpack.c.b16 %v1946, %v1945
        %v1997 = vpack.c.b16 %v1948, %v1947
        %v1998 = vpack.c.b16 %v1950, %v1949
        %v1999 = vpack.c.b16 %v1952, %v1951
        %v2000 = vpack.c.b16 %v1954, %v1953
        %v2001 = vpack.c.b16 %v1956, %v1955
        %v2002 = vpack.c.b16 %v1958, %v1957
        %v2003 = vpack.c.b16 %v1960, %v1959
        %v2004 = vpack.c.b16 %v1962, %v1961
        %v2005 = vpack.c.b16 %v1964, %v1963
        %v2006 = vpack.c.b16 %v1966, %v1965
        %v2007 = vpack.c.b16 %v1968, %v1967
        %v2008 = vpack.c.b16 %v1970, %v1969
        %v2009 = vpack.c.b16 %v1972, %v1971
        %v2010 = vpack.c.b16 %v1974, %v1973
        %v2011 = vpack.c.b16 %v1976, %v1975
        %v2012 = vpack.c.b16 %v1978, %v1977
        %v2013 = vpack.c.b16 %v1980, %v1979
        %v2014 = vpack.c.b16 %v1982, %v1981
        %2047 = vmatprep.subr.bf16.mxu0 0
        %2048 = vmatpush1.bf16.msra.mxu0 %v1990
        %2049 = vmatprep.subr.bf16.mxu0 0
        %2050 = vmatpush1.bf16.msra.mxu0 %v1989
        %2051 = vmatprep.subr.bf16.mxu0 0
        %2052 = vmatpush1.bf16.msra.mxu0 %v1988
        %2053 = vmatprep.subr.bf16.mxu0 0
        %2054 = vmatpush1.bf16.msra.mxu0 %v1987
        %2055 = vmatprep.subr.bf16.mxu0 0
        %2056 = vmatpush1.bf16.msra.mxu0 %v1986
        %2057 = vmatprep.subr.bf16.mxu0 0
        %2058 = vmatpush1.bf16.msra.mxu0 %v1985
        %2059 = vmatprep.subr.bf16.mxu0 0
        %2060 = vmatpush1.bf16.msra.mxu0 %v1984
        %2061 = vmatprep.subr.bf16.mxu0 0
        %2062 = vmatpush1.bf16.msra.mxu0 %v1983
        %2063 = vmatprep.subr.bf16.mxu0 0
        %2064 = vmatpush2.bf16.msra.mxu0 %v1998
        %2065 = vmatprep.subr.bf16.mxu0 0
        %2066 = vmatpush2.bf16.msra.mxu0 %v1997
        %2067 = vmatprep.subr.bf16.mxu0 0
        %2068 = vmatpush2.bf16.msra.mxu0 %v1996
        %2069 = vmatprep.subr.bf16.mxu0 0
        %2070 = vmatpush2.bf16.msra.mxu0 %v1995
        %2071 = vmatprep.subr.bf16.mxu0 0
        %2072 = vmatpush2.bf16.msra.mxu0 %v1994
        %2073 = vmatprep.subr.bf16.mxu0 0
        %2074 = vmatpush2.bf16.msra.mxu0 %v1993
        %2075 = vmatprep.subr.bf16.mxu0 0
        %2076 = vmatpush2.bf16.msra.mxu0 %v1992
        %2077 = vmatprep.subr.bf16.mxu0 0
        %2078 = vmatpush2.bf16.msra.mxu0 %v1991
        %2079 = vmatprep.mubr.bf16.mxu0 %v1783
        %2080 = vmatmul.mubr.bf16.gmra.mxu0 %v1782
        %v2081 = vpop.f32.mrf.mxu0
        %v2082 = vadd.f32 %v1854, %v2081
        %v2083 = vpop.f32.mrf.mxu0
        %v2084 = vpop.f32.mrf.mxu0
        %v2085 = vpop.f32.mrf.mxu0
        %2086 = vdwg.mxu0
        %2087 = vmatprep.subr.bf16.mxu0 0
        %2088 = vmatpush1.bf16.msra.mxu0 %v2006
        %2089 = vmatprep.subr.bf16.mxu0 0
        %2090 = vmatpush1.bf16.msra.mxu0 %v2005
        %2091 = vmatprep.subr.bf16.mxu0 0
        %2092 = vmatpush1.bf16.msra.mxu0 %v2004
        %2093 = vmatprep.subr.bf16.mxu0 0
        %2094 = vmatpush1.bf16.msra.mxu0 %v2003
        %2095 = vmatprep.subr.bf16.mxu0 0
        %2096 = vmatpush1.bf16.msra.mxu0 %v2002
        %2097 = vmatprep.subr.bf16.mxu0 0
        %2098 = vmatpush1.bf16.msra.mxu0 %v2001
        %2099 = vmatprep.subr.bf16.mxu0 0
        %2100 = vmatpush1.bf16.msra.mxu0 %v2000
        %2101 = vmatprep.subr.bf16.mxu0 0
        %2102 = vmatpush1.bf16.msra.mxu0 %v1999
        %2103 = vmatprep.subr.bf16.mxu0 0
        %2104 = vmatpush2.bf16.msra.mxu0 %v2014
        %2105 = vmatprep.subr.bf16.mxu0 0
        %2106 = vmatpush2.bf16.msra.mxu0 %v2013
        %2107 = vmatprep.subr.bf16.mxu0 0
        %2108 = vmatpush2.bf16.msra.mxu0 %v2012
        %2109 = vmatprep.subr.bf16.mxu0 0
        %2110 = vmatpush2.bf16.msra.mxu0 %v2011
        %2111 = vmatprep.subr.bf16.mxu0 0
        %2112 = vmatpush2.bf16.msra.mxu0 %v2010
        %2113 = vmatprep.subr.bf16.mxu0 0
        %2114 = vmatpush2.bf16.msra.mxu0 %v2009
        %2115 = vmatprep.subr.bf16.mxu0 0
        %2116 = vmatpush2.bf16.msra.mxu0 %v2008
        %2117 = vmatprep.subr.bf16.mxu0 0
        %2118 = vmatpush2.bf16.msra.mxu0 %v2007
        %2119 = vmatprep.mubr.bf16.mxu0 %v1785
        %2120 = vmatmul.mubr.bf16.gmra.mxu0 %v1784
        %v2121 = vpop.f32.mrf.mxu0
        %v2122 = vadd.f32 %v2082, %v2121
        %v2123 = vpop.f32.mrf.mxu0
        %v2124 = vpop.f32.mrf.mxu0
        %v2125 = vpop.f32.mrf.mxu0
        %2126 = vdwg.mxu0
        %v2127 = vld [vmem:[%s626] sm:$0x1]
        %v2129 = vlaneseq
        %v2130 = vshrl.u32 %v2129, 7
        %v2131 = vsub.s32 0, %v2130
        %v2132 = vrot.slane %v728, %v2131
        %v2134 = vmul.f32 %v2122, %v2132
        %2135 = vadd.xlane.f32.xlu0 %v2134
        %v2136 = vpop.xlane.xlu0 %2135
        %s2137 = smul.u32 %s42, 2
        %s2138 = sld [smem:[#allocation20 + %s2137]]
        %v2139 = vstv %s2138
        %v2140 = vadd.f32 %v2136, %v2139
        %v2141 = vxor.u32 %v2140, 2147483648
        %v2142 = vmul.f32 %v2141, 1.442695
        %v2143 = vpow.pop %v2142
        %v2144 = vadd.f32 %v2143, 1.0
        %v2145 = vrcp.pop %v2144
        %v2146 = vmul.f32 1.0, %v2145
        %v2147 = vmul.f32 %v2146, %v2122
        %v2148 = vsub.f32 1.0, %v2146
        %v2149 = vlaneseq
        %v2150 = vshrl.u32 %v2149, 7
        %v2151 = vsub.s32 0, %v2150
        %v2152 = vrot.slane %v2127, %v2151
        %v2153 = vmul.f32 %v2148, %v2152
        %v2154 = vadd.f32 %v2147, %v2153
        %v2155 = vld [vmem:[%s635] sm:$0x1]
        %v2156 = vlaneseq
        %v2157 = vshrl.u32 %v2156, 7
        %v2158 = vsub.s32 0, %v2157
        %v2159 = vrot.slane %v2155, %v2158
        %v2160 = vadd.f32 %v2154, %v2159
        %2161 = vst [vmem:[%s722] sm:$0xff] %v2160
        %v2162 = vld [vmem:[%s563 + $0x10] sm:$0xff]
        %v2163 = vld [vmem:[%s563 + $0x18] sm:$0xff]
        %s2164 = scalar_lea.vmem %s572, 1024 [#allocation6]
        %v2165 = vld [vmem:[%s2164] sm:$0xff]
        %v2166 = vld [vmem:[%s2164 + $0x8] sm:$0xff]
        %v2167 = vld [vmem:[%s2164 + $0x10] sm:$0xff]
        %v2168 = vld [vmem:[%s2164 + $0x18] sm:$0xff]
        %v2169 = vld [vmem:[%s2164 + $0x20] sm:$0xff]
        %v2170 = vld [vmem:[%s2164 + $0x28] sm:$0xff]
        %v2171 = vld [vmem:[%s2164 + $0x30] sm:$0xff]
        %v2172 = vld [vmem:[%s2164 + $0x38] sm:$0xff]
        %v2173 = vld [vmem:[%s2164 + $0x40] sm:$0xff]
        %v2174 = vld [vmem:[%s2164 + $0x48] sm:$0xff]
        %v2175 = vld [vmem:[%s2164 + $0x50] sm:$0xff]
        %v2176 = vld [vmem:[%s2164 + $0x58] sm:$0xff]
        %v2177 = vld [vmem:[%s2164 + $0x60] sm:$0xff]
        %v2178 = vld [vmem:[%s2164 + $0x68] sm:$0xff]
        %v2179 = vld [vmem:[%s2164 + $0x70] sm:$0xff]
        %v2180 = vld [vmem:[%s2164 + $0x78] sm:$0xff]
        %v2181 = vld [vmem:[%s2164 + $0x80] sm:$0xff]
        %v2182 = vld [vmem:[%s2164 + $0x88] sm:$0xff]
        %v2183 = vld [vmem:[%s2164 + $0x90] sm:$0xff]
        %v2184 = vld [vmem:[%s2164 + $0x98] sm:$0xff]
        %v2185 = vld [vmem:[%s2164 + $0xa0] sm:$0xff]
        %v2186 = vld [vmem:[%s2164 + $0xa8] sm:$0xff]
        %v2187 = vld [vmem:[%s2164 + $0xb0] sm:$0xff]
        %v2188 = vld [vmem:[%s2164 + $0xb8] sm:$0xff]
        %v2189 = vld [vmem:[%s2164 + $0xc0] sm:$0xff]
        %v2190 = vld [vmem:[%s2164 + $0xc8] sm:$0xff]
        %v2191 = vld [vmem:[%s2164 + $0xd0] sm:$0xff]
        %v2192 = vld [vmem:[%s2164 + $0xd8] sm:$0xff]
        %v2193 = vld [vmem:[%s2164 + $0xe0] sm:$0xff]
        %v2194 = vld [vmem:[%s2164 + $0xe8] sm:$0xff]
        %v2195 = vld [vmem:[%s2164 + $0xf0] sm:$0xff]
        %v2196 = vld [vmem:[%s2164 + $0xf8] sm:$0xff]
        %v2197 = vld [vmem:[%s2164 + $0x100] sm:$0xff]
        %v2198 = vld [vmem:[%s2164 + $0x108] sm:$0xff]
        %v2199 = vld [vmem:[%s2164 + $0x110] sm:$0xff]
        %v2200 = vld [vmem:[%s2164 + $0x118] sm:$0xff]
        %v2201 = vld [vmem:[%s2164 + $0x120] sm:$0xff]
        %v2202 = vld [vmem:[%s2164 + $0x128] sm:$0xff]
        %v2203 = vld [vmem:[%s2164 + $0x130] sm:$0xff]
        %v2204 = vld [vmem:[%s2164 + $0x138] sm:$0xff]
        %v2205 = vld [vmem:[%s2164 + $0x140] sm:$0xff]
        %v2206 = vld [vmem:[%s2164 + $0x148] sm:$0xff]
        %v2207 = vld [vmem:[%s2164 + $0x150] sm:$0xff]
        %v2208 = vld [vmem:[%s2164 + $0x158] sm:$0xff]
        %v2209 = vld [vmem:[%s2164 + $0x160] sm:$0xff]
        %v2210 = vld [vmem:[%s2164 + $0x168] sm:$0xff]
        %v2211 = vld [vmem:[%s2164 + $0x170] sm:$0xff]
        %v2212 = vld [vmem:[%s2164 + $0x178] sm:$0xff]
        %v2213 = vld [vmem:[%s2164 + $0x180] sm:$0xff]
        %v2214 = vld [vmem:[%s2164 + $0x188] sm:$0xff]
        %v2215 = vld [vmem:[%s2164 + $0x190] sm:$0xff]
        %v2216 = vld [vmem:[%s2164 + $0x198] sm:$0xff]
        %v2217 = vld [vmem:[%s2164 + $0x1a0] sm:$0xff]
        %v2218 = vld [vmem:[%s2164 + $0x1a8] sm:$0xff]
        %v2219 = vld [vmem:[%s2164 + $0x1b0] sm:$0xff]
        %v2220 = vld [vmem:[%s2164 + $0x1b8] sm:$0xff]
        %v2221 = vld [vmem:[%s2164 + $0x1c0] sm:$0xff]
        %v2222 = vld [vmem:[%s2164 + $0x1c8] sm:$0xff]
        %v2223 = vld [vmem:[%s2164 + $0x1d0] sm:$0xff]
        %v2224 = vld [vmem:[%s2164 + $0x1d8] sm:$0xff]
        %v2225 = vld [vmem:[%s2164 + $0x1e0] sm:$0xff]
        %v2226 = vld [vmem:[%s2164 + $0x1e8] sm:$0xff]
        %v2227 = vld [vmem:[%s2164 + $0x1f0] sm:$0xff]
        %v2228 = vld [vmem:[%s2164 + $0x1f8] sm:$0xff]
        %v2229 = vld [vmem:[%s2164 + $0x200] sm:$0xff]
        %v2230 = vld [vmem:[%s2164 + $0x208] sm:$0xff]
        %v2231 = vld [vmem:[%s2164 + $0x210] sm:$0xff]
        %v2232 = vld [vmem:[%s2164 + $0x218] sm:$0xff]
        %v2233 = vld [vmem:[%s2164 + $0x220] sm:$0xff]
        %v2234 = vld [vmem:[%s2164 + $0x228] sm:$0xff]
        %v2235 = vld [vmem:[%s2164 + $0x230] sm:$0xff]
        %v2236 = vld [vmem:[%s2164 + $0x238] sm:$0xff]
        %v2237 = vld [vmem:[%s2164 + $0x240] sm:$0xff]
        %v2238 = vld [vmem:[%s2164 + $0x248] sm:$0xff]
        %v2239 = vld [vmem:[%s2164 + $0x250] sm:$0xff]
        %v2240 = vld [vmem:[%s2164 + $0x258] sm:$0xff]
        %v2241 = vld [vmem:[%s2164 + $0x260] sm:$0xff]
        %v2242 = vld [vmem:[%s2164 + $0x268] sm:$0xff]
        %v2243 = vld [vmem:[%s2164 + $0x270] sm:$0xff]
        %v2244 = vld [vmem:[%s2164 + $0x278] sm:$0xff]
        %v2245 = vld [vmem:[%s2164 + $0x280] sm:$0xff]
        %v2246 = vld [vmem:[%s2164 + $0x288] sm:$0xff]
        %v2247 = vld [vmem:[%s2164 + $0x290] sm:$0xff]
        %v2248 = vld [vmem:[%s2164 + $0x298] sm:$0xff]
        %v2249 = vld [vmem:[%s2164 + $0x2a0] sm:$0xff]
        %v2250 = vld [vmem:[%s2164 + $0x2a8] sm:$0xff]
        %v2251 = vld [vmem:[%s2164 + $0x2b0] sm:$0xff]
        %v2252 = vld [vmem:[%s2164 + $0x2b8] sm:$0xff]
        %v2253 = vld [vmem:[%s2164 + $0x2c0] sm:$0xff]
        %v2254 = vld [vmem:[%s2164 + $0x2c8] sm:$0xff]
        %v2255 = vld [vmem:[%s2164 + $0x2d0] sm:$0xff]
        %v2256 = vld [vmem:[%s2164 + $0x2d8] sm:$0xff]
        %v2257 = vld [vmem:[%s2164 + $0x2e0] sm:$0xff]
        %v2258 = vld [vmem:[%s2164 + $0x2e8] sm:$0xff]
        %v2259 = vld [vmem:[%s2164 + $0x2f0] sm:$0xff]
        %v2260 = vld [vmem:[%s2164 + $0x2f8] sm:$0xff]
        %v2261 = vld [vmem:[%s2164 + $0x300] sm:$0xff]
        %v2262 = vld [vmem:[%s2164 + $0x308] sm:$0xff]
        %v2263 = vld [vmem:[%s2164 + $0x310] sm:$0xff]
        %v2264 = vld [vmem:[%s2164 + $0x318] sm:$0xff]
        %v2265 = vld [vmem:[%s2164 + $0x320] sm:$0xff]
        %v2266 = vld [vmem:[%s2164 + $0x328] sm:$0xff]
        %v2267 = vld [vmem:[%s2164 + $0x330] sm:$0xff]
        %v2268 = vld [vmem:[%s2164 + $0x338] sm:$0xff]
        %v2269 = vld [vmem:[%s2164 + $0x340] sm:$0xff]
        %v2270 = vld [vmem:[%s2164 + $0x348] sm:$0xff]
        %v2271 = vld [vmem:[%s2164 + $0x350] sm:$0xff]
        %v2272 = vld [vmem:[%s2164 + $0x358] sm:$0xff]
        %v2273 = vld [vmem:[%s2164 + $0x360] sm:$0xff]
        %v2274 = vld [vmem:[%s2164 + $0x368] sm:$0xff]
        %v2275 = vld [vmem:[%s2164 + $0x370] sm:$0xff]
        %v2276 = vld [vmem:[%s2164 + $0x378] sm:$0xff]
        %v2277 = vld [vmem:[%s2164 + $0x380] sm:$0xff]
        %v2278 = vld [vmem:[%s2164 + $0x388] sm:$0xff]
        %v2279 = vld [vmem:[%s2164 + $0x390] sm:$0xff]
        %v2280 = vld [vmem:[%s2164 + $0x398] sm:$0xff]
        %v2281 = vld [vmem:[%s2164 + $0x3a0] sm:$0xff]
        %v2282 = vld [vmem:[%s2164 + $0x3a8] sm:$0xff]
        %v2283 = vld [vmem:[%s2164 + $0x3b0] sm:$0xff]
        %v2284 = vld [vmem:[%s2164 + $0x3b8] sm:$0xff]
        %v2285 = vld [vmem:[%s2164 + $0x3c0] sm:$0xff]
        %v2286 = vld [vmem:[%s2164 + $0x3c8] sm:$0xff]
        %v2287 = vld [vmem:[%s2164 + $0x3d0] sm:$0xff]
        %v2288 = vld [vmem:[%s2164 + $0x3d8] sm:$0xff]
        %v2289 = vld [vmem:[%s2164 + $0x3e0] sm:$0xff]
        %v2290 = vld [vmem:[%s2164 + $0x3e8] sm:$0xff]
        %v2291 = vld [vmem:[%s2164 + $0x3f0] sm:$0xff]
        %v2292 = vld [vmem:[%s2164 + $0x3f8] sm:$0xff]
        %s2293 = scalar_lea.vmem %s590, 1 [#allocation9]
        %v2294 = vld [vmem:[%s2293] ss:$2 sm:$0xf]
        %v2296 = vlaneseq
        %v2297 = vshrl.u32 %v2296, 7
        %v2298 = vsub.s32 0, %v2297
        %v2299 = vrot.slane %v2294, %v2298
        %v2300 = vlaneseq
        %v2301 = vshrl.u32 %v2300, 7
        %v2302 = vsub.s32 1, %v2301
        %v2303 = vrot.slane %v2294, %v2302
        %v2304 = vlaneseq
        %v2305 = vshrl.u32 %v2304, 7
        %v2306 = vsub.s32 2, %v2305
        %v2307 = vrot.slane %v2294, %v2306
        %v2308 = vlaneseq
        %v2309 = vshrl.u32 %v2308, 7
        %v2310 = vsub.s32 3, %v2309
        %v2311 = vrot.slane %v2294, %v2310
        %v2318 = vunpack.c.l.b16 %v2162
        %v2319 = vunpack.c.h.b16 %v2162
        %v2320 = vunpack.c.l.b16 %v2163
        %v2321 = vunpack.c.h.b16 %v2163
        %v2322 = vpack.c.b16 %v2318, %v2318
        %v2323 = vpack.c.b16 %v2319, %v2319
        %v2324 = vpack.c.b16 %v2320, %v2320
        %v2325 = vpack.c.b16 %v2321, %v2321
        %v2458 = vunpack.c.l.b16 %v2165
        %v2459 = vunpack.c.h.b16 %v2165
        %v2460 = vunpack.c.l.b16 %v2166
        %v2461 = vunpack.c.h.b16 %v2166
        %v2462 = vunpack.c.l.b16 %v2167
        %v2463 = vunpack.c.h.b16 %v2167
        %v2464 = vunpack.c.l.b16 %v2168
        %v2465 = vunpack.c.h.b16 %v2168
        %v2466 = vunpack.c.l.b16 %v2169
        %v2467 = vunpack.c.h.b16 %v2169
        %v2468 = vunpack.c.l.b16 %v2170
        %v2469 = vunpack.c.h.b16 %v2170
        %v2470 = vunpack.c.l.b16 %v2171
        %v2471 = vunpack.c.h.b16 %v2171
        %v2472 = vunpack.c.l.b16 %v2172
        %v2473 = vunpack.c.h.b16 %v2172
        %v2474 = vunpack.c.l.b16 %v2173
        %v2475 = vunpack.c.h.b16 %v2173
        %v2476 = vunpack.c.l.b16 %v2174
        %v2477 = vunpack.c.h.b16 %v2174
        %v2478 = vunpack.c.l.b16 %v2175
        %v2479 = vunpack.c.h.b16 %v2175
        %v2480 = vunpack.c.l.b16 %v2176
        %v2481 = vunpack.c.h.b16 %v2176
        %v2482 = vunpack.c.l.b16 %v2177
        %v2483 = vunpack.c.h.b16 %v2177
        %v2484 = vunpack.c.l.b16 %v2178
        %v2485 = vunpack.c.h.b16 %v2178
        %v2486 = vunpack.c.l.b16 %v2179
        %v2487 = vunpack.c.h.b16 %v2179
        %v2488 = vunpack.c.l.b16 %v2180
        %v2489 = vunpack.c.h.b16 %v2180
        %v2490 = vunpack.c.l.b16 %v2181
        %v2491 = vunpack.c.h.b16 %v2181
        %v2492 = vunpack.c.l.b16 %v2182
        %v2493 = vunpack.c.h.b16 %v2182
        %v2494 = vunpack.c.l.b16 %v2183
        %v2495 = vunpack.c.h.b16 %v2183
        %v2496 = vunpack.c.l.b16 %v2184
        %v2497 = vunpack.c.h.b16 %v2184
        %v2498 = vunpack.c.l.b16 %v2185
        %v2499 = vunpack.c.h.b16 %v2185
        %v2500 = vunpack.c.l.b16 %v2186
        %v2501 = vunpack.c.h.b16 %v2186
        %v2502 = vunpack.c.l.b16 %v2187
        %v2503 = vunpack.c.h.b16 %v2187
        %v2504 = vunpack.c.l.b16 %v2188
        %v2505 = vunpack.c.h.b16 %v2188
        %v2506 = vunpack.c.l.b16 %v2189
        %v2507 = vunpack.c.h.b16 %v2189
        %v2508 = vunpack.c.l.b16 %v2190
        %v2509 = vunpack.c.h.b16 %v2190
        %v2510 = vunpack.c.l.b16 %v2191
        %v2511 = vunpack.c.h.b16 %v2191
        %v2512 = vunpack.c.l.b16 %v2192
        %v2513 = vunpack.c.h.b16 %v2192
        %v2514 = vunpack.c.l.b16 %v2193
        %v2515 = vunpack.c.h.b16 %v2193
        %v2516 = vunpack.c.l.b16 %v2194
        %v2517 = vunpack.c.h.b16 %v2194
        %v2518 = vunpack.c.l.b16 %v2195
        %v2519 = vunpack.c.h.b16 %v2195
        %v2520 = vunpack.c.l.b16 %v2196
        %v2521 = vunpack.c.h.b16 %v2196
        %v2522 = vunpack.c.l.b16 %v2197
        %v2523 = vunpack.c.h.b16 %v2197
        %v2524 = vunpack.c.l.b16 %v2198
        %v2525 = vunpack.c.h.b16 %v2198
        %v2526 = vunpack.c.l.b16 %v2199
        %v2527 = vunpack.c.h.b16 %v2199
        %v2528 = vunpack.c.l.b16 %v2200
        %v2529 = vunpack.c.h.b16 %v2200
        %v2530 = vunpack.c.l.b16 %v2201
        %v2531 = vunpack.c.h.b16 %v2201
        %v2532 = vunpack.c.l.b16 %v2202
        %v2533 = vunpack.c.h.b16 %v2202
        %v2534 = vunpack.c.l.b16 %v2203
        %v2535 = vunpack.c.h.b16 %v2203
        %v2536 = vunpack.c.l.b16 %v2204
        %v2537 = vunpack.c.h.b16 %v2204
        %v2538 = vunpack.c.l.b16 %v2205
        %v2539 = vunpack.c.h.b16 %v2205
        %v2540 = vunpack.c.l.b16 %v2206
        %v2541 = vunpack.c.h.b16 %v2206
        %v2542 = vunpack.c.l.b16 %v2207
        %v2543 = vunpack.c.h.b16 %v2207
        %v2544 = vunpack.c.l.b16 %v2208
        %v2545 = vunpack.c.h.b16 %v2208
        %v2546 = vunpack.c.l.b16 %v2209
        %v2547 = vunpack.c.h.b16 %v2209
        %v2548 = vunpack.c.l.b16 %v2210
        %v2549 = vunpack.c.h.b16 %v2210
        %v2550 = vunpack.c.l.b16 %v2211
        %v2551 = vunpack.c.h.b16 %v2211
        %v2552 = vunpack.c.l.b16 %v2212
        %v2553 = vunpack.c.h.b16 %v2212
        %v2554 = vunpack.c.l.b16 %v2213
        %v2555 = vunpack.c.h.b16 %v2213
        %v2556 = vunpack.c.l.b16 %v2214
        %v2557 = vunpack.c.h.b16 %v2214
        %v2558 = vunpack.c.l.b16 %v2215
        %v2559 = vunpack.c.h.b16 %v2215
        %v2560 = vunpack.c.l.b16 %v2216
        %v2561 = vunpack.c.h.b16 %v2216
        %v2562 = vunpack.c.l.b16 %v2217
        %v2563 = vunpack.c.h.b16 %v2217
        %v2564 = vunpack.c.l.b16 %v2218
        %v2565 = vunpack.c.h.b16 %v2218
        %v2566 = vunpack.c.l.b16 %v2219
        %v2567 = vunpack.c.h.b16 %v2219
        %v2568 = vunpack.c.l.b16 %v2220
        %v2569 = vunpack.c.h.b16 %v2220
        %v2570 = vunpack.c.l.b16 %v2221
        %v2571 = vunpack.c.h.b16 %v2221
        %v2572 = vunpack.c.l.b16 %v2222
        %v2573 = vunpack.c.h.b16 %v2222
        %v2574 = vunpack.c.l.b16 %v2223
        %v2575 = vunpack.c.h.b16 %v2223
        %v2576 = vunpack.c.l.b16 %v2224
        %v2577 = vunpack.c.h.b16 %v2224
        %v2578 = vunpack.c.l.b16 %v2225
        %v2579 = vunpack.c.h.b16 %v2225
        %v2580 = vunpack.c.l.b16 %v2226
        %v2581 = vunpack.c.h.b16 %v2226
        %v2582 = vunpack.c.l.b16 %v2227
        %v2583 = vunpack.c.h.b16 %v2227
        %v2584 = vunpack.c.l.b16 %v2228
        %v2585 = vunpack.c.h.b16 %v2228
        %v2586 = vunpack.c.l.b16 %v2229
        %v2587 = vunpack.c.h.b16 %v2229
        %v2588 = vunpack.c.l.b16 %v2230
        %v2589 = vunpack.c.h.b16 %v2230
        %v2590 = vunpack.c.l.b16 %v2231
        %v2591 = vunpack.c.h.b16 %v2231
        %v2592 = vunpack.c.l.b16 %v2232
        %v2593 = vunpack.c.h.b16 %v2232
        %v2594 = vunpack.c.l.b16 %v2233
        %v2595 = vunpack.c.h.b16 %v2233
        %v2596 = vunpack.c.l.b16 %v2234
        %v2597 = vunpack.c.h.b16 %v2234
        %v2598 = vunpack.c.l.b16 %v2235
        %v2599 = vunpack.c.h.b16 %v2235
        %v2600 = vunpack.c.l.b16 %v2236
        %v2601 = vunpack.c.h.b16 %v2236
        %v2602 = vunpack.c.l.b16 %v2237
        %v2603 = vunpack.c.h.b16 %v2237
        %v2604 = vunpack.c.l.b16 %v2238
        %v2605 = vunpack.c.h.b16 %v2238
        %v2606 = vunpack.c.l.b16 %v2239
        %v2607 = vunpack.c.h.b16 %v2239
        %v2608 = vunpack.c.l.b16 %v2240
        %v2609 = vunpack.c.h.b16 %v2240
        %v2610 = vunpack.c.l.b16 %v2241
        %v2611 = vunpack.c.h.b16 %v2241
        %v2612 = vunpack.c.l.b16 %v2242
        %v2613 = vunpack.c.h.b16 %v2242
        %v2614 = vunpack.c.l.b16 %v2243
        %v2615 = vunpack.c.h.b16 %v2243
        %v2616 = vunpack.c.l.b16 %v2244
        %v2617 = vunpack.c.h.b16 %v2244
        %v2618 = vunpack.c.l.b16 %v2245
        %v2619 = vunpack.c.h.b16 %v2245
        %v2620 = vunpack.c.l.b16 %v2246
        %v2621 = vunpack.c.h.b16 %v2246
        %v2622 = vunpack.c.l.b16 %v2247
        %v2623 = vunpack.c.h.b16 %v2247
        %v2624 = vunpack.c.l.b16 %v2248
        %v2625 = vunpack.c.h.b16 %v2248
        %v2626 = vunpack.c.l.b16 %v2249
        %v2627 = vunpack.c.h.b16 %v2249
        %v2628 = vunpack.c.l.b16 %v2250
        %v2629 = vunpack.c.h.b16 %v2250
        %v2630 = vunpack.c.l.b16 %v2251
        %v2631 = vunpack.c.h.b16 %v2251
        %v2632 = vunpack.c.l.b16 %v2252
        %v2633 = vunpack.c.h.b16 %v2252
        %v2634 = vunpack.c.l.b16 %v2253
        %v2635 = vunpack.c.h.b16 %v2253
        %v2636 = vunpack.c.l.b16 %v2254
        %v2637 = vunpack.c.h.b16 %v2254
        %v2638 = vunpack.c.l.b16 %v2255
        %v2639 = vunpack.c.h.b16 %v2255
        %v2640 = vunpack.c.l.b16 %v2256
        %v2641 = vunpack.c.h.b16 %v2256
        %v2642 = vunpack.c.l.b16 %v2257
        %v2643 = vunpack.c.h.b16 %v2257
        %v2644 = vunpack.c.l.b16 %v2258
        %v2645 = vunpack.c.h.b16 %v2258
        %v2646 = vunpack.c.l.b16 %v2259
        %v2647 = vunpack.c.h.b16 %v2259
        %v2648 = vunpack.c.l.b16 %v2260
        %v2649 = vunpack.c.h.b16 %v2260
        %v2650 = vunpack.c.l.b16 %v2261
        %v2651 = vunpack.c.h.b16 %v2261
        %v2652 = vunpack.c.l.b16 %v2262
        %v2653 = vunpack.c.h.b16 %v2262
        %v2654 = vunpack.c.l.b16 %v2263
        %v2655 = vunpack.c.h.b16 %v2263
        %v2656 = vunpack.c.l.b16 %v2264
        %v2657 = vunpack.c.h.b16 %v2264
        %v2658 = vunpack.c.l.b16 %v2265
        %v2659 = vunpack.c.h.b16 %v2265
        %v2660 = vunpack.c.l.b16 %v2266
        %v2661 = vunpack.c.h.b16 %v2266
        %v2662 = vunpack.c.l.b16 %v2267
        %v2663 = vunpack.c.h.b16 %v2267
        %v2664 = vunpack.c.l.b16 %v2268
        %v2665 = vunpack.c.h.b16 %v2268
        %v2666 = vunpack.c.l.b16 %v2269
        %v2667 = vunpack.c.h.b16 %v2269
        %v2668 = vunpack.c.l.b16 %v2270
        %v2669 = vunpack.c.h.b16 %v2270
        %v2670 = vunpack.c.l.b16 %v2271
        %v2671 = vunpack.c.h.b16 %v2271
        %v2672 = vunpack.c.l.b16 %v2272
        %v2673 = vunpack.c.h.b16 %v2272
        %v2674 = vunpack.c.l.b16 %v2273
        %v2675 = vunpack.c.h.b16 %v2273
        %v2676 = vunpack.c.l.b16 %v2274
        %v2677 = vunpack.c.h.b16 %v2274
        %v2678 = vunpack.c.l.b16 %v2275
        %v2679 = vunpack.c.h.b16 %v2275
        %v2680 = vunpack.c.l.b16 %v2276
        %v2681 = vunpack.c.h.b16 %v2276
        %v2682 = vunpack.c.l.b16 %v2277
        %v2683 = vunpack.c.h.b16 %v2277
        %v2684 = vunpack.c.l.b16 %v2278
        %v2685 = vunpack.c.h.b16 %v2278
        %v2686 = vunpack.c.l.b16 %v2279
        %v2687 = vunpack.c.h.b16 %v2279
        %v2688 = vunpack.c.l.b16 %v2280
        %v2689 = vunpack.c.h.b16 %v2280
        %v2690 = vunpack.c.l.b16 %v2281
        %v2691 = vunpack.c.h.b16 %v2281
        %v2692 = vunpack.c.l.b16 %v2282
        %v2693 = vunpack.c.h.b16 %v2282
        %v2694 = vunpack.c.l.b16 %v2283
        %v2695 = vunpack.c.h.b16 %v2283
        %v2696 = vunpack.c.l.b16 %v2284
        %v2697 = vunpack.c.h.b16 %v2284
        %v2698 = vunpack.c.l.b16 %v2285
        %v2699 = vunpack.c.h.b16 %v2285
        %v2700 = vunpack.c.l.b16 %v2286
        %v2701 = vunpack.c.h.b16 %v2286
        %v2702 = vunpack.c.l.b16 %v2287
        %v2703 = vunpack.c.h.b16 %v2287
        %v2704 = vunpack.c.l.b16 %v2288
        %v2705 = vunpack.c.h.b16 %v2288
        %v2706 = vunpack.c.l.b16 %v2289
        %v2707 = vunpack.c.h.b16 %v2289
        %v2708 = vunpack.c.l.b16 %v2290
        %v2709 = vunpack.c.h.b16 %v2290
        %v2710 = vunpack.c.l.b16 %v2291
        %v2711 = vunpack.c.h.b16 %v2291
        %v2712 = vunpack.c.l.b16 %v2292
        %v2713 = vunpack.c.h.b16 %v2292
        %v2714 = vpack.c.b16 %v2462, %v2458
        %v2715 = vpack.c.b16 %v2463, %v2459
        %v2716 = vpack.c.b16 %v2464, %v2460
        %v2717 = vpack.c.b16 %v2465, %v2461
        %v2718 = vpack.c.b16 %v2470, %v2466
        %v2719 = vpack.c.b16 %v2471, %v2467
        %v2720 = vpack.c.b16 %v2472, %v2468
        %v2721 = vpack.c.b16 %v2473, %v2469
        %v2722 = vpack.c.b16 %v2478, %v2474
        %v2723 = vpack.c.b16 %v2479, %v2475
        %v2724 = vpack.c.b16 %v2480, %v2476
        %v2725 = vpack.c.b16 %v2481, %v2477
        %v2726 = vpack.c.b16 %v2486, %v2482
        %v2727 = vpack.c.b16 %v2487, %v2483
        %v2728 = vpack.c.b16 %v2488, %v2484
        %v2729 = vpack.c.b16 %v2489, %v2485
        %v2730 = vpack.c.b16 %v2494, %v2490
        %v2731 = vpack.c.b16 %v2495, %v2491
        %v2732 = vpack.c.b16 %v2496, %v2492
        %v2733 = vpack.c.b16 %v2497, %v2493
        %v2734 = vpack.c.b16 %v2502, %v2498
        %v2735 = vpack.c.b16 %v2503, %v2499
        %v2736 = vpack.c.b16 %v2504, %v2500
        %v2737 = vpack.c.b16 %v2505, %v2501
        %v2738 = vpack.c.b16 %v2510, %v2506
        %v2739 = vpack.c.b16 %v2511, %v2507
        %v2740 = vpack.c.b16 %v2512, %v2508
        %v2741 = vpack.c.b16 %v2513, %v2509
        %v2742 = vpack.c.b16 %v2518, %v2514
        %v2743 = vpack.c.b16 %v2519, %v2515
        %v2744 = vpack.c.b16 %v2520, %v2516
        %v2745 = vpack.c.b16 %v2521, %v2517
        %v2746 = vpack.c.b16 %v2526, %v2522
        %v2747 = vpack.c.b16 %v2527, %v2523
        %v2748 = vpack.c.b16 %v2528, %v2524
        %v2749 = vpack.c.b16 %v2529, %v2525
        %v2750 = vpack.c.b16 %v2534, %v2530
        %v2751 = vpack.c.b16 %v2535, %v2531
        %v2752 = vpack.c.b16 %v2536, %v2532
        %v2753 = vpack.c.b16 %v2537, %v2533
        %v2754 = vpack.c.b16 %v2542, %v2538
        %v2755 = vpack.c.b16 %v2543, %v2539
        %v2756 = vpack.c.b16 %v2544, %v2540
        %v2757 = vpack.c.b16 %v2545, %v2541
        %v2758 = vpack.c.b16 %v2550, %v2546
        %v2759 = vpack.c.b16 %v2551, %v2547
        %v2760 = vpack.c.b16 %v2552, %v2548
        %v2761 = vpack.c.b16 %v2553, %v2549
        %v2762 = vpack.c.b16 %v2558, %v2554
        %v2763 = vpack.c.b16 %v2559, %v2555
        %v2764 = vpack.c.b16 %v2560, %v2556
        %v2765 = vpack.c.b16 %v2561, %v2557
        %v2766 = vpack.c.b16 %v2566, %v2562
        %v2767 = vpack.c.b16 %v2567, %v2563
        %v2768 = vpack.c.b16 %v2568, %v2564
        %v2769 = vpack.c.b16 %v2569, %v2565
        %v2770 = vpack.c.b16 %v2574, %v2570
        %v2771 = vpack.c.b16 %v2575, %v2571
        %v2772 = vpack.c.b16 %v2576, %v2572
        %v2773 = vpack.c.b16 %v2577, %v2573
        %v2774 = vpack.c.b16 %v2582, %v2578
        %v2775 = vpack.c.b16 %v2583, %v2579
        %v2776 = vpack.c.b16 %v2584, %v2580
        %v2777 = vpack.c.b16 %v2585, %v2581
        %v2778 = vpack.c.b16 %v2590, %v2586
        %v2779 = vpack.c.b16 %v2591, %v2587
        %v2780 = vpack.c.b16 %v2592, %v2588
        %v2781 = vpack.c.b16 %v2593, %v2589
        %v2782 = vpack.c.b16 %v2598, %v2594
        %v2783 = vpack.c.b16 %v2599, %v2595
        %v2784 = vpack.c.b16 %v2600, %v2596
        %v2785 = vpack.c.b16 %v2601, %v2597
        %v2786 = vpack.c.b16 %v2606, %v2602
        %v2787 = vpack.c.b16 %v2607, %v2603
        %v2788 = vpack.c.b16 %v2608, %v2604
        %v2789 = vpack.c.b16 %v2609, %v2605
        %v2790 = vpack.c.b16 %v2614, %v2610
        %v2791 = vpack.c.b16 %v2615, %v2611
        %v2792 = vpack.c.b16 %v2616, %v2612
        %v2793 = vpack.c.b16 %v2617, %v2613
        %v2794 = vpack.c.b16 %v2622, %v2618
        %v2795 = vpack.c.b16 %v2623, %v2619
        %v2796 = vpack.c.b16 %v2624, %v2620
        %v2797 = vpack.c.b16 %v2625, %v2621
        %v2798 = vpack.c.b16 %v2630, %v2626
        %v2799 = vpack.c.b16 %v2631, %v2627
        %v2800 = vpack.c.b16 %v2632, %v2628
        %v2801 = vpack.c.b16 %v2633, %v2629
        %v2802 = vpack.c.b16 %v2638, %v2634
        %v2803 = vpack.c.b16 %v2639, %v2635
        %v2804 = vpack.c.b16 %v2640, %v2636
        %v2805 = vpack.c.b16 %v2641, %v2637
        %v2806 = vpack.c.b16 %v2646, %v2642
        %v2807 = vpack.c.b16 %v2647, %v2643
        %v2808 = vpack.c.b16 %v2648, %v2644
        %v2809 = vpack.c.b16 %v2649, %v2645
        %v2810 = vpack.c.b16 %v2654, %v2650
        %v2811 = vpack.c.b16 %v2655, %v2651
        %v2812 = vpack.c.b16 %v2656, %v2652
        %v2813 = vpack.c.b16 %v2657, %v2653
        %v2814 = vpack.c.b16 %v2662, %v2658
        %v2815 = vpack.c.b16 %v2663, %v2659
        %v2816 = vpack.c.b16 %v2664, %v2660
        %v2817 = vpack.c.b16 %v2665, %v2661
        %v2818 = vpack.c.b16 %v2670, %v2666
        %v2819 = vpack.c.b16 %v2671, %v2667
        %v2820 = vpack.c.b16 %v2672, %v2668
        %v2821 = vpack.c.b16 %v2673, %v2669
        %v2822 = vpack.c.b16 %v2678, %v2674
        %v2823 = vpack.c.b16 %v2679, %v2675
        %v2824 = vpack.c.b16 %v2680, %v2676
        %v2825 = vpack.c.b16 %v2681, %v2677
        %v2826 = vpack.c.b16 %v2686, %v2682
        %v2827 = vpack.c.b16 %v2687, %v2683
        %v2828 = vpack.c.b16 %v2688, %v2684
        %v2829 = vpack.c.b16 %v2689, %v2685
        %v2830 = vpack.c.b16 %v2694, %v2690
        %v2831 = vpack.c.b16 %v2695, %v2691
        %v2832 = vpack.c.b16 %v2696, %v2692
        %v2833 = vpack.c.b16 %v2697, %v2693
        %v2834 = vpack.c.b16 %v2702, %v2698
        %v2835 = vpack.c.b16 %v2703, %v2699
        %v2836 = vpack.c.b16 %v2704, %v2700
        %v2837 = vpack.c.b16 %v2705, %v2701
        %v2838 = vpack.c.b16 %v2710, %v2706
        %v2839 = vpack.c.b16 %v2711, %v2707
        %v2840 = vpack.c.b16 %v2712, %v2708
        %v2841 = vpack.c.b16 %v2713, %v2709
        %2970 = vmatprep.subr.bf16.mxu0 %v2743
        %2971 = vmatpush1.bf16.msra.mxu0 %v2742
        %2972 = vmatprep.subr.bf16.mxu0 %v2739
        %2973 = vmatpush1.bf16.msra.mxu0 %v2738
        %2974 = vmatprep.subr.bf16.mxu0 %v2735
        %2975 = vmatpush1.bf16.msra.mxu0 %v2734
        %2976 = vmatprep.subr.bf16.mxu0 %v2731
        %2977 = vmatpush1.bf16.msra.mxu0 %v2730
        %2978 = vmatprep.subr.bf16.mxu0 %v2727
        %2979 = vmatpush1.bf16.msra.mxu0 %v2726
        %2980 = vmatprep.subr.bf16.mxu0 %v2723
        %2981 = vmatpush1.bf16.msra.mxu0 %v2722
        %2982 = vmatprep.subr.bf16.mxu0 %v2719
        %2983 = vmatpush1.bf16.msra.mxu0 %v2718
        %2984 = vmatprep.subr.bf16.mxu0 %v2715
        %2985 = vmatpush1.bf16.msra.mxu0 %v2714
        %2986 = vmatprep.subr.bf16.mxu0 %v2775
        %2987 = vmatpush2.bf16.msra.mxu0 %v2774
        %2988 = vmatprep.subr.bf16.mxu0 %v2771
        %2989 = vmatpush2.bf16.msra.mxu0 %v2770
        %2990 = vmatprep.subr.bf16.mxu0 %v2767
        %2991 = vmatpush2.bf16.msra.mxu0 %v2766
        %2992 = vmatprep.subr.bf16.mxu0 %v2763
        %2993 = vmatpush2.bf16.msra.mxu0 %v2762
        %2994 = vmatprep.subr.bf16.mxu0 %v2759
        %2995 = vmatpush2.bf16.msra.mxu0 %v2758
        %2996 = vmatprep.subr.bf16.mxu0 %v2755
        %2997 = vmatpush2.bf16.msra.mxu0 %v2754
        %2998 = vmatprep.subr.bf16.mxu0 %v2751
        %2999 = vmatpush2.bf16.msra.mxu0 %v2750
        %3000 = vmatprep.subr.bf16.mxu0 %v2747
        %3001 = vmatpush2.bf16.msra.mxu0 %v2746
        %3002 = vmatprep.mubr.bf16.mxu0 %v2323
        %3003 = vmatmul.mubr.bf16.gmra.mxu0 %v2322
        %v3004 = vpop.f32.mrf.mxu0
        %v3005 = vadd.f32 %v2299, %v3004
        %v3006 = vpop.f32.mrf.mxu0
        %v3007 = vadd.f32 %v2303, %v3006
        %v3008 = vpop.f32.mrf.mxu0
        %v3009 = vpop.f32.mrf.mxu0
        %3010 = vdwg.mxu0
        %3011 = vmatprep.subr.bf16.mxu0 %v2807
        %3012 = vmatpush1.bf16.msra.mxu0 %v2806
        %3013 = vmatprep.subr.bf16.mxu0 %v2803
        %3014 = vmatpush1.bf16.msra.mxu0 %v2802
        %3015 = vmatprep.subr.bf16.mxu0 %v2799
        %3016 = vmatpush1.bf16.msra.mxu0 %v2798
        %3017 = vmatprep.subr.bf16.mxu0 %v2795
        %3018 = vmatpush1.bf16.msra.mxu0 %v2794
        %3019 = vmatprep.subr.bf16.mxu0 %v2791
        %3020 = vmatpush1.bf16.msra.mxu0 %v2790
        %3021 = vmatprep.subr.bf16.mxu0 %v2787
        %3022 = vmatpush1.bf16.msra.mxu0 %v2786
        %3023 = vmatprep.subr.bf16.mxu0 %v2783
        %3024 = vmatpush1.bf16.msra.mxu0 %v2782
        %3025 = vmatprep.subr.bf16.mxu0 %v2779
        %3026 = vmatpush1.bf16.msra.mxu0 %v2778
        %3027 = vmatprep.subr.bf16.mxu0 %v2839
        %3028 = vmatpush2.bf16.msra.mxu0 %v2838
        %3029 = vmatprep.subr.bf16.mxu0 %v2835
        %3030 = vmatpush2.bf16.msra.mxu0 %v2834
        %3031 = vmatprep.subr.bf16.mxu0 %v2831
        %3032 = vmatpush2.bf16.msra.mxu0 %v2830
        %3033 = vmatprep.subr.bf16.mxu0 %v2827
        %3034 = vmatpush2.bf16.msra.mxu0 %v2826
        %3035 = vmatprep.subr.bf16.mxu0 %v2823
        %3036 = vmatpush2.bf16.msra.mxu0 %v2822
        %3037 = vmatprep.subr.bf16.mxu0 %v2819
        %3038 = vmatpush2.bf16.msra.mxu0 %v2818
        %3039 = vmatprep.subr.bf16.mxu0 %v2815
        %3040 = vmatpush2.bf16.msra.mxu0 %v2814
        %3041 = vmatprep.subr.bf16.mxu0 %v2811
        %3042 = vmatpush2.bf16.msra.mxu0 %v2810
        %3043 = vmatprep.mubr.bf16.mxu0 %v2325
        %3044 = vmatmul.mubr.bf16.gmra.mxu0 %v2324
        %v3045 = vpop.f32.mrf.mxu0
        %v3046 = vadd.f32 %v3005, %v3045
        %v3047 = vpop.f32.mrf.mxu0
        %v3048 = vadd.f32 %v3007, %v3047
        %v3049 = vpop.f32.mrf.mxu0
        %v3050 = vpop.f32.mrf.mxu0
        %3051 = vdwg.mxu0
        %3052 = vmatprep.subr.bf16.mxu0 %v2745
        %3053 = vmatpush1.bf16.msra.mxu0 %v2744
        %3054 = vmatprep.subr.bf16.mxu0 %v2741
        %3055 = vmatpush1.bf16.msra.mxu0 %v2740
        %3056 = vmatprep.subr.bf16.mxu0 %v2737
        %3057 = vmatpush1.bf16.msra.mxu0 %v2736
        %3058 = vmatprep.subr.bf16.mxu0 %v2733
        %3059 = vmatpush1.bf16.msra.mxu0 %v2732
        %3060 = vmatprep.subr.bf16.mxu0 %v2729
        %3061 = vmatpush1.bf16.msra.mxu0 %v2728
        %3062 = vmatprep.subr.bf16.mxu0 %v2725
        %3063 = vmatpush1.bf16.msra.mxu0 %v2724
        %3064 = vmatprep.subr.bf16.mxu0 %v2721
        %3065 = vmatpush1.bf16.msra.mxu0 %v2720
        %3066 = vmatprep.subr.bf16.mxu0 %v2717
        %3067 = vmatpush1.bf16.msra.mxu0 %v2716
        %3068 = vmatprep.subr.bf16.mxu0 %v2777
        %3069 = vmatpush2.bf16.msra.mxu0 %v2776
        %3070 = vmatprep.subr.bf16.mxu0 %v2773
        %3071 = vmatpush2.bf16.msra.mxu0 %v2772
        %3072 = vmatprep.subr.bf16.mxu0 %v2769
        %3073 = vmatpush2.bf16.msra.mxu0 %v2768
        %3074 = vmatprep.subr.bf16.mxu0 %v2765
        %3075 = vmatpush2.bf16.msra.mxu0 %v2764
        %3076 = vmatprep.subr.bf16.mxu0 %v2761
        %3077 = vmatpush2.bf16.msra.mxu0 %v2760
        %3078 = vmatprep.subr.bf16.mxu0 %v2757
        %3079 = vmatpush2.bf16.msra.mxu0 %v2756
        %3080 = vmatprep.subr.bf16.mxu0 %v2753
        %3081 = vmatpush2.bf16.msra.mxu0 %v2752
        %3082 = vmatprep.subr.bf16.mxu0 %v2749
        %3083 = vmatpush2.bf16.msra.mxu0 %v2748
        %3084 = vmatprep.mubr.bf16.mxu0 %v2323
        %3085 = vmatmul.mubr.bf16.gmra.mxu0 %v2322
        %v3086 = vpop.f32.mrf.mxu0
        %v3087 = vadd.f32 %v2307, %v3086
        %v3088 = vpop.f32.mrf.mxu0
        %v3089 = vadd.f32 %v2311, %v3088
        %v3090 = vpop.f32.mrf.mxu0
        %v3091 = vpop.f32.mrf.mxu0
        %3092 = vdwg.mxu0
        %3093 = vmatprep.subr.bf16.mxu0 %v2809
        %3094 = vmatpush1.bf16.msra.mxu0 %v2808
        %3095 = vmatprep.subr.bf16.mxu0 %v2805
        %3096 = vmatpush1.bf16.msra.mxu0 %v2804
        %3097 = vmatprep.subr.bf16.mxu0 %v2801
        %3098 = vmatpush1.bf16.msra.mxu0 %v2800
        %3099 = vmatprep.subr.bf16.mxu0 %v2797
        %3100 = vmatpush1.bf16.msra.mxu0 %v2796
        %3101 = vmatprep.subr.bf16.mxu0 %v2793
        %3102 = vmatpush1.bf16.msra.mxu0 %v2792
        %3103 = vmatprep.subr.bf16.mxu0 %v2789
        %3104 = vmatpush1.bf16.msra.mxu0 %v2788
        %3105 = vmatprep.subr.bf16.mxu0 %v2785
        %3106 = vmatpush1.bf16.msra.mxu0 %v2784
        %3107 = vmatprep.subr.bf16.mxu0 %v2781
        %3108 = vmatpush1.bf16.msra.mxu0 %v2780
        %3109 = vmatprep.subr.bf16.mxu0 %v2841
        %3110 = vmatpush2.bf16.msra.mxu0 %v2840
        %3111 = vmatprep.subr.bf16.mxu0 %v2837
        %3112 = vmatpush2.bf16.msra.mxu0 %v2836
        %3113 = vmatprep.subr.bf16.mxu0 %v2833
        %3114 = vmatpush2.bf16.msra.mxu0 %v2832
        %3115 = vmatprep.subr.bf16.mxu0 %v2829
        %3116 = vmatpush2.bf16.msra.mxu0 %v2828
        %3117 = vmatprep.subr.bf16.mxu0 %v2825
        %3118 = vmatpush2.bf16.msra.mxu0 %v2824
        %3119 = vmatprep.subr.bf16.mxu0 %v2821
        %3120 = vmatpush2.bf16.msra.mxu0 %v2820
        %3121 = vmatprep.subr.bf16.mxu0 %v2817
        %3122 = vmatpush2.bf16.msra.mxu0 %v2816
        %3123 = vmatprep.subr.bf16.mxu0 %v2813
        %3124 = vmatpush2.bf16.msra.mxu0 %v2812
        %3125 = vmatprep.mubr.bf16.mxu0 %v2325
        %3126 = vmatmul.mubr.bf16.gmra.mxu0 %v2324
        %v3127 = vpop.f32.mrf.mxu0
        %v3128 = vadd.f32 %v3087, %v3127
        %v3129 = vpop.f32.mrf.mxu0
        %v3130 = vadd.f32 %v3089, %v3129
        %v3131 = vpop.f32.mrf.mxu0
        %v3132 = vpop.f32.mrf.mxu0
        %3133 = vdwg.mxu0
        %v3134 = vmax.f32 %v3046, 0.0
        %v3135 = vmax.f32 %v3048, 0.0
        %v3136 = vmax.f32 %v3128, 0.0
        %v3137 = vmax.f32 %v3130, 0.0
        %v3138 = vadd.f32 %v3134, %v3135
        %v3139 = vadd.f32 %v3138, %v3136
        %v3140 = vadd.f32 %v3139, %v3137
        %3141 = vadd.xlane.f32.xlu0 %v3140
        %v3142 = vpop.xlane.xlu0 %3141
        %v3143 = vmul.f32 %v3142, %v1708
        %v3144 = vsub.f32 %v3134, %v3143
        %v3145 = vsub.f32 %v3135, %v3143
        %v3146 = vsub.f32 %v3136, %v3143
        %v3147 = vsub.f32 %v3137, %v3143
        %v3148 = vmul.f32 %v3144, %v3144
        %v3149 = vmul.f32 %v3145, %v3145
        %v3150 = vmul.f32 %v3146, %v3146
        %v3151 = vmul.f32 %v3147, %v3147
        %v3152 = vadd.f32 %v3148, %v3149
        %v3153 = vadd.f32 %v3152, %v3150
        %v3154 = vadd.f32 %v3153, %v3151
        %3155 = vadd.xlane.f32.xlu0 %v3154
        %v3156 = vpop.xlane.xlu0 %3155
        %v3157 = vmul.f32 %v3156, %v1708
        %v3158 = vadd.f32 %v3157, 1e-05
        %v3159 = vrsqrt.pop %v3158
        %v3160 = vmul.f32 %v3144, %v3159
        %v3161 = vmul.f32 %v3145, %v3159
        %v3162 = vmul.f32 %v3146, %v3159
        %v3163 = vmul.f32 %v3147, %v3159
        %s3164 = scalar_lea.vmem %s599, 1 [#allocation11]
        %v3165 = vld [vmem:[%s3164] ss:$2 sm:$0xf]
        %v3167 = vlaneseq
        %v3168 = vshrl.u32 %v3167, 7
        %v3169 = vsub.s32 0, %v3168
        %v3170 = vrot.slane %v3165, %v3169
        %v3171 = vlaneseq
        %v3172 = vshrl.u32 %v3171, 7
        %v3173 = vsub.s32 1, %v3172
        %v3174 = vrot.slane %v3165, %v3173
        %v3175 = vlaneseq
        %v3176 = vshrl.u32 %v3175, 7
        %v3177 = vsub.s32 2, %v3176
        %v3178 = vrot.slane %v3165, %v3177
        %v3179 = vlaneseq
        %v3180 = vshrl.u32 %v3179, 7
        %v3181 = vsub.s32 3, %v3180
        %v3182 = vrot.slane %v3165, %v3181
        %v3187 = vmul.f32 %v3160, %v3170
        %v3188 = vmul.f32 %v3161, %v3174
        %v3189 = vmul.f32 %v3162, %v3178
        %v3190 = vmul.f32 %v3163, %v3182
        %s3191 = scalar_lea.vmem %s608, 1 [#allocation12]
        %v3192 = vld [vmem:[%s3191] ss:$2 sm:$0xf]
        %v3194 = vlaneseq
        %v3195 = vshrl.u32 %v3194, 7
        %v3196 = vsub.s32 0, %v3195
        %v3197 = vrot.slane %v3192, %v3196
        %v3198 = vlaneseq
        %v3199 = vshrl.u32 %v3198, 7
        %v3200 = vsub.s32 1, %v3199
        %v3201 = vrot.slane %v3192, %v3200
        %v3202 = vlaneseq
        %v3203 = vshrl.u32 %v3202, 7
        %v3204 = vsub.s32 2, %v3203
        %v3205 = vrot.slane %v3192, %v3204
        %v3206 = vlaneseq
        %v3207 = vshrl.u32 %v3206, 7
        %v3208 = vsub.s32 3, %v3207
        %v3209 = vrot.slane %v3192, %v3208
        %v3214 = vadd.f32 %v3187, %v3197
        %v3215 = vadd.f32 %v3188, %v3201
        %v3216 = vadd.f32 %v3189, %v3205
        %v3217 = vadd.f32 %v3190, %v3209
        %v3218 = vpack.c.bf16 %v3214, %v3214
        %v3219 = vpack.c.bf16 %v3215, %v3215
        %v3220 = vpack.c.bf16 %v3216, %v3216
        %v3221 = vpack.c.bf16 %v3217, %v3217
        %s3222 = scalar_lea.vmem %s581, 256 [#allocation8]
        %v3223 = vld [vmem:[%s3222] sm:$0xf]
        %v3224 = vld [vmem:[%s3222 + $0x4] sm:$0xf]
        %v3225 = vld [vmem:[%s3222 + $0x8] sm:$0xf]
        %v3226 = vld [vmem:[%s3222 + $0xc] sm:$0xf]
        %v3227 = vld [vmem:[%s3222 + $0x10] sm:$0xf]
        %v3228 = vld [vmem:[%s3222 + $0x14] sm:$0xf]
        %v3229 = vld [vmem:[%s3222 + $0x18] sm:$0xf]
        %v3230 = vld [vmem:[%s3222 + $0x1c] sm:$0xf]
        %v3231 = vld [vmem:[%s3222 + $0x20] sm:$0xf]
        %v3232 = vld [vmem:[%s3222 + $0x24] sm:$0xf]
        %v3233 = vld [vmem:[%s3222 + $0x28] sm:$0xf]
        %v3234 = vld [vmem:[%s3222 + $0x2c] sm:$0xf]
        %v3235 = vld [vmem:[%s3222 + $0x30] sm:$0xf]
        %v3236 = vld [vmem:[%s3222 + $0x34] sm:$0xf]
        %v3237 = vld [vmem:[%s3222 + $0x38] sm:$0xf]
        %v3238 = vld [vmem:[%s3222 + $0x3c] sm:$0xf]
        %v3239 = vld [vmem:[%s3222 + $0x40] sm:$0xf]
        %v3240 = vld [vmem:[%s3222 + $0x44] sm:$0xf]
        %v3241 = vld [vmem:[%s3222 + $0x48] sm:$0xf]
        %v3242 = vld [vmem:[%s3222 + $0x4c] sm:$0xf]
        %v3243 = vld [vmem:[%s3222 + $0x50] sm:$0xf]
        %v3244 = vld [vmem:[%s3222 + $0x54] sm:$0xf]
        %v3245 = vld [vmem:[%s3222 + $0x58] sm:$0xf]
        %v3246 = vld [vmem:[%s3222 + $0x5c] sm:$0xf]
        %v3247 = vld [vmem:[%s3222 + $0x60] sm:$0xf]
        %v3248 = vld [vmem:[%s3222 + $0x64] sm:$0xf]
        %v3249 = vld [vmem:[%s3222 + $0x68] sm:$0xf]
        %v3250 = vld [vmem:[%s3222 + $0x6c] sm:$0xf]
        %v3251 = vld [vmem:[%s3222 + $0x70] sm:$0xf]
        %v3252 = vld [vmem:[%s3222 + $0x74] sm:$0xf]
        %v3253 = vld [vmem:[%s3222 + $0x78] sm:$0xf]
        %v3254 = vld [vmem:[%s3222 + $0x7c] sm:$0xf]
        %v3255 = vld [vmem:[%s3222 + $0x80] sm:$0xf]
        %v3256 = vld [vmem:[%s3222 + $0x84] sm:$0xf]
        %v3257 = vld [vmem:[%s3222 + $0x88] sm:$0xf]
        %v3258 = vld [vmem:[%s3222 + $0x8c] sm:$0xf]
        %v3259 = vld [vmem:[%s3222 + $0x90] sm:$0xf]
        %v3260 = vld [vmem:[%s3222 + $0x94] sm:$0xf]
        %v3261 = vld [vmem:[%s3222 + $0x98] sm:$0xf]
        %v3262 = vld [vmem:[%s3222 + $0x9c] sm:$0xf]
        %v3263 = vld [vmem:[%s3222 + $0xa0] sm:$0xf]
        %v3264 = vld [vmem:[%s3222 + $0xa4] sm:$0xf]
        %v3265 = vld [vmem:[%s3222 + $0xa8] sm:$0xf]
        %v3266 = vld [vmem:[%s3222 + $0xac] sm:$0xf]
        %v3267 = vld [vmem:[%s3222 + $0xb0] sm:$0xf]
        %v3268 = vld [vmem:[%s3222 + $0xb4] sm:$0xf]
        %v3269 = vld [vmem:[%s3222 + $0xb8] sm:$0xf]
        %v3270 = vld [vmem:[%s3222 + $0xbc] sm:$0xf]
        %v3271 = vld [vmem:[%s3222 + $0xc0] sm:$0xf]
        %v3272 = vld [vmem:[%s3222 + $0xc4] sm:$0xf]
        %v3273 = vld [vmem:[%s3222 + $0xc8] sm:$0xf]
        %v3274 = vld [vmem:[%s3222 + $0xcc] sm:$0xf]
        %v3275 = vld [vmem:[%s3222 + $0xd0] sm:$0xf]
        %v3276 = vld [vmem:[%s3222 + $0xd4] sm:$0xf]
        %v3277 = vld [vmem:[%s3222 + $0xd8] sm:$0xf]
        %v3278 = vld [vmem:[%s3222 + $0xdc] sm:$0xf]
        %v3279 = vld [vmem:[%s3222 + $0xe0] sm:$0xf]
        %v3280 = vld [vmem:[%s3222 + $0xe4] sm:$0xf]
        %v3281 = vld [vmem:[%s3222 + $0xe8] sm:$0xf]
        %v3282 = vld [vmem:[%s3222 + $0xec] sm:$0xf]
        %v3283 = vld [vmem:[%s3222 + $0xf0] sm:$0xf]
        %v3284 = vld [vmem:[%s3222 + $0xf4] sm:$0xf]
        %v3285 = vld [vmem:[%s3222 + $0xf8] sm:$0xf]
        %v3286 = vld [vmem:[%s3222 + $0xfc] sm:$0xf]
        %v3287 = vld [vmem:[%s617 + $0x1] sm:$0x1]
        %v3288 = vlaneseq
        %v3289 = vshrl.u32 %v3288, 7
        %v3290 = vsub.s32 0, %v3289
        %v3291 = vrot.slane %v3287, %v3290
        %v3356 = vunpack.c.l.b16 %v3223
        %v3357 = vunpack.c.l.b16 %v3224
        %v3358 = vunpack.c.l.b16 %v3225
        %v3359 = vunpack.c.l.b16 %v3226
        %v3360 = vunpack.c.l.b16 %v3227
        %v3361 = vunpack.c.l.b16 %v3228
        %v3362 = vunpack.c.l.b16 %v3229
        %v3363 = vunpack.c.l.b16 %v3230
        %v3364 = vunpack.c.l.b16 %v3231
        %v3365 = vunpack.c.l.b16 %v3232
        %v3366 = vunpack.c.l.b16 %v3233
        %v3367 = vunpack.c.l.b16 %v3234
        %v3368 = vunpack.c.l.b16 %v3235
        %v3369 = vunpack.c.l.b16 %v3236
        %v3370 = vunpack.c.l.b16 %v3237
        %v3371 = vunpack.c.l.b16 %v3238
        %v3372 = vunpack.c.l.b16 %v3239
        %v3373 = vunpack.c.l.b16 %v3240
        %v3374 = vunpack.c.l.b16 %v3241
        %v3375 = vunpack.c.l.b16 %v3242
        %v3376 = vunpack.c.l.b16 %v3243
        %v3377 = vunpack.c.l.b16 %v3244
        %v3378 = vunpack.c.l.b16 %v3245
        %v3379 = vunpack.c.l.b16 %v3246
        %v3380 = vunpack.c.l.b16 %v3247
        %v3381 = vunpack.c.l.b16 %v3248
        %v3382 = vunpack.c.l.b16 %v3249
        %v3383 = vunpack.c.l.b16 %v3250
        %v3384 = vunpack.c.l.b16 %v3251
        %v3385 = vunpack.c.l.b16 %v3252
        %v3386 = vunpack.c.l.b16 %v3253
        %v3387 = vunpack.c.l.b16 %v3254
        %v3388 = vunpack.c.l.b16 %v3255
        %v3389 = vunpack.c.l.b16 %v3256
        %v3390 = vunpack.c.l.b16 %v3257
        %v3391 = vunpack.c.l.b16 %v3258
        %v3392 = vunpack.c.l.b16 %v3259
        %v3393 = vunpack.c.l.b16 %v3260
        %v3394 = vunpack.c.l.b16 %v3261
        %v3395 = vunpack.c.l.b16 %v3262
        %v3396 = vunpack.c.l.b16 %v3263
        %v3397 = vunpack.c.l.b16 %v3264
        %v3398 = vunpack.c.l.b16 %v3265
        %v3399 = vunpack.c.l.b16 %v3266
        %v3400 = vunpack.c.l.b16 %v3267
        %v3401 = vunpack.c.l.b16 %v3268
        %v3402 = vunpack.c.l.b16 %v3269
        %v3403 = vunpack.c.l.b16 %v3270
        %v3404 = vunpack.c.l.b16 %v3271
        %v3405 = vunpack.c.l.b16 %v3272
        %v3406 = vunpack.c.l.b16 %v3273
        %v3407 = vunpack.c.l.b16 %v3274
        %v3408 = vunpack.c.l.b16 %v3275
        %v3409 = vunpack.c.l.b16 %v3276
        %v3410 = vunpack.c.l.b16 %v3277
        %v3411 = vunpack.c.l.b16 %v3278
        %v3412 = vunpack.c.l.b16 %v3279
        %v3413 = vunpack.c.l.b16 %v3280
        %v3414 = vunpack.c.l.b16 %v3281
        %v3415 = vunpack.c.l.b16 %v3282
        %v3416 = vunpack.c.l.b16 %v3283
        %v3417 = vunpack.c.l.b16 %v3284
        %v3418 = vunpack.c.l.b16 %v3285
        %v3419 = vunpack.c.l.b16 %v3286
        %v3420 = vpack.c.b16 %v3357, %v3356
        %v3421 = vpack.c.b16 %v3359, %v3358
        %v3422 = vpack.c.b16 %v3361, %v3360
        %v3423 = vpack.c.b16 %v3363, %v3362
        %v3424 = vpack.c.b16 %v3365, %v3364
        %v3425 = vpack.c.b16 %v3367, %v3366
        %v3426 = vpack.c.b16 %v3369, %v3368
        %v3427 = vpack.c.b16 %v3371, %v3370
        %v3428 = vpack.c.b16 %v3373, %v3372
        %v3429 = vpack.c.b16 %v3375, %v3374
        %v3430 = vpack.c.b16 %v3377, %v3376
        %v3431 = vpack.c.b16 %v3379, %v3378
        %v3432 = vpack.c.b16 %v3381, %v3380
        %v3433 = vpack.c.b16 %v3383, %v3382
        %v3434 = vpack.c.b16 %v3385, %v3384
        %v3435 = vpack.c.b16 %v3387, %v3386
        %v3436 = vpack.c.b16 %v3389, %v3388
        %v3437 = vpack.c.b16 %v3391, %v3390
        %v3438 = vpack.c.b16 %v3393, %v3392
        %v3439 = vpack.c.b16 %v3395, %v3394
        %v3440 = vpack.c.b16 %v3397, %v3396
        %v3441 = vpack.c.b16 %v3399, %v3398
        %v3442 = vpack.c.b16 %v3401, %v3400
        %v3443 = vpack.c.b16 %v3403, %v3402
        %v3444 = vpack.c.b16 %v3405, %v3404
        %v3445 = vpack.c.b16 %v3407, %v3406
        %v3446 = vpack.c.b16 %v3409, %v3408
        %v3447 = vpack.c.b16 %v3411, %v3410
        %v3448 = vpack.c.b16 %v3413, %v3412
        %v3449 = vpack.c.b16 %v3415, %v3414
        %v3450 = vpack.c.b16 %v3417, %v3416
        %v3451 = vpack.c.b16 %v3419, %v3418
        %3484 = vmatprep.subr.bf16.mxu0 0
        %3485 = vmatpush1.bf16.msra.mxu0 %v3427
        %3486 = vmatprep.subr.bf16.mxu0 0
        %3487 = vmatpush1.bf16.msra.mxu0 %v3426
        %3488 = vmatprep.subr.bf16.mxu0 0
        %3489 = vmatpush1.bf16.msra.mxu0 %v3425
        %3490 = vmatprep.subr.bf16.mxu0 0
        %3491 = vmatpush1.bf16.msra.mxu0 %v3424
        %3492 = vmatprep.subr.bf16.mxu0 0
        %3493 = vmatpush1.bf16.msra.mxu0 %v3423
        %3494 = vmatprep.subr.bf16.mxu0 0
        %3495 = vmatpush1.bf16.msra.mxu0 %v3422
        %3496 = vmatprep.subr.bf16.mxu0 0
        %3497 = vmatpush1.bf16.msra.mxu0 %v3421
        %3498 = vmatprep.subr.bf16.mxu0 0
        %3499 = vmatpush1.bf16.msra.mxu0 %v3420
        %3500 = vmatprep.subr.bf16.mxu0 0
        %3501 = vmatpush2.bf16.msra.mxu0 %v3435
        %3502 = vmatprep.subr.bf16.mxu0 0
        %3503 = vmatpush2.bf16.msra.mxu0 %v3434
        %3504 = vmatprep.subr.bf16.mxu0 0
        %3505 = vmatpush2.bf16.msra.mxu0 %v3433
        %3506 = vmatprep.subr.bf16.mxu0 0
        %3507 = vmatpush2.bf16.msra.mxu0 %v3432
        %3508 = vmatprep.subr.bf16.mxu0 0
        %3509 = vmatpush2.bf16.msra.mxu0 %v3431
        %3510 = vmatprep.subr.bf16.mxu0 0
        %3511 = vmatpush2.bf16.msra.mxu0 %v3430
        %3512 = vmatprep.subr.bf16.mxu0 0
        %3513 = vmatpush2.bf16.msra.mxu0 %v3429
        %3514 = vmatprep.subr.bf16.mxu0 0
        %3515 = vmatpush2.bf16.msra.mxu0 %v3428
        %3516 = vmatprep.mubr.bf16.mxu0 %v3219
        %3517 = vmatmul.mubr.bf16.gmra.mxu0 %v3218
        %v3518 = vpop.f32.mrf.mxu0
        %v3519 = vadd.f32 %v3291, %v3518
        %v3520 = vpop.f32.mrf.mxu0
        %v3521 = vpop.f32.mrf.mxu0
        %v3522 = vpop.f32.mrf.mxu0
        %3523 = vdwg.mxu0
        %3524 = vmatprep.subr.bf16.mxu0 0
        %3525 = vmatpush1.bf16.msra.mxu0 %v3443
        %3526 = vmatprep.subr.bf16.mxu0 0
        %3527 = vmatpush1.bf16.msra.mxu0 %v3442
        %3528 = vmatprep.subr.bf16.mxu0 0
        %3529 = vmatpush1.bf16.msra.mxu0 %v3441
        %3530 = vmatprep.subr.bf16.mxu0 0
        %3531 = vmatpush1.bf16.msra.mxu0 %v3440
        %3532 = vmatprep.subr.bf16.mxu0 0
        %3533 = vmatpush1.bf16.msra.mxu0 %v3439
        %3534 = vmatprep.subr.bf16.mxu0 0
        %3535 = vmatpush1.bf16.msra.mxu0 %v3438
        %3536 = vmatprep.subr.bf16.mxu0 0
        %3537 = vmatpush1.bf16.msra.mxu0 %v3437
        %3538 = vmatprep.subr.bf16.mxu0 0
        %3539 = vmatpush1.bf16.msra.mxu0 %v3436
        %3540 = vmatprep.subr.bf16.mxu0 0
        %3541 = vmatpush2.bf16.msra.mxu0 %v3451
        %3542 = vmatprep.subr.bf16.mxu0 0
        %3543 = vmatpush2.bf16.msra.mxu0 %v3450
        %3544 = vmatprep.subr.bf16.mxu0 0
        %3545 = vmatpush2.bf16.msra.mxu0 %v3449
        %3546 = vmatprep.subr.bf16.mxu0 0
        %3547 = vmatpush2.bf16.msra.mxu0 %v3448
        %3548 = vmatprep.subr.bf16.mxu0 0
        %3549 = vmatpush2.bf16.msra.mxu0 %v3447
        %3550 = vmatprep.subr.bf16.mxu0 0
        %3551 = vmatpush2.bf16.msra.mxu0 %v3446
        %3552 = vmatprep.subr.bf16.mxu0 0
        %3553 = vmatpush2.bf16.msra.mxu0 %v3445
        %3554 = vmatprep.subr.bf16.mxu0 0
        %3555 = vmatpush2.bf16.msra.mxu0 %v3444
        %3556 = vmatprep.mubr.bf16.mxu0 %v3221
        %3557 = vmatmul.mubr.bf16.gmra.mxu0 %v3220
        %v3558 = vpop.f32.mrf.mxu0
        %v3559 = vadd.f32 %v3519, %v3558
        %v3560 = vpop.f32.mrf.mxu0
        %v3561 = vpop.f32.mrf.mxu0
        %v3562 = vpop.f32.mrf.mxu0
        %3563 = vdwg.mxu0
        %v3564 = vld [vmem:[%s626 + $0x1] sm:$0x1]
        %v3565 = vmul.f32 %v3559, %v2132
        %3566 = vadd.xlane.f32.xlu0 %v3565
        %v3567 = vpop.xlane.xlu0 %3566
        %s3568 = sadd.s32 %s2137, 1
        %s3569 = sld [smem:[#allocation20 + %s3568]]
        %v3570 = vstv %s3569
        %v3571 = vadd.f32 %v3567, %v3570
        %v3572 = vxor.u32 %v3571, 2147483648
        %v3573 = vmul.f32 %v3572, 1.442695
        %v3574 = vpow.pop %v3573
        %v3575 = vadd.f32 %v3574, 1.0
        %v3576 = vrcp.pop %v3575
        %v3577 = vmul.f32 1.0, %v3576
        %v3578 = vmul.f32 %v3577, %v3559
        %v3579 = vsub.f32 1.0, %v3577
        %v3580 = vlaneseq
        %v3581 = vshrl.u32 %v3580, 7
        %v3582 = vsub.s32 0, %v3581
        %v3583 = vrot.slane %v3564, %v3582
        %v3584 = vmul.f32 %v3579, %v3583
        %v3585 = vadd.f32 %v3578, %v3584
        %v3586 = vld [vmem:[%s635 + $0x1] sm:$0x1]
        %v3587 = vlaneseq
        %v3588 = vshrl.u32 %v3587, 7
        %v3589 = vsub.s32 0, %v3588
        %v3590 = vrot.slane %v3586, %v3589
        %v3591 = vadd.f32 %v3585, %v3590
        %3592 = vst [vmem:[%s722 + $0x8] sm:$0xff] %v3591
        %s3593 = sand.u32 %s326, 1
        %s3594 = scalar_lea.sflag [#allocation4], %s3593
        %s3595 = sand.u32 %s326, 1
        %s3596 = smul.addr %s3595, 16
        %s3597 = scalar_lea.vmem [#allocation21], %s3596
        // Predicated region
        $region109: #{tpu_custom_call.1} parent=63 // pred_check
          %p3598 = pneg %p336
        $region110: #{tpu_custom_call.1} parent=63 // pred_check_branch
          %3600 = sbr.rel (%p3598) target = $region112
        $region111: #{tpu_custom_call.1} parent=63 // pred_region
          %s3601 = smul.u32 2, %s42
          %s3603 = ssub.s32 256, 256
          %3604 = vsyncadd %s3594, %s3603
          %s3605 = smul.addr %s3601, 128
          %s3606 = scalar_lea.hbm %s11, %s3605
          %s3608 = sshll.u32 %s3597, 4
          %s3609 = int_to_ptr.vmem [resolvable:$true] %s3608
          %3611 = dma.vmem_to_hbm [thread:$0]  %s3609, 256, %s3606, %s3594
        $region112: #{tpu_custom_call.1} parent=63 // pred_fallthru
          _
      $region64: #{tpu_custom_call.1} parent=5 // pred_fallthru
        _
      %p3612 = scmp.le.s32.totalorder 2, %s37
      // Predicated region
      $region113: #{tpu_custom_call.1} parent=5 // pred_check
        %p3613 = pneg %p3612
      $region114: #{tpu_custom_call.1} parent=5 // pred_check_branch
        %3615 = sbr.rel (%p3613) target = $region116
      $region115: #{tpu_custom_call.1} parent=5 // pred_region
        %s3616 = ssub.s32 %s37, 2
        // Predicated region
        $region117: #{tpu_custom_call.1} parent=115 // pred_check
          %p3617 = pneg %p342
        $region118: #{tpu_custom_call.1} parent=115 // pred_check_branch
          %3619 = sbr.rel (%p3617) target = $region120
        $region119: #{tpu_custom_call.1} parent=115 // pred_region
          %s3620 = sand.u32 %s327, 1
          %s3621 = scalar_lea.sflag [#allocation4], %s3620
          %s3622 = sand.u32 %s327, 1
          %s3623 = smul.addr %s3622, 16
          %s3624 = scalar_lea.vmem [#allocation21], %s3623
          %3625 = dma.done %s3621, 256
        $region120: #{tpu_custom_call.1} parent=115 // pred_fallthru
          _
      $region116: #{tpu_custom_call.1} parent=5 // pred_fallthru
        _
    $region6: #{tpu_custom_call.1} parent=1 // loop_footer
      %s41 = sadd.s32 1, %s37
    $region7: #{tpu_custom_call.1} parent=1 // loop_footer_branch
      %36 = sbr.rel target = $region3
    $region8: #{tpu_custom_call.1} parent=1 // loop_exit
      _
    %3626 = vsyncpa [#allocation3], 1
    %s3627 = scalar_lea.sflag [#allocation3], 1
    %3628 = vsyncpa %s3627, 1
    %3629 = vsyncpa [#allocation7], 1
    %s3630 = scalar_lea.sflag [#allocation7], 1
    %3631 = vsyncpa %s3630, 1
    %3632 = vsyncpa [#allocation10], 1
    %s3633 = scalar_lea.sflag [#allocation10], 1
    %3634 = vsyncpa %s3633, 1
    %3635 = vsyncpa [#allocation13], 1
    %s3636 = scalar_lea.sflag [#allocation13], 1
    %3637 = vsyncpa %s3636, 1
    %3638 = vsyncpa [#allocation16], 1
    %s3639 = scalar_lea.sflag [#allocation16], 1
    %3640 = vsyncpa %s3639, 1
    %3641 = vsyncpa [#allocation19], 1
    %3642 = vsyncpa [#allocation4], 1
    %s3643 = scalar_lea.sflag [#allocation4], 1
    %3644 = vsyncpa %s3643, 1
    %3645 = vsyncpa [#allocation5], 1
    %s3646 = scalar_lea.sflag [#allocation5], 1
    %3647 = vsyncpa %s3646, 1

</llo_original>
